<compile_context>
chip_gen: v6e
topology: v6e:2x2x1
jax: 0.10.0
libtpu: 0.0.40
codegen_flags: <defaults>
</compile_context>

<pallas_src>
import functools

import jax
import jax.numpy as jnp
import numpy as np
from jax.experimental import pallas as pl
from jax.experimental.pallas import tpu as pltpu


# ----------------------------- kernel helpers ------------------------------ #
def _layer_norm_cols(x, w_col, b_col, eps=1e-6):
    """LayerNorm over the channel (sublane) axis of a (C, T) block."""
    mu = jnp.mean(x, axis=0, keepdims=True)
    var = jnp.mean(jnp.square(x - mu), axis=0, keepdims=True)
    return (x - mu) * jax.lax.rsqrt(var + eps) * w_col + b_col


def _layer_norm_rows(x, w, b, eps=1e-6):
    """LayerNorm over the last axis (used by the pure-JAX reference)."""
    mu = jnp.mean(x, axis=-1, keepdims=True)
    var = jnp.mean(jnp.square(x - mu), axis=-1, keepdims=True)
    return (x - mu) * jax.lax.rsqrt(var + eps) * w + b


def _gelu_exact(x):
    # nn.GELU() default is the exact erf formulation.
    return 0.5 * x * (1.0 + jax.lax.erf(x * (1.0 / np.sqrt(2.0))))


# -------------------------------- kernel ----------------------------------- #
def transformer_resize_kernel(
    x_ref,
    qkvw_ref, qkvb_ref, projw_ref, projb_ref,
    n1w_ref, n1b_ref, n2w_ref, n2b_ref,
    fc1w_ref, fc1b_ref, fc2w_ref, fc2b_ref,
    o_ref,
    q_scratch,
    *, num_heads, head_dim, tq,
):
    f32 = jnp.float32
    bf16 = jnp.bfloat16

    x_cn = x_ref[...].astype(f32)                          # (C, N) channel-major
    c_dim, n_tok = x_cn.shape
    n_chunks = n_tok // tq

    # ---------------- LayerNorm 1 (per-token stats over channels) ----------------
    y = _layer_norm_cols(x_cn, n1w_ref[...], n1b_ref[...]).astype(bf16)   # (C, N) bf16

    # ------------- fused q/k/v projection: one (3C, C) @ (C, N) MXU pass ----------
    # head scale is already folded into the q rows of weight+bias (wrapper).
    qkvT = jnp.dot(qkvw_ref[...], y, preferred_element_type=f32) + qkvb_ref[...]   # (3C, N)

    q_scratch[...] = qkvT[0:c_dim].astype(bf16)            # (C, N)  queries, channel-major
    kT = qkvT[c_dim:2 * c_dim].reshape(num_heads, head_dim, n_tok).astype(bf16)    # (H, hd, N)
    # One O(C*N) bf16 transpose puts V in (H, N, hd) so P @ V needs no N^2 transpose.
    vh = jnp.swapaxes(
        qkvT[2 * c_dim:].reshape(num_heads, head_dim, n_tok).astype(bf16), 1, 2)   # (H, N, hd)

    # -------- flash-lite query-chunk loop: caps (H, TQ, N) score temporaries -------
    # Note: MXU utilization of the score/context matmuls is bounded by head_dim
    # (model config); the N^2 work here is what the chunking keeps in check.
    @pl.loop(0, n_chunks)
    def _chunk(qi):
        start = pl.multiple_of(qi * tq, tq)

        qc = q_scratch[:, pl.ds(start, tq)]                               # (C, TQ) bf16
        qc = jnp.swapaxes(qc.reshape(num_heads, head_dim, tq), 1, 2)      # (H, TQ, hd)

        s = jnp.einsum("hqd,hdn->hqn", qc, kT,
                       preferred_element_type=f32)                        # (H, TQ, N)
        s = s - jnp.max(s, axis=-1, keepdims=True)
        p = jnp.exp(s)
        denom = jnp.sum(p, axis=-1, keepdims=True)                        # (H, TQ, 1)

        # Unnormalized P @ V (p <= 1, bf16-safe); normalization deferred to context.
        ctx = jnp.einsum("hqn,hnd->hqd", p.astype(bf16), vh,
                         preferred_element_type=f32)                      # (H, TQ, hd)
        ctx = ctx * pl.reciprocal(denom, approx=True)
        ctxT = jnp.swapaxes(ctx.astype(bf16), 1, 2).reshape(c_dim, tq)    # (C, TQ)

        attnT = jnp.dot(projw_ref[...], ctxT,
                        preferred_element_type=f32) + projb_ref[...]      # (C, TQ)

        xr = x_ref[:, pl.ds(start, tq)].astype(f32) + attnT               # residual 1

        # ------------- MLP branch (replaces the stream; no residual) -------------
        z = _layer_norm_cols(xr, n2w_ref[...], n2b_ref[...]).astype(bf16)
        h1 = jnp.dot(fc1w_ref[...], z, preferred_element_type=f32) + fc1b_ref[...]
        h1 = _gelu_exact(h1)                                              # exact-erf, f32
        outT = jnp.dot(fc2w_ref[...], h1.astype(bf16),
                       preferred_element_type=f32) + fc2b_ref[...]        # (dim_out_p, TQ)

        o_ref[:, pl.ds(start, tq)] = outT.astype(o_ref.dtype)


# ------------------------------- wrapper ------------------------------------ #
def _pick_tq(n):
    for tq in (256, 128):
        if n > tq and n % tq == 0:
            return tq
    return n   # monolithic fallback (also handles ragged N)


def transformer_resize(x_nchw, params, num_heads):
    B, C, H, W = x_nchw.shape
    assert C % num_heads == 0, "dim_in must be divisible by num_heads"
    N = H * W
    head_dim = C // num_heads
    hidden = params["fc1_w"].shape[1]
    dim_out = params["fc2_w"].shape[1]
    dim_out_p = ((dim_out + 7) // 8) * 8          # sublane-aligned output channels
    tq = _pick_tq(N)
    assert N % tq == 0

    f32, bf16 = jnp.float32, jnp.bfloat16

    # Native layout ingestion: 'b c h w -> b c (h w)' is a pure reshape (h-major),
    # identical token order to einops 'b c h w -> b (h w) c' with channels last.
    x_cn = x_nchw.reshape(B, C, N)

    # Fused qkv weight, pre-transposed to (3C, C); head scale folded into q rows.
    scale = head_dim ** -0.5
    row_scale = jnp.concatenate(
        [jnp.full((C,), scale, f32), jnp.ones((2 * C,), f32)])
    qkv_wT = (params["qkv_w"].T * row_scale[:, None]).astype(bf16)          # (3C, C)
    qkv_b = (params["qkv_b"] * row_scale).reshape(3 * C, 1).astype(f32)     # (3C, 1)

    proj_wT = params["proj_w"].T.astype(bf16)                               # (C, C)
    proj_b = params["proj_b"].reshape(C, 1).astype(f32)

    fc1_wT = params["fc1_w"].T.astype(bf16)                                 # (hidden, C)
    fc1_b = params["fc1_b"].reshape(hidden, 1).astype(f32)

    # Zero-pad fc2 rows to a sublane multiple; wrapper slices the padding back off.
    fc2_wT = jnp.zeros((dim_out_p, hidden), f32).at[:dim_out].set(
        params["fc2_w"].T).astype(bf16)
    fc2_b = jnp.zeros((dim_out_p, 1), f32).at[:dim_out, 0].set(params["fc2_b"])

    weight_args = [
        qkv_wT, qkv_b, proj_wT, proj_b,
        params["n1_w"].reshape(C, 1).astype(f32), params["n1_b"].reshape(C, 1).astype(f32),
        params["n2_w"].reshape(C, 1).astype(f32), params["n2_b"].reshape(C, 1).astype(f32),
        fc1_wT, fc1_b, fc2_wT, fc2_b,
    ]

    def full_spec(a):
        nd = a.ndim
        return pl.BlockSpec(a.shape, lambda b, _nd=nd: (0,) * _nd)

    # Per-generation VMEM budget: ~3/4 of physical (v5e/v6e 128 MiB -> 96 MiB,
    # v7x 64 MiB -> 48 MiB), instead of a hard-coded 32 MiB.
    try:
        vmem_cap = int(getattr(pltpu.get_tpu_info(), "vmem_capacity_bytes",
                               64 * 1024 * 1024))
    except Exception:
        vmem_cap = 64 * 1024 * 1024
    vmem_limit = max(32 * 1024 * 1024, min(vmem_cap * 3 // 4, 112 * 1024 * 1024))

    flops = int(2 * B * N * C * (3 * C)                    # fused qkv
                + 4 * B * num_heads * N * N * head_dim     # scores + context
                + 2 * B * N * C * C                        # proj
                + 2 * B * N * C * hidden                   # fc1
                + 2 * B * N * hidden * dim_out_p)          # fc2
    transcendentals = int(B * num_heads * N * N            # exp
                          + B * N * hidden                 # erf
                          + B * num_heads * N + 4 * B * N) # reciprocal + rsqrt
    bytes_accessed = int(x_cn.size * x_cn.dtype.itemsize
                         + B * dim_out_p * N * 4
                         + sum(int(np.prod(a.shape)) * a.dtype.itemsize
                               for a in weight_args))

    kernel = functools.partial(
        transformer_resize_kernel,
        num_heads=num_heads, head_dim=head_dim, tq=tq,
    )

    out_cn = pl.pallas_call(
        kernel,
        out_shape=jax.ShapeDtypeStruct((B, dim_out_p, N), x_nchw.dtype),
        grid=(B,),
        in_specs=[pl.BlockSpec((pl.Squeezed(), C, N), lambda b: (b, 0, 0))]
                 + [full_spec(a) for a in weight_args],
        out_specs=pl.BlockSpec((pl.Squeezed(), dim_out_p, N), lambda b: (b, 0, 0)),
        scratch_shapes=[pltpu.VMEM((C, N), jnp.bfloat16)],   # resident bf16 queries
        compiler_params=pltpu.CompilerParams(
            dimension_semantics=("parallel",),
            vmem_limit_bytes=int(vmem_limit)),
        cost_estimate=pl.CostEstimate(flops=flops,
                                      transcendentals=transcendentals,
                                      bytes_accessed=bytes_accessed),
    )(x_cn, *weight_args)

    # Drop sublane padding; 'b c (h w) -> b c h w' is again a pure reshape.
    return out_cn[:, :dim_out, :].reshape(B, dim_out, H, W)


# -------------------------- pure-JAX reference ------------------------------ #
def transformer_resize_ref(x_nchw, params, num_heads):
    B, C, H, W = x_nchw.shape
    N = H * W
    hd = C // num_heads
    x = jnp.transpose(x_nchw, (0, 2, 3, 1)).reshape(B, N, C).astype(jnp.float32)

    y = _layer_norm_rows(x, params["n1_w"], params["n1_b"])
    qkv = y @ params["qkv_w"] + params["qkv_b"]
    qkv = qkv.reshape(B, N, 3, num_heads, hd).transpose(2, 0, 3, 1, 4)
    q, k, v = qkv[0], qkv[1], qkv[2]
    q = q * hd ** -0.5
    a = jax.nn.softmax(jnp.einsum("bhnd,bhmd->bhnm", q, k), axis=-1)
    o = jnp.einsum("bhnm,bhmd->bhnd", a, v)
    o = jnp.transpose(o, (0, 2, 1, 3)).reshape(B, N, C)
    o = o @ params["proj_w"] + params["proj_b"]
    x = x + o

    z = _layer_norm_rows(x, params["n2_w"], params["n2_b"])
    h1 = jax.nn.gelu(z @ params["fc1_w"] + params["fc1_b"], approximate=False)
    out = h1 @ params["fc2_w"] + params["fc2_b"]
    dim_out = out.shape[-1]
    return jnp.transpose(out.reshape(B, H, W, dim_out), (0, 3, 1, 2))


# ----------------------------- parameter init ------------------------------- #
def init_params(key, dim_in, dim_out, mlp_ratio):
    hidden = int(dim_in * mlp_ratio)
    ks = jax.random.split(key, 12)
    normal = lambda k, shape, s=0.02: (s * jax.random.normal(k, shape)).astype(jnp.float32)
    return {
        "n1_w": 1.0 + normal(ks[0], (dim_in,), 0.1),
        "n1_b": normal(ks[1], (dim_in,), 0.1),
        "qkv_w": normal(ks[2], (dim_in, 3 * dim_in)),
        "qkv_b": normal(ks[3], (3 * dim_in,)),
        "proj_w": normal(ks[4], (dim_in, dim_in)),
        "proj_b": normal(ks[5], (dim_in,)),
        "n2_w": 1.0 + normal(ks[6], (dim_in,), 0.1),
        "n2_b": normal(ks[7], (dim_in,), 0.1),
        "fc1_w": normal(ks[8], (dim_in, hidden)),
        "fc1_b": normal(ks[9], (hidden,)),
        "fc2_w": normal(ks[10], (hidden, dim_out)),
        "fc2_b": normal(ks[11], (dim_out,)),
    }


# --------------------------------- main ------------------------------------- #
if __name__ == "__main__":
    B, C_IN, H, W = 2, 64, 16, 16       # N = 256 tokens (two query chunks of 128)
    NUM_HEADS = 4                       # head_dim = 16
    MLP_RATIO = 4.0                     # hidden = 256
    C_OUT = 32

    key = jax.random.PRNGKey(0)
    k_x, k_p = jax.random.split(key)
    x = jax.random.normal(k_x, (B, C_IN, H, W), dtype=jnp.float32)
    params = init_params(k_p, C_IN, C_OUT, MLP_RATIO)

    out = jax.block_until_ready(transformer_resize(x, params, NUM_HEADS))
    ref = jax.block_until_ready(transformer_resize_ref(x, params, NUM_HEADS))

    assert out.shape == (B, C_OUT, H, W), out.shape
    # bf16 MXU operands (f32 accumulation / f32 LN+softmax stats) -> loosened tolerance.
    np.testing.assert_allclose(np.asarray(out), np.asarray(ref), rtol=1e-2, atol=1e-2)

    print("KERNEL_OK")
</pallas_src>

<mosaic_0001>
module attributes {stable_mosaic.version = 11 : i64} {
  func.func @transformer_resize_kernel(%arg0: i32, %arg1: memref<1x64x256xf32, #tpu.memory_space<vmem>>, %arg2: memref<192x64xbf16, #tpu.memory_space<vmem>>, %arg3: memref<192x1xf32, #tpu.memory_space<vmem>>, %arg4: memref<64x64xbf16, #tpu.memory_space<vmem>>, %arg5: memref<64x1xf32, #tpu.memory_space<vmem>>, %arg6: memref<64x1xf32, #tpu.memory_space<vmem>>, %arg7: memref<64x1xf32, #tpu.memory_space<vmem>>, %arg8: memref<64x1xf32, #tpu.memory_space<vmem>>, %arg9: memref<64x1xf32, #tpu.memory_space<vmem>>, %arg10: memref<256x64xbf16, #tpu.memory_space<vmem>>, %arg11: memref<256x1xf32, #tpu.memory_space<vmem>>, %arg12: memref<32x256xbf16, #tpu.memory_space<vmem>>, %arg13: memref<32x1xf32, #tpu.memory_space<vmem>>, %arg14: memref<1x32x256xf32, #tpu.memory_space<vmem>>, %arg15: memref<64x256xbf16, #tpu.memory_space<vmem>>) attributes {dimension_semantics = [#tpu.dimension_semantics<parallel>], iteration_bounds = array<i64: 2>, scalar_prefetch = 0 : i64, scratch_operands = 1 : i64, tpu.core_type = #tpu.core_type<tc>, window_params = [{transform_indices = @transform_0, window_bounds = array<i64: 1, 64, 256>}, {pipeline_mode = #tpu.pipeline_mode<synchronous>, transform_indices = @transform_1, window_bounds = array<i64: 192, 64>}, {pipeline_mode = #tpu.pipeline_mode<synchronous>, transform_indices = @transform_2, window_bounds = array<i64: 192, 1>}, {pipeline_mode = #tpu.pipeline_mode<synchronous>, transform_indices = @transform_3, window_bounds = array<i64: 64, 64>}, {pipeline_mode = #tpu.pipeline_mode<synchronous>, transform_indices = @transform_4, window_bounds = array<i64: 64, 1>}, {pipeline_mode = #tpu.pipeline_mode<synchronous>, transform_indices = @transform_5, window_bounds = array<i64: 64, 1>}, {pipeline_mode = #tpu.pipeline_mode<synchronous>, transform_indices = @transform_6, window_bounds = array<i64: 64, 1>}, {pipeline_mode = #tpu.pipeline_mode<synchronous>, transform_indices = @transform_7, window_bounds = array<i64: 64, 1>}, {pipeline_mode = #tpu.pipeline_mode<synchronous>, transform_indices = @transform_8, window_bounds = array<i64: 64, 1>}, {pipeline_mode = #tpu.pipeline_mode<synchronous>, transform_indices = @transform_9, window_bounds = array<i64: 256, 64>}, {pipeline_mode = #tpu.pipeline_mode<synchronous>, transform_indices = @transform_10, window_bounds = array<i64: 256, 1>}, {pipeline_mode = #tpu.pipeline_mode<synchronous>, transform_indices = @transform_11, window_bounds = array<i64: 32, 256>}, {pipeline_mode = #tpu.pipeline_mode<synchronous>, transform_indices = @transform_12, window_bounds = array<i64: 32, 1>}, {transform_indices = @transform_13, window_bounds = array<i64: 1, 32, 256>}]} {
    %c0 = arith.constant 0 : index
    %c0_0 = arith.constant 0 : index
    %c0_1 = arith.constant 0 : index
    %0 = vector.load %arg1[%c0, %c0_0, %c0_1] : memref<1x64x256xf32, #tpu.memory_space<vmem>>, vector<1x64x256xf32>
    %1 = vector.shape_cast %0 : vector<1x64x256xf32> to vector<64x256xf32>
    %c0_2 = arith.constant 0 : index
    %c0_3 = arith.constant 0 : index
    %2 = vector.load %arg6[%c0_2, %c0_3] : memref<64x1xf32, #tpu.memory_space<vmem>>, vector<64x1xf32>
    %c0_4 = arith.constant 0 : index
    %c0_5 = arith.constant 0 : index
    %3 = vector.load %arg7[%c0_4, %c0_5] : memref<64x1xf32, #tpu.memory_space<vmem>>, vector<64x1xf32>
    %cst = arith.constant dense<0.000000e+00> : vector<256xf32>
    %4 = vector.multi_reduction <add>, %1, %cst [0] : vector<64x256xf32> to vector<256xf32>
    %5 = vector.shape_cast %4 : vector<256xf32> to vector<1x256xf32>
    %cst_6 = arith.constant 6.400000e+01 : f32
    %6 = vector.broadcast %cst_6 : f32 to vector<1x256xf32>
    %7 = arith.divf %5, %6 : vector<1x256xf32>
    %8 = vector.broadcast %7 : vector<1x256xf32> to vector<64x256xf32>
    %9 = arith.subf %1, %8 : vector<64x256xf32>
    %10 = arith.mulf %9, %9 : vector<64x256xf32>
    %cst_7 = arith.constant dense<0.000000e+00> : vector<256xf32>
    %11 = vector.multi_reduction <add>, %10, %cst_7 [0] : vector<64x256xf32> to vector<256xf32>
    %12 = vector.shape_cast %11 : vector<256xf32> to vector<1x256xf32>
    %cst_8 = arith.constant 6.400000e+01 : f32
    %13 = vector.broadcast %cst_8 : f32 to vector<1x256xf32>
    %14 = arith.divf %12, %13 : vector<1x256xf32>
    %15 = vector.broadcast %7 : vector<1x256xf32> to vector<64x256xf32>
    %16 = arith.subf %1, %15 : vector<64x256xf32>
    %cst_9 = arith.constant 9.99999997E-7 : f32
    %17 = vector.broadcast %cst_9 : f32 to vector<1x256xf32>
    %18 = arith.addf %14, %17 : vector<1x256xf32>
    %19 = math.rsqrt %18 : vector<1x256xf32>
    %20 = vector.broadcast %19 : vector<1x256xf32> to vector<64x256xf32>
    %21 = arith.mulf %16, %20 : vector<64x256xf32>
    %22 = vector.broadcast %2 : vector<64x1xf32> to vector<64x256xf32>
    %23 = arith.mulf %21, %22 : vector<64x256xf32>
    %24 = vector.broadcast %3 : vector<64x1xf32> to vector<64x256xf32>
    %25 = arith.addf %23, %24 : vector<64x256xf32>
    %26 = arith.truncf %25 : vector<64x256xf32> to vector<64x256xbf16>
    %c0_10 = arith.constant 0 : index
    %c0_11 = arith.constant 0 : index
    %27 = vector.load %arg2[%c0_10, %c0_11] : memref<192x64xbf16, #tpu.memory_space<vmem>>, vector<192x64xbf16>
    %cst_12 = arith.constant dense<0.000000e+00> : vector<192x256xf32>
    %28 = tpu.matmul %27, %26, %cst_12 {dimension_numbers = #tpu.dot_dimension_numbers<[1], [0], [0], [1], [0, 0, 1, 1], [], []>} : vector<192x64xbf16>, vector<64x256xbf16>, vector<192x256xf32> -> vector<192x256xf32>
    %c0_13 = arith.constant 0 : index
    %c0_14 = arith.constant 0 : index
    %29 = vector.load %arg3[%c0_13, %c0_14] : memref<192x1xf32, #tpu.memory_space<vmem>>, vector<192x1xf32>
    %30 = vector.broadcast %29 : vector<192x1xf32> to vector<192x256xf32>
    %31 = arith.addf %28, %30 : vector<192x256xf32>
    %32 = vector.extract_strided_slice %31 {offsets = [0, 0], sizes = [64, 256], strides = [1, 1]} : vector<192x256xf32> to vector<64x256xf32>
    %33 = arith.truncf %32 : vector<64x256xf32> to vector<64x256xbf16>
    %c0_15 = arith.constant 0 : index
    %c0_16 = arith.constant 0 : index
    %34 = vector.load %arg15[%c0_15, %c0_16] : memref<64x256xbf16, #tpu.memory_space<vmem>>, vector<64x256xbf16>
    tpu.vector_store %arg15[%c0_15, %c0_16], %33 {strides = array<i32>} : memref<64x256xbf16, #tpu.memory_space<vmem>>, vector<64x256xbf16>,
    %35 = vector.extract_strided_slice %31 {offsets = [64, 0], sizes = [64, 256], strides = [1, 1]} : vector<192x256xf32> to vector<64x256xf32>
    %36 = vector.shape_cast %35 : vector<64x256xf32> to vector<4x16x256xf32>
    %37 = arith.truncf %36 : vector<4x16x256xf32> to vector<4x16x256xbf16>
    %38 = vector.extract_strided_slice %31 {offsets = [128, 0], sizes = [64, 256], strides = [1, 1]} : vector<192x256xf32> to vector<64x256xf32>
    %39 = vector.shape_cast %38 : vector<64x256xf32> to vector<4x16x256xf32>
    %40 = arith.truncf %39 : vector<4x16x256xf32> to vector<4x16x256xbf16>
    %41 = tpu.transpose %40, [0, 2, 1] : vector<4x16x256xbf16> -> vector<4x256x16xbf16>
    %c0_i32 = arith.constant 0 : i32
    %c2_i32 = arith.constant 2 : i32
    %42 = arith.addi %c0_i32, %c2_i32 : i32
    %c1_i32 = arith.constant 1 : i32
    scf.for %arg16 = %c0_i32 to %42 step %c1_i32  : i32 {
      %c1_i32_18 = arith.constant 1 : i32
      %43 = arith.muli %arg16, %c1_i32_18 : i32
      %c0_i32_19 = arith.constant 0 : i32
      %44 = arith.addi %c0_i32_19, %43 : i32
      %c128_i32 = arith.constant 128 : i32
      %45 = arith.muli %44, %c128_i32 : i32
      %46 = tpu.assume_multiple %45, 128 : i32
      %c0_20 = arith.constant 0 : index
      %47 = arith.index_cast %46 : i32 to index
      %48 = vector.load %arg15[%c0_20, %47] : memref<64x256xbf16, #tpu.memory_space<vmem>>, vector<64x128xbf16>
      %49 = vector.shape_cast %48 : vector<64x128xbf16> to vector<4x16x128xbf16>
      %50 = tpu.transpose %49, [0, 2, 1] : vector<4x16x128xbf16> -> vector<4x128x16xbf16>
      "tpu.trace_start"() <{level = 10 : i32, message = "hqd,hdn->hqn"}> : () -> ()
      %cst_21 = arith.constant dense<0.000000e+00> : vector<4x128x256xf32>
      %51 = tpu.matmul %50, %37, %cst_21 {dimension_numbers = #tpu.dot_dimension_numbers<[2], [1], [1], [2], [0, 0, 0, 1, 1, 2], [0], [0]>} : vector<4x128x16xbf16>, vector<4x16x256xbf16>, vector<4x128x256xf32> -> vector<4x128x256xf32>
      "tpu.trace_stop"() : () -> ()
      %cst_22 = arith.constant dense<0xFF800000> : vector<4x128xf32>
      %52 = vector.multi_reduction <maximumf>, %51, %cst_22 [2] : vector<4x128x256xf32> to vector<4x128xf32>
      %53 = vector.shape_cast %52 : vector<4x128xf32> to vector<4x128x1xf32>
      %54 = vector.broadcast %53 : vector<4x128x1xf32> to vector<4x128x256xf32>
      %55 = arith.subf %51, %54 : vector<4x128x256xf32>
      %56 = math.exp %55 : vector<4x128x256xf32>
      %cst_23 = arith.constant dense<0.000000e+00> : vector<4x128xf32>
      %57 = vector.multi_reduction <add>, %56, %cst_23 [2] : vector<4x128x256xf32> to vector<4x128xf32>
      %58 = vector.shape_cast %57 : vector<4x128xf32> to vector<4x128x1xf32>
      %59 = arith.truncf %56 : vector<4x128x256xf32> to vector<4x128x256xbf16>
      "tpu.trace_start"() <{level = 10 : i32, message = "hqn,hnd->hqd"}> : () -> ()
      %cst_24 = arith.constant dense<0.000000e+00> : vector<4x128x16xf32>
      %60 = tpu.matmul %59, %41, %cst_24 {dimension_numbers = #tpu.dot_dimension_numbers<[2], [1], [1], [2], [0, 0, 0, 1, 1, 2], [0], [0]>} : vector<4x128x256xbf16>, vector<4x256x16xbf16>, vector<4x128x16xf32> -> vector<4x128x16xf32>
      "tpu.trace_stop"() : () -> ()
      %61 = tpu.reciprocal %58 {approx = true} : vector<4x128x1xf32> -> vector<4x128x1xf32>
      %62 = vector.broadcast %61 : vector<4x128x1xf32> to vector<4x128x16xf32>
      %63 = arith.mulf %60, %62 : vector<4x128x16xf32>
      %64 = arith.truncf %63 : vector<4x128x16xf32> to vector<4x128x16xbf16>
      %65 = tpu.transpose %64, [0, 2, 1] : vector<4x128x16xbf16> -> vector<4x16x128xbf16>
      %66 = vector.shape_cast %65 : vector<4x16x128xbf16> to vector<64x128xbf16>
      %c0_25 = arith.constant 0 : index
      %c0_26 = arith.constant 0 : index
      %67 = vector.load %arg4[%c0_25, %c0_26] : memref<64x64xbf16, #tpu.memory_space<vmem>>, vector<64x64xbf16>
      %cst_27 = arith.constant dense<0.000000e+00> : vector<64x128xf32>
      %68 = tpu.matmul %67, %66, %cst_27 {dimension_numbers = #tpu.dot_dimension_numbers<[1], [0], [0], [1], [0, 0, 1, 1], [], []>} : vector<64x64xbf16>, vector<64x128xbf16>, vector<64x128xf32> -> vector<64x128xf32>
      %c0_28 = arith.constant 0 : index
      %c0_29 = arith.constant 0 : index
      %69 = vector.load %arg5[%c0_28, %c0_29] : memref<64x1xf32, #tpu.memory_space<vmem>>, vector<64x1xf32>
      %70 = vector.broadcast %69 : vector<64x1xf32> to vector<64x128xf32>
      %71 = arith.addf %68, %70 : vector<64x128xf32>
      %c0_30 = arith.constant 0 : index
      %c0_31 = arith.constant 0 : index
      %72 = arith.index_cast %46 : i32 to index
      %73 = vector.load %arg1[%c0_30, %c0_31, %72] : memref<1x64x256xf32, #tpu.memory_space<vmem>>, vector<1x64x128xf32>
      %74 = vector.shape_cast %73 : vector<1x64x128xf32> to vector<64x128xf32>
      %75 = arith.addf %74, %71 : vector<64x128xf32>
      %c0_32 = arith.constant 0 : index
      %c0_33 = arith.constant 0 : index
      %76 = vector.load %arg8[%c0_32, %c0_33] : memref<64x1xf32, #tpu.memory_space<vmem>>, vector<64x1xf32>
      %c0_34 = arith.constant 0 : index
      %c0_35 = arith.constant 0 : index
      %77 = vector.load %arg9[%c0_34, %c0_35] : memref<64x1xf32, #tpu.memory_space<vmem>>, vector<64x1xf32>
      %cst_36 = arith.constant dense<0.000000e+00> : vector<128xf32>
      %78 = vector.multi_reduction <add>, %75, %cst_36 [0] : vector<64x128xf32> to vector<128xf32>
      %79 = vector.shape_cast %78 : vector<128xf32> to vector<1x128xf32>
      %cst_37 = arith.constant 6.400000e+01 : f32
      %80 = vector.broadcast %cst_37 : f32 to vector<1x128xf32>
      %81 = arith.divf %79, %80 : vector<1x128xf32>
      %82 = vector.broadcast %81 : vector<1x128xf32> to vector<64x128xf32>
      %83 = arith.subf %75, %82 : vector<64x128xf32>
      %84 = arith.mulf %83, %83 : vector<64x128xf32>
      %cst_38 = arith.constant dense<0.000000e+00> : vector<128xf32>
      %85 = vector.multi_reduction <add>, %84, %cst_38 [0] : vector<64x128xf32> to vector<128xf32>
      %86 = vector.shape_cast %85 : vector<128xf32> to vector<1x128xf32>
      %cst_39 = arith.constant 6.400000e+01 : f32
      %87 = vector.broadcast %cst_39 : f32 to vector<1x128xf32>
      %88 = arith.divf %86, %87 : vector<1x128xf32>
      %89 = vector.broadcast %81 : vector<1x128xf32> to vector<64x128xf32>
      %90 = arith.subf %75, %89 : vector<64x128xf32>
      %cst_40 = arith.constant 9.99999997E-7 : f32
      %91 = vector.broadcast %cst_40 : f32 to vector<1x128xf32>
      %92 = arith.addf %88, %91 : vector<1x128xf32>
      %93 = math.rsqrt %92 : vector<1x128xf32>
      %94 = vector.broadcast %93 : vector<1x128xf32> to vector<64x128xf32>
      %95 = arith.mulf %90, %94 : vector<64x128xf32>
      %96 = vector.broadcast %76 : vector<64x1xf32> to vector<64x128xf32>
      %97 = arith.mulf %95, %96 : vector<64x128xf32>
      %98 = vector.broadcast %77 : vector<64x1xf32> to vector<64x128xf32>
      %99 = arith.addf %97, %98 : vector<64x128xf32>
      %100 = arith.truncf %99 : vector<64x128xf32> to vector<64x128xbf16>
      %c0_41 = arith.constant 0 : index
      %c0_42 = arith.constant 0 : index
      %101 = vector.load %arg10[%c0_41, %c0_42] : memref<256x64xbf16, #tpu.memory_space<vmem>>, vector<256x64xbf16>
      %cst_43 = arith.constant dense<0.000000e+00> : vector<256x128xf32>
      %102 = tpu.matmul %101, %100, %cst_43 {dimension_numbers = #tpu.dot_dimension_numbers<[1], [0], [0], [1], [0, 0, 1, 1], [], []>} : vector<256x64xbf16>, vector<64x128xbf16>, vector<256x128xf32> -> vector<256x128xf32>
      %c0_44 = arith.constant 0 : index
      %c0_45 = arith.constant 0 : index
      %103 = vector.load %arg11[%c0_44, %c0_45] : memref<256x1xf32, #tpu.memory_space<vmem>>, vector<256x1xf32>
      %104 = vector.broadcast %103 : vector<256x1xf32> to vector<256x128xf32>
      %105 = arith.addf %102, %104 : vector<256x128xf32>
      %cst_46 = arith.constant 5.000000e-01 : f32
      %106 = vector.broadcast %cst_46 : f32 to vector<256x128xf32>
      %107 = arith.mulf %106, %105 : vector<256x128xf32>
      %cst_47 = arith.constant 0.707106769 : f32
      %108 = vector.broadcast %cst_47 : f32 to vector<256x128xf32>
      %109 = arith.mulf %105, %108 : vector<256x128xf32>
      %110 = math.erf %109 : vector<256x128xf32>
      %cst_48 = arith.constant 1.000000e+00 : f32
      %111 = vector.broadcast %cst_48 : f32 to vector<256x128xf32>
      %112 = arith.addf %111, %110 : vector<256x128xf32>
      %113 = arith.mulf %107, %112 : vector<256x128xf32>
      %c0_49 = arith.constant 0 : index
      %c0_50 = arith.constant 0 : index
      %114 = vector.load %arg12[%c0_49, %c0_50] : memref<32x256xbf16, #tpu.memory_space<vmem>>, vector<32x256xbf16>
      %115 = arith.truncf %113 : vector<256x128xf32> to vector<256x128xbf16>
      %cst_51 = arith.constant dense<0.000000e+00> : vector<32x128xf32>
      %116 = tpu.matmul %114, %115, %cst_51 {dimension_numbers = #tpu.dot_dimension_numbers<[1], [0], [0], [1], [0, 0, 1, 1], [], []>} : vector<32x256xbf16>, vector<256x128xbf16>, vector<32x128xf32> -> vector<32x128xf32>
      %c0_52 = arith.constant 0 : index
      %c0_53 = arith.constant 0 : index
      %117 = vector.load %arg13[%c0_52, %c0_53] : memref<32x1xf32, #tpu.memory_space<vmem>>, vector<32x1xf32>
      %118 = vector.broadcast %117 : vector<32x1xf32> to vector<32x128xf32>
      %119 = arith.addf %116, %118 : vector<32x128xf32>
      %c0_54 = arith.constant 0 : index
      %c0_55 = arith.constant 0 : index
      %120 = arith.index_cast %46 : i32 to index
      %121 = vector.load %arg14[%c0_54, %c0_55, %120] : memref<1x32x256xf32, #tpu.memory_space<vmem>>, vector<1x32x128xf32>
      %122 = vector.shape_cast %121 : vector<1x32x128xf32> to vector<32x128xf32>
      %123 = vector.shape_cast %119 : vector<32x128xf32> to vector<1x32x128xf32>
      tpu.vector_store %arg14[%c0_54, %c0_55, %120], %123 {strides = array<i32>} : memref<1x32x256xf32, #tpu.memory_space<vmem>>, vector<1x32x128xf32>,
    }
    %c2_i32_17 = arith.constant 2 : i32
    return
  }
  func.func @transform_0(%arg0: i32) -> (i32, i32, i32) {
    %c0_i32 = arith.constant 0 : i32
    %c0_i32_0 = arith.constant 0 : i32
    %c0_i32_1 = arith.constant 0 : i32
    return %arg0, %c0_i32, %c0_i32_0 : i32, i32, i32
  }
  func.func @transform_1(%arg0: i32) -> (i32, i32) {
    %c0_i32 = arith.constant 0 : i32
    %c0_i32_0 = arith.constant 0 : i32
    %c0_i32_1 = arith.constant 0 : i32
    return %c0_i32, %c0_i32_0 : i32, i32
  }
  func.func @transform_2(%arg0: i32) -> (i32, i32) {
    %c0_i32 = arith.constant 0 : i32
    %c0_i32_0 = arith.constant 0 : i32
    %c0_i32_1 = arith.constant 0 : i32
    return %c0_i32, %c0_i32_0 : i32, i32
  }
  func.func @transform_3(%arg0: i32) -> (i32, i32) {
    %c0_i32 = arith.constant 0 : i32
    %c0_i32_0 = arith.constant 0 : i32
    %c0_i32_1 = arith.constant 0 : i32
    return %c0_i32, %c0_i32_0 : i32, i32
  }
  func.func @transform_4(%arg0: i32) -> (i32, i32) {
    %c0_i32 = arith.constant 0 : i32
    %c0_i32_0 = arith.constant 0 : i32
    %c0_i32_1 = arith.constant 0 : i32
    return %c0_i32, %c0_i32_0 : i32, i32
  }
  func.func @transform_5(%arg0: i32) -> (i32, i32) {
    %c0_i32 = arith.constant 0 : i32
    %c0_i32_0 = arith.constant 0 : i32
    %c0_i32_1 = arith.constant 0 : i32
    return %c0_i32, %c0_i32_0 : i32, i32
  }
  func.func @transform_6(%arg0: i32) -> (i32, i32) {
    %c0_i32 = arith.constant 0 : i32
    %c0_i32_0 = arith.constant 0 : i32
    %c0_i32_1 = arith.constant 0 : i32
    return %c0_i32, %c0_i32_0 : i32, i32
  }
  func.func @transform_7(%arg0: i32) -> (i32, i32) {
    %c0_i32 = arith.constant 0 : i32
    %c0_i32_0 = arith.constant 0 : i32
    %c0_i32_1 = arith.constant 0 : i32
    return %c0_i32, %c0_i32_0 : i32, i32
  }
  func.func @transform_8(%arg0: i32) -> (i32, i32) {
    %c0_i32 = arith.constant 0 : i32
    %c0_i32_0 = arith.constant 0 : i32
    %c0_i32_1 = arith.constant 0 : i32
    return %c0_i32, %c0_i32_0 : i32, i32
  }
  func.func @transform_9(%arg0: i32) -> (i32, i32) {
    %c0_i32 = arith.constant 0 : i32
    %c0_i32_0 = arith.constant 0 : i32
    %c0_i32_1 = arith.constant 0 : i32
    return %c0_i32, %c0_i32_0 : i32, i32
  }
  func.func @transform_10(%arg0: i32) -> (i32, i32) {
    %c0_i32 = arith.constant 0 : i32
    %c0_i32_0 = arith.constant 0 : i32
    %c0_i32_1 = arith.constant 0 : i32
    return %c0_i32, %c0_i32_0 : i32, i32
  }
  func.func @transform_11(%arg0: i32) -> (i32, i32) {
    %c0_i32 = arith.constant 0 : i32
    %c0_i32_0 = arith.constant 0 : i32
    %c0_i32_1 = arith.constant 0 : i32
    return %c0_i32, %c0_i32_0 : i32, i32
  }
  func.func @transform_12(%arg0: i32) -> (i32, i32) {
    %c0_i32 = arith.constant 0 : i32
    %c0_i32_0 = arith.constant 0 : i32
    %c0_i32_1 = arith.constant 0 : i32
    return %c0_i32, %c0_i32_0 : i32, i32
  }
  func.func @transform_13(%arg0: i32) -> (i32, i32, i32) {
    %c0_i32 = arith.constant 0 : i32
    %c0_i32_0 = arith.constant 0 : i32
    %c0_i32_1 = arith.constant 0 : i32
    return %arg0, %c0_i32, %c0_i32_0 : i32, i32, i32
  }
}

</mosaic_0001>

<llo_original>
// kernel: tpu_custom_call.1
$region0: #{tpu_custom_call.1}
  #allocation0 [shape = 'u32[]', space=smem, size = 0x4, offset = 0x4, fixed_abs, tag = 'smem constant byte address 0x4 - core index']
  #allocation1 [shape = 'u32[144,128]{1,0:T(1,128)}', space=vmem, size = 0x12000, scoped, tag = 'internal scratch']
  #allocation2 [shape = 'bf16[64,256]{1,0:T(8,128)(2,1)}', space=vmem, size = 0x8000, scoped, tag = 'scratch operand']
  %s0 = inlined_call_operand.vmem [shape: f32[2,64,256], index: 0, kind: input, shape index: {}]
  %s1 = inlined_call_operand.vmem [shape: bf16[192,64], index: 1, kind: input, shape index: {}]
  %s2 = inlined_call_operand.vmem [shape: f32[192,1], index: 2, kind: input, shape index: {}]
  %s3 = inlined_call_operand.vmem [shape: bf16[64,64], index: 3, kind: input, shape index: {}]
  %s4 = inlined_call_operand.vmem [shape: f32[64,1], index: 4, kind: input, shape index: {}]
  %s5 = inlined_call_operand.vmem [shape: f32[64,1], index: 5, kind: input, shape index: {}]
  %s6 = inlined_call_operand.vmem [shape: f32[64,1], index: 6, kind: input, shape index: {}]
  %s7 = inlined_call_operand.vmem [shape: f32[64,1], index: 7, kind: input, shape index: {}]
  %s8 = inlined_call_operand.vmem [shape: f32[64,1], index: 8, kind: input, shape index: {}]
  %s9 = inlined_call_operand.vmem [shape: bf16[256,64], index: 9, kind: input, shape index: {}]
  %s10 = inlined_call_operand.vmem [shape: f32[256,1], index: 10, kind: input, shape index: {}]
  %s11 = inlined_call_operand.vmem [shape: bf16[32,256], index: 11, kind: input, shape index: {}]
  %s12 = inlined_call_operand.vmem [shape: f32[32,1], index: 12, kind: input, shape index: {}]
  %s13 = inlined_call_operand.hbm [shape: f32[2,32,256], index: 13, kind: output, shape index: {}]
  %s14 = sld [smem:[#allocation0]]
  $region92: #{tpu_custom_call.1} parent=0
    _
  %s16 = ssub.s32 1, %s14
  %s17 = scalar_select 0, %s16, %s14
  $region1: #{tpu_custom_call.1} parent=0
    #allocation3 [shape = 'u8[65536]{0}', space=vmem, size = 0x10000, scoped, tag = 'output window, operand 0']
    #allocation4 [shape = 's32[2]{0}', space=sflag, size = 0x8, scoped, tag = 'scoped memory for tpu_custom_call.1']
    %18 = vsyncpa [#allocation4], 0
    %s19 = scalar_lea.sflag [#allocation4], 1
    %20 = vsyncpa %s19, 0
    loop: start=0, step=1, limit=4
    $region2: #{tpu_custom_call.1} parent=1 // loop_pre_header
      _
    $region3: #{tpu_custom_call.1} parent=1 // loop_header
      %s22 = sphi 0, %s26
      %p23 = scmp.ge.s32.totalorder %s22, 4
      %s32 = sphi 0, %s34
      %s35 = sphi 0, %s32
      %s36 = sphi 0, %s35
      %s52 = sphi 0, %s36
      %s56 = sphi 0, %s56
      %s58 = sphi 0, %s56
      %s59 = sphi 0, %s58
      %s73 = sphi 0, %s59
      %s77 = sphi 0, %s77
      %s79 = sphi 0, %s77
      %s80 = sphi 0, %s79
      %s94 = sphi 0, %s80
      %s98 = sphi 0, %s98
      %s100 = sphi 0, %s98
      %s101 = sphi 0, %s100
      %s115 = sphi 0, %s101
      %s119 = sphi 0, %s119
      %s121 = sphi 0, %s119
      %s122 = sphi 0, %s121
      %s136 = sphi 0, %s122
      %s140 = sphi 0, %s140
      %s142 = sphi 0, %s140
      %s143 = sphi 0, %s142
      %s157 = sphi 0, %s143
      %s161 = sphi 0, %s161
      %s163 = sphi 0, %s161
      %s164 = sphi 0, %s163
      %s178 = sphi 0, %s164
      %s182 = sphi 0, %s182
      %s184 = sphi 0, %s182
      %s185 = sphi 0, %s184
      %s199 = sphi 0, %s185
      %s203 = sphi 0, %s203
      %s205 = sphi 0, %s203
      %s206 = sphi 0, %s205
      %s220 = sphi 0, %s206
      %s224 = sphi 0, %s224
      %s226 = sphi 0, %s224
      %s227 = sphi 0, %s226
      %s241 = sphi 0, %s227
      %s245 = sphi 0, %s245
      %s247 = sphi 0, %s245
      %s248 = sphi 0, %s247
      %s262 = sphi 0, %s248
      %s266 = sphi 0, %s266
      %s268 = sphi 0, %s266
      %s269 = sphi 0, %s268
      %s283 = sphi 0, %s269
      %s287 = sphi 0, %s287
      %s289 = sphi 0, %s287
      %s290 = sphi 0, %s289
      %s304 = sphi 0, %s290
      %s310 = sphi 0, %s312
      %s313 = sphi 0, %s310
      %s314 = sphi 0, %s313
      %s330 = sphi 0, %s314
    $region4: #{tpu_custom_call.1} parent=1 // loop_header_branch
      %25 = sbr.rel (%p23) target = $region8
    $region5: #{tpu_custom_call.1} parent=1 // loop_body
      %s27 = ssub.s32 %s22, 1
      %s28 = ssub.s32 %s22, 2
      %s29 = sadd.s32 %s22, 1
      %s30 = ssub.s32 %s22, %s29
      %p31 = scmp.eq.s32.totalorder %s30, 0
      %s33 = sadd.s32 %s32, 1
      %s34 = scalar_select %p31, %s32, %s33
      %p37 = pneg %p31
      %p38 = scmp.eq.s32.totalorder %s22, 1
      %p39 = por %p37, %p38
      %p40 = scmp.ne.s32.totalorder %s32, %s35
      %p41 = scmp.eq.s32.totalorder %s22, 0
      %p42 = por %p40, %p41
      %p43 = scmp.ne.s32.totalorder %s32, %s35
      %p44 = scmp.eq.s32.totalorder %s27, 1
      %p45 = por %p43, %p44
      %p46 = scmp.ne.s32.totalorder %s35, %s36
      %p47 = scmp.eq.s32.totalorder %s27, 0
      %p48 = por %p46, %p47
      %p49 = scmp.ne.s32.totalorder %s35, %s36
      %p50 = scmp.eq.s32.totalorder %s28, 1
      %p51 = por %p49, %p50
      %p53 = scmp.ne.s32.totalorder %s36, %s52
      %p54 = scmp.eq.s32.totalorder %s28, 0
      %p55 = por %p53, %p54
      %s57 = sadd.s32 %s56, 1
      %p60 = scmp.eq.s32.totalorder %s22, 1
      %p61 = scmp.ne.s32.totalorder %s56, %s58
      %p62 = scmp.eq.s32.totalorder %s22, 0
      %p63 = por %p61, %p62
      %p64 = scmp.ne.s32.totalorder %s56, %s58
      %p65 = scmp.eq.s32.totalorder %s27, 1
      %p66 = por %p64, %p65
      %p67 = scmp.ne.s32.totalorder %s58, %s59
      %p68 = scmp.eq.s32.totalorder %s27, 0
      %p69 = por %p67, %p68
      %p70 = scmp.ne.s32.totalorder %s58, %s59
      %p71 = scmp.eq.s32.totalorder %s28, 1
      %p72 = por %p70, %p71
      %p74 = scmp.ne.s32.totalorder %s59, %s73
      %p75 = scmp.eq.s32.totalorder %s28, 0
      %p76 = por %p74, %p75
      %s78 = sadd.s32 %s77, 1
      %p81 = scmp.eq.s32.totalorder %s22, 1
      %p82 = scmp.ne.s32.totalorder %s77, %s79
      %p83 = scmp.eq.s32.totalorder %s22, 0
      %p84 = por %p82, %p83
      %p85 = scmp.ne.s32.totalorder %s77, %s79
      %p86 = scmp.eq.s32.totalorder %s27, 1
      %p87 = por %p85, %p86
      %p88 = scmp.ne.s32.totalorder %s79, %s80
      %p89 = scmp.eq.s32.totalorder %s27, 0
      %p90 = por %p88, %p89
      %p91 = scmp.ne.s32.totalorder %s79, %s80
      %p92 = scmp.eq.s32.totalorder %s28, 1
      %p93 = por %p91, %p92
      %p95 = scmp.ne.s32.totalorder %s80, %s94
      %p96 = scmp.eq.s32.totalorder %s28, 0
      %p97 = por %p95, %p96
      %s99 = sadd.s32 %s98, 1
      %p102 = scmp.eq.s32.totalorder %s22, 1
      %p103 = scmp.ne.s32.totalorder %s98, %s100
      %p104 = scmp.eq.s32.totalorder %s22, 0
      %p105 = por %p103, %p104
      %p106 = scmp.ne.s32.totalorder %s98, %s100
      %p107 = scmp.eq.s32.totalorder %s27, 1
      %p108 = por %p106, %p107
      %p109 = scmp.ne.s32.totalorder %s100, %s101
      %p110 = scmp.eq.s32.totalorder %s27, 0
      %p111 = por %p109, %p110
      %p112 = scmp.ne.s32.totalorder %s100, %s101
      %p113 = scmp.eq.s32.totalorder %s28, 1
      %p114 = por %p112, %p113
      %p116 = scmp.ne.s32.totalorder %s101, %s115
      %p117 = scmp.eq.s32.totalorder %s28, 0
      %p118 = por %p116, %p117
      %s120 = sadd.s32 %s119, 1
      %p123 = scmp.eq.s32.totalorder %s22, 1
      %p124 = scmp.ne.s32.totalorder %s119, %s121
      %p125 = scmp.eq.s32.totalorder %s22, 0
      %p126 = por %p124, %p125
      %p127 = scmp.ne.s32.totalorder %s119, %s121
      %p128 = scmp.eq.s32.totalorder %s27, 1
      %p129 = por %p127, %p128
      %p130 = scmp.ne.s32.totalorder %s121, %s122
      %p131 = scmp.eq.s32.totalorder %s27, 0
      %p132 = por %p130, %p131
      %p133 = scmp.ne.s32.totalorder %s121, %s122
      %p134 = scmp.eq.s32.totalorder %s28, 1
      %p135 = por %p133, %p134
      %p137 = scmp.ne.s32.totalorder %s122, %s136
      %p138 = scmp.eq.s32.totalorder %s28, 0
      %p139 = por %p137, %p138
      %s141 = sadd.s32 %s140, 1
      %p144 = scmp.eq.s32.totalorder %s22, 1
      %p145 = scmp.ne.s32.totalorder %s140, %s142
      %p146 = scmp.eq.s32.totalorder %s22, 0
      %p147 = por %p145, %p146
      %p148 = scmp.ne.s32.totalorder %s140, %s142
      %p149 = scmp.eq.s32.totalorder %s27, 1
      %p150 = por %p148, %p149
      %p151 = scmp.ne.s32.totalorder %s142, %s143
      %p152 = scmp.eq.s32.totalorder %s27, 0
      %p153 = por %p151, %p152
      %p154 = scmp.ne.s32.totalorder %s142, %s143
      %p155 = scmp.eq.s32.totalorder %s28, 1
      %p156 = por %p154, %p155
      %p158 = scmp.ne.s32.totalorder %s143, %s157
      %p159 = scmp.eq.s32.totalorder %s28, 0
      %p160 = por %p158, %p159
      %s162 = sadd.s32 %s161, 1
      %p165 = scmp.eq.s32.totalorder %s22, 1
      %p166 = scmp.ne.s32.totalorder %s161, %s163
      %p167 = scmp.eq.s32.totalorder %s22, 0
      %p168 = por %p166, %p167
      %p169 = scmp.ne.s32.totalorder %s161, %s163
      %p170 = scmp.eq.s32.totalorder %s27, 1
      %p171 = por %p169, %p170
      %p172 = scmp.ne.s32.totalorder %s163, %s164
      %p173 = scmp.eq.s32.totalorder %s27, 0
      %p174 = por %p172, %p173
      %p175 = scmp.ne.s32.totalorder %s163, %s164
      %p176 = scmp.eq.s32.totalorder %s28, 1
      %p177 = por %p175, %p176
      %p179 = scmp.ne.s32.totalorder %s164, %s178
      %p180 = scmp.eq.s32.totalorder %s28, 0
      %p181 = por %p179, %p180
      %s183 = sadd.s32 %s182, 1
      %p186 = scmp.eq.s32.totalorder %s22, 1
      %p187 = scmp.ne.s32.totalorder %s182, %s184
      %p188 = scmp.eq.s32.totalorder %s22, 0
      %p189 = por %p187, %p188
      %p190 = scmp.ne.s32.totalorder %s182, %s184
      %p191 = scmp.eq.s32.totalorder %s27, 1
      %p192 = por %p190, %p191
      %p193 = scmp.ne.s32.totalorder %s184, %s185
      %p194 = scmp.eq.s32.totalorder %s27, 0
      %p195 = por %p193, %p194
      %p196 = scmp.ne.s32.totalorder %s184, %s185
      %p197 = scmp.eq.s32.totalorder %s28, 1
      %p198 = por %p196, %p197
      %p200 = scmp.ne.s32.totalorder %s185, %s199
      %p201 = scmp.eq.s32.totalorder %s28, 0
      %p202 = por %p200, %p201
      %s204 = sadd.s32 %s203, 1
      %p207 = scmp.eq.s32.totalorder %s22, 1
      %p208 = scmp.ne.s32.totalorder %s203, %s205
      %p209 = scmp.eq.s32.totalorder %s22, 0
      %p210 = por %p208, %p209
      %p211 = scmp.ne.s32.totalorder %s203, %s205
      %p212 = scmp.eq.s32.totalorder %s27, 1
      %p213 = por %p211, %p212
      %p214 = scmp.ne.s32.totalorder %s205, %s206
      %p215 = scmp.eq.s32.totalorder %s27, 0
      %p216 = por %p214, %p215
      %p217 = scmp.ne.s32.totalorder %s205, %s206
      %p218 = scmp.eq.s32.totalorder %s28, 1
      %p219 = por %p217, %p218
      %p221 = scmp.ne.s32.totalorder %s206, %s220
      %p222 = scmp.eq.s32.totalorder %s28, 0
      %p223 = por %p221, %p222
      %s225 = sadd.s32 %s224, 1
      %p228 = scmp.eq.s32.totalorder %s22, 1
      %p229 = scmp.ne.s32.totalorder %s224, %s226
      %p230 = scmp.eq.s32.totalorder %s22, 0
      %p231 = por %p229, %p230
      %p232 = scmp.ne.s32.totalorder %s224, %s226
      %p233 = scmp.eq.s32.totalorder %s27, 1
      %p234 = por %p232, %p233
      %p235 = scmp.ne.s32.totalorder %s226, %s227
      %p236 = scmp.eq.s32.totalorder %s27, 0
      %p237 = por %p235, %p236
      %p238 = scmp.ne.s32.totalorder %s226, %s227
      %p239 = scmp.eq.s32.totalorder %s28, 1
      %p240 = por %p238, %p239
      %p242 = scmp.ne.s32.totalorder %s227, %s241
      %p243 = scmp.eq.s32.totalorder %s28, 0
      %p244 = por %p242, %p243
      %s246 = sadd.s32 %s245, 1
      %p249 = scmp.eq.s32.totalorder %s22, 1
      %p250 = scmp.ne.s32.totalorder %s245, %s247
      %p251 = scmp.eq.s32.totalorder %s22, 0
      %p252 = por %p250, %p251
      %p253 = scmp.ne.s32.totalorder %s245, %s247
      %p254 = scmp.eq.s32.totalorder %s27, 1
      %p255 = por %p253, %p254
      %p256 = scmp.ne.s32.totalorder %s247, %s248
      %p257 = scmp.eq.s32.totalorder %s27, 0
      %p258 = por %p256, %p257
      %p259 = scmp.ne.s32.totalorder %s247, %s248
      %p260 = scmp.eq.s32.totalorder %s28, 1
      %p261 = por %p259, %p260
      %p263 = scmp.ne.s32.totalorder %s248, %s262
      %p264 = scmp.eq.s32.totalorder %s28, 0
      %p265 = por %p263, %p264
      %s267 = sadd.s32 %s266, 1
      %p270 = scmp.eq.s32.totalorder %s22, 1
      %p271 = scmp.ne.s32.totalorder %s266, %s268
      %p272 = scmp.eq.s32.totalorder %s22, 0
      %p273 = por %p271, %p272
      %p274 = scmp.ne.s32.totalorder %s266, %s268
      %p275 = scmp.eq.s32.totalorder %s27, 1
      %p276 = por %p274, %p275
      %p277 = scmp.ne.s32.totalorder %s268, %s269
      %p278 = scmp.eq.s32.totalorder %s27, 0
      %p279 = por %p277, %p278
      %p280 = scmp.ne.s32.totalorder %s268, %s269
      %p281 = scmp.eq.s32.totalorder %s28, 1
      %p282 = por %p280, %p281
      %p284 = scmp.ne.s32.totalorder %s269, %s283
      %p285 = scmp.eq.s32.totalorder %s28, 0
      %p286 = por %p284, %p285
      %s288 = sadd.s32 %s287, 1
      %p291 = scmp.eq.s32.totalorder %s22, 1
      %p292 = scmp.ne.s32.totalorder %s287, %s289
      %p293 = scmp.eq.s32.totalorder %s22, 0
      %p294 = por %p292, %p293
      %p295 = scmp.ne.s32.totalorder %s287, %s289
      %p296 = scmp.eq.s32.totalorder %s27, 1
      %p297 = por %p295, %p296
      %p298 = scmp.ne.s32.totalorder %s289, %s290
      %p299 = scmp.eq.s32.totalorder %s27, 0
      %p300 = por %p298, %p299
      %p301 = scmp.ne.s32.totalorder %s289, %s290
      %p302 = scmp.eq.s32.totalorder %s28, 1
      %p303 = por %p301, %p302
      %p305 = scmp.ne.s32.totalorder %s290, %s304
      %p306 = scmp.eq.s32.totalorder %s28, 0
      %p307 = por %p305, %p306
      %s308 = ssub.s32 %s22, %s29
      %p309 = scmp.eq.s32.totalorder %s308, 0
      %s311 = sadd.s32 %s310, 1
      %s312 = scalar_select %p309, %s310, %s311
      %p315 = pneg %p309
      %p316 = scmp.eq.s32.totalorder %s22, 1
      %p317 = por %p315, %p316
      %p318 = scmp.ne.s32.totalorder %s310, %s313
      %p319 = scmp.eq.s32.totalorder %s22, 0
      %p320 = por %p318, %p319
      %p321 = scmp.ne.s32.totalorder %s310, %s313
      %p322 = scmp.eq.s32.totalorder %s27, 1
      %p323 = por %p321, %p322
      %p324 = scmp.ne.s32.totalorder %s313, %s314
      %p325 = scmp.eq.s32.totalorder %s27, 0
      %p326 = por %p324, %p325
      %p327 = scmp.ne.s32.totalorder %s313, %s314
      %p328 = scmp.eq.s32.totalorder %s28, 1
      %p329 = por %p327, %p328
      %p331 = scmp.ne.s32.totalorder %s314, %s330
      %p332 = scmp.eq.s32.totalorder %s28, 0
      %p333 = por %p331, %p332
      %p334 = scmp.le.s32.totalorder 1, %s22
      %p335 = scmp.lt.s32.totalorder %s22, 3
      %p336 = pnand %p334, %p335
      %p337 = pneg %p336
      // Predicated region
      $region9: #{tpu_custom_call.1} parent=5 // pred_check
        _
      $region10: #{tpu_custom_call.1} parent=5 // pred_check_branch
        %339 = sbr.rel (%p336) target = $region12
      $region11: #{tpu_custom_call.1} parent=5 // pred_region
        %s340 = ssub.s32 %s22, 1
        // Predicated region
        $region13: #{tpu_custom_call.1} parent=11 // pred_check
          %p341 = pneg %p69
        $region14: #{tpu_custom_call.1} parent=11 // pred_check_branch
          %343 = sbr.rel (%p341) target = $region16
        $region15: #{tpu_custom_call.1} parent=11 // pred_region
          _
        $region16: #{tpu_custom_call.1} parent=11 // pred_fallthru
          _
        // Predicated region
        $region17: #{tpu_custom_call.1} parent=11 // pred_check
          %p344 = pneg %p90
        $region18: #{tpu_custom_call.1} parent=11 // pred_check_branch
          %346 = sbr.rel (%p344) target = $region20
        $region19: #{tpu_custom_call.1} parent=11 // pred_region
          _
        $region20: #{tpu_custom_call.1} parent=11 // pred_fallthru
          _
        // Predicated region
        $region21: #{tpu_custom_call.1} parent=11 // pred_check
          %p347 = pneg %p111
        $region22: #{tpu_custom_call.1} parent=11 // pred_check_branch
          %349 = sbr.rel (%p347) target = $region24
        $region23: #{tpu_custom_call.1} parent=11 // pred_region
          _
        $region24: #{tpu_custom_call.1} parent=11 // pred_fallthru
          _
        // Predicated region
        $region25: #{tpu_custom_call.1} parent=11 // pred_check
          %p350 = pneg %p132
        $region26: #{tpu_custom_call.1} parent=11 // pred_check_branch
          %352 = sbr.rel (%p350) target = $region28
        $region27: #{tpu_custom_call.1} parent=11 // pred_region
          _
        $region28: #{tpu_custom_call.1} parent=11 // pred_fallthru
          _
        // Predicated region
        $region29: #{tpu_custom_call.1} parent=11 // pred_check
          %p353 = pneg %p153
        $region30: #{tpu_custom_call.1} parent=11 // pred_check_branch
          %355 = sbr.rel (%p353) target = $region32
        $region31: #{tpu_custom_call.1} parent=11 // pred_region
          _
        $region32: #{tpu_custom_call.1} parent=11 // pred_fallthru
          _
        // Predicated region
        $region33: #{tpu_custom_call.1} parent=11 // pred_check
          %p356 = pneg %p174
        $region34: #{tpu_custom_call.1} parent=11 // pred_check_branch
          %358 = sbr.rel (%p356) target = $region36
        $region35: #{tpu_custom_call.1} parent=11 // pred_region
          _
        $region36: #{tpu_custom_call.1} parent=11 // pred_fallthru
          _
        // Predicated region
        $region37: #{tpu_custom_call.1} parent=11 // pred_check
          %p359 = pneg %p195
        $region38: #{tpu_custom_call.1} parent=11 // pred_check_branch
          %361 = sbr.rel (%p359) target = $region40
        $region39: #{tpu_custom_call.1} parent=11 // pred_region
          _
        $region40: #{tpu_custom_call.1} parent=11 // pred_fallthru
          _
        // Predicated region
        $region41: #{tpu_custom_call.1} parent=11 // pred_check
          %p362 = pneg %p216
        $region42: #{tpu_custom_call.1} parent=11 // pred_check_branch
          %364 = sbr.rel (%p362) target = $region44
        $region43: #{tpu_custom_call.1} parent=11 // pred_region
          _
        $region44: #{tpu_custom_call.1} parent=11 // pred_fallthru
          _
        // Predicated region
        $region45: #{tpu_custom_call.1} parent=11 // pred_check
          %p365 = pneg %p237
        $region46: #{tpu_custom_call.1} parent=11 // pred_check_branch
          %367 = sbr.rel (%p365) target = $region48
        $region47: #{tpu_custom_call.1} parent=11 // pred_region
          _
        $region48: #{tpu_custom_call.1} parent=11 // pred_fallthru
          _
        // Predicated region
        $region49: #{tpu_custom_call.1} parent=11 // pred_check
          %p368 = pneg %p258
        $region50: #{tpu_custom_call.1} parent=11 // pred_check_branch
          %370 = sbr.rel (%p368) target = $region52
        $region51: #{tpu_custom_call.1} parent=11 // pred_region
          _
        $region52: #{tpu_custom_call.1} parent=11 // pred_fallthru
          _
        // Predicated region
        $region53: #{tpu_custom_call.1} parent=11 // pred_check
          %p371 = pneg %p279
        $region54: #{tpu_custom_call.1} parent=11 // pred_check_branch
          %373 = sbr.rel (%p371) target = $region56
        $region55: #{tpu_custom_call.1} parent=11 // pred_region
          _
        $region56: #{tpu_custom_call.1} parent=11 // pred_fallthru
          _
        // Predicated region
        $region57: #{tpu_custom_call.1} parent=11 // pred_check
          %p374 = pneg %p300
        $region58: #{tpu_custom_call.1} parent=11 // pred_check_branch
          %376 = sbr.rel (%p374) target = $region60
        $region59: #{tpu_custom_call.1} parent=11 // pred_region
          _
        $region60: #{tpu_custom_call.1} parent=11 // pred_fallthru
          _
      $region12: #{tpu_custom_call.1} parent=5 // pred_fallthru
        _
      %p377 = scmp.lt.s32.totalorder %s22, 2
      // Predicated region
      $region61: #{tpu_custom_call.1} parent=5 // pred_check
        %p378 = pneg %p377
      $region62: #{tpu_custom_call.1} parent=5 // pred_check_branch
        %380 = sbr.rel (%p378) target = $region64
      $region63: #{tpu_custom_call.1} parent=5 // pred_region
        // Predicated region
        $region65: #{tpu_custom_call.1} parent=63 // pred_check
          %p381 = pneg %p42
        $region66: #{tpu_custom_call.1} parent=63 // pred_check_branch
          %383 = sbr.rel (%p381) target = $region68
        $region67: #{tpu_custom_call.1} parent=63 // pred_region
          %p384 = scmp.lt.s32.totalorder %s22, 1
          %s385 = scalar_select %p384, %s22, 1
          %s386 = smul.addr %s385, 16
          %s387 = smul.addr %s386, 8
          %s388 = scalar_lea.vmem %s0, %s387
        $region68: #{tpu_custom_call.1} parent=63 // pred_fallthru
          _
      $region64: #{tpu_custom_call.1} parent=5 // pred_fallthru
        _
      %p389 = scmp.le.s32.totalorder 1, %s22
      %p390 = scmp.lt.s32.totalorder %s22, 3
      %p391 = pnand %p389, %p390
      %p392 = pneg %p391
      // Predicated region
      $region69: #{tpu_custom_call.1} parent=5 // pred_check
        _
      $region70: #{tpu_custom_call.1} parent=5 // pred_check_branch
        %394 = sbr.rel (%p391) target = $region72
      $region71: #{tpu_custom_call.1} parent=5 // pred_region
        %s395 = ssub.s32 %s22, 1
        %p396 = scmp.lt.s32.totalorder %s27, 1
        %s397 = scalar_select %p396, %s27, 1
        %s398 = smul.addr %s397, 16
        %s399 = smul.addr %s398, 8
        %s400 = scalar_lea.vmem %s0, %s399
        %p401 = pneg %p48
        %p402 = pneg %p45
        %p403 = pneg %p69
        %p404 = pneg %p66
        %p405 = pneg %p90
        %p406 = pneg %p87
        %p407 = pneg %p111
        %p408 = pneg %p108
        %p409 = pneg %p132
        %p410 = pneg %p129
        %p411 = pneg %p153
        %p412 = pneg %p150
        %p413 = pneg %p174
        %p414 = pneg %p171
        %p415 = pneg %p195
        %p416 = pneg %p192
        %p417 = pneg %p216
        %p418 = pneg %p213
        %p419 = pneg %p237
        %p420 = pneg %p234
        %p421 = pneg %p258
        %p422 = pneg %p255
        %p423 = pneg %p279
        %p424 = pneg %p276
        %p425 = pneg %p300
        %p426 = pneg %p297
        %p427 = pneg %p326
        %p428 = pneg %p323
        %s429 = sand.u32 %s313, 1
        %s430 = scalar_lea.sflag [#allocation4], %s429
        %s431 = sand.u32 %s313, 1
        %s432 = smul.addr %s431, 64
        %s433 = scalar_lea.vmem [#allocation3], %s432
        %p434 = scmp.lt.s32.totalorder %s27, 1
        %s435 = scalar_select %p434, %s27, 1
        %s436 = smul.addr %s435, 16
        %s437 = smul.addr %s436, 8
        %s438 = scalar_lea.vmem %s0, %s437
        %v440 = vld [vmem:[%s438] sm:$0xff]
        %v441 = vld [vmem:[%s438 + $0x8] sm:$0xff]
        %v442 = vld [vmem:[%s438 + $0x10] sm:$0xff]
        %v443 = vld [vmem:[%s438 + $0x18] sm:$0xff]
        %v444 = vld [vmem:[%s438 + $0x20] sm:$0xff]
        %v445 = vld [vmem:[%s438 + $0x28] sm:$0xff]
        %v446 = vld [vmem:[%s438 + $0x30] sm:$0xff]
        %v447 = vld [vmem:[%s438 + $0x38] sm:$0xff]
        %v448 = vld [vmem:[%s438 + $0x40] sm:$0xff]
        %v449 = vld [vmem:[%s438 + $0x48] sm:$0xff]
        %v450 = vld [vmem:[%s438 + $0x50] sm:$0xff]
        %v451 = vld [vmem:[%s438 + $0x58] sm:$0xff]
        %v452 = vld [vmem:[%s438 + $0x60] sm:$0xff]
        %v453 = vld [vmem:[%s438 + $0x68] sm:$0xff]
        %v454 = vld [vmem:[%s438 + $0x70] sm:$0xff]
        %v455 = vld [vmem:[%s438 + $0x78] sm:$0xff]
        %v456 = vld [vmem:[%s5] sm:$0xff]
        %v457 = vld [vmem:[%s5 + $0x8] sm:$0xff]
        %v458 = vld [vmem:[%s5 + $0x10] sm:$0xff]
        %v459 = vld [vmem:[%s5 + $0x18] sm:$0xff]
        %v460 = vld [vmem:[%s5 + $0x20] sm:$0xff]
        %v461 = vld [vmem:[%s5 + $0x28] sm:$0xff]
        %v462 = vld [vmem:[%s5 + $0x30] sm:$0xff]
        %v463 = vld [vmem:[%s5 + $0x38] sm:$0xff]
        %v464 = vld [vmem:[%s6] sm:$0xff]
        %v465 = vld [vmem:[%s6 + $0x8] sm:$0xff]
        %v466 = vld [vmem:[%s6 + $0x10] sm:$0xff]
        %v467 = vld [vmem:[%s6 + $0x18] sm:$0xff]
        %v468 = vld [vmem:[%s6 + $0x20] sm:$0xff]
        %v469 = vld [vmem:[%s6 + $0x28] sm:$0xff]
        %v470 = vld [vmem:[%s6 + $0x30] sm:$0xff]
        %v471 = vld [vmem:[%s6 + $0x38] sm:$0xff]
        %v472 = vadd.f32 %v440, %v442
        %v473 = vadd.f32 %v472, %v444
        %v474 = vadd.f32 %v473, %v446
        %v475 = vadd.f32 %v474, %v448
        %v476 = vadd.f32 %v475, %v450
        %v477 = vadd.f32 %v476, %v452
        %v478 = vadd.f32 %v477, %v454
        %v479 = vrot.slane %v478, 4
        %v480 = vadd.f32 %v478, %v479
        %v481 = vrot.slane %v480, 2
        %v482 = vadd.f32 %v480, %v481
        %v483 = vrot.slane %v482, 1
        %v484 = vadd.f32 %v482, %v483
        %v485 = vadd.f32 %v441, %v443
        %v486 = vadd.f32 %v485, %v445
        %v487 = vadd.f32 %v486, %v447
        %v488 = vadd.f32 %v487, %v449
        %v489 = vadd.f32 %v488, %v451
        %v490 = vadd.f32 %v489, %v453
        %v491 = vadd.f32 %v490, %v455
        %v492 = vrot.slane %v491, 4
        %v493 = vadd.f32 %v491, %v492
        %v494 = vrot.slane %v493, 2
        %v495 = vadd.f32 %v493, %v494
        %v496 = vrot.slane %v495, 1
        %v497 = vadd.f32 %v495, %v496
        %v498 = vrcp.pop 64.0
        %v499 = vmul.f32 %v484, %v498
        %v500 = vmul.f32 %v497, %v498
        %v501 = vsub.f32 %v440, %v499
        %v502 = vsub.f32 %v441, %v500
        %v503 = vsub.f32 %v442, %v499
        %v504 = vsub.f32 %v443, %v500
        %v505 = vsub.f32 %v444, %v499
        %v506 = vsub.f32 %v445, %v500
        %v507 = vsub.f32 %v446, %v499
        %v508 = vsub.f32 %v447, %v500
        %v509 = vsub.f32 %v448, %v499
        %v510 = vsub.f32 %v449, %v500
        %v511 = vsub.f32 %v450, %v499
        %v512 = vsub.f32 %v451, %v500
        %v513 = vsub.f32 %v452, %v499
        %v514 = vsub.f32 %v453, %v500
        %v515 = vsub.f32 %v454, %v499
        %v516 = vsub.f32 %v455, %v500
        %v517 = vmul.f32 %v501, %v501
        %v518 = vmul.f32 %v502, %v502
        %v519 = vmul.f32 %v503, %v503
        %v520 = vmul.f32 %v504, %v504
        %v521 = vmul.f32 %v505, %v505
        %v522 = vmul.f32 %v506, %v506
        %v523 = vmul.f32 %v507, %v507
        %v524 = vmul.f32 %v508, %v508
        %v525 = vmul.f32 %v509, %v509
        %v526 = vmul.f32 %v510, %v510
        %v527 = vmul.f32 %v511, %v511
        %v528 = vmul.f32 %v512, %v512
        %v529 = vmul.f32 %v513, %v513
        %v530 = vmul.f32 %v514, %v514
        %v531 = vmul.f32 %v515, %v515
        %v532 = vmul.f32 %v516, %v516
        %v533 = vadd.f32 %v517, %v519
        %v534 = vadd.f32 %v533, %v521
        %v535 = vadd.f32 %v534, %v523
        %v536 = vadd.f32 %v535, %v525
        %v537 = vadd.f32 %v536, %v527
        %v538 = vadd.f32 %v537, %v529
        %v539 = vadd.f32 %v538, %v531
        %v540 = vrot.slane %v539, 4
        %v541 = vadd.f32 %v539, %v540
        %v542 = vrot.slane %v541, 2
        %v543 = vadd.f32 %v541, %v542
        %v544 = vrot.slane %v543, 1
        %v545 = vadd.f32 %v543, %v544
        %v546 = vadd.f32 %v518, %v520
        %v547 = vadd.f32 %v546, %v522
        %v548 = vadd.f32 %v547, %v524
        %v549 = vadd.f32 %v548, %v526
        %v550 = vadd.f32 %v549, %v528
        %v551 = vadd.f32 %v550, %v530
        %v552 = vadd.f32 %v551, %v532
        %v553 = vrot.slane %v552, 4
        %v554 = vadd.f32 %v552, %v553
        %v555 = vrot.slane %v554, 2
        %v556 = vadd.f32 %v554, %v555
        %v557 = vrot.slane %v556, 1
        %v558 = vadd.f32 %v556, %v557
        %v559 = vmul.f32 %v545, %v498
        %v560 = vmul.f32 %v558, %v498
        %v561 = vadd.f32 %v559, 1e-06
        %v562 = vadd.f32 %v560, 1e-06
        %v563 = vrsqrt.pop %v561
        %v564 = vrsqrt.pop %v562
        %v565 = vmul.f32 %v501, %v563
        %v566 = vmul.f32 %v502, %v564
        %v567 = vmul.f32 %v503, %v563
        %v568 = vmul.f32 %v504, %v564
        %v569 = vmul.f32 %v505, %v563
        %v570 = vmul.f32 %v506, %v564
        %v571 = vmul.f32 %v507, %v563
        %v572 = vmul.f32 %v508, %v564
        %v573 = vmul.f32 %v509, %v563
        %v574 = vmul.f32 %v510, %v564
        %v575 = vmul.f32 %v511, %v563
        %v576 = vmul.f32 %v512, %v564
        %v577 = vmul.f32 %v513, %v563
        %v578 = vmul.f32 %v514, %v564
        %v579 = vmul.f32 %v515, %v563
        %v580 = vmul.f32 %v516, %v564
        %582 = vset.pattern.permute.xlu0 0
        %583 = vperm.xlu0 %582, %v456
        %v584 = vpop.permute.xlu0 %583
        %587 = vset.pattern.permute.xlu0 0
        %588 = vperm.xlu0 %587, %v457
        %v589 = vpop.permute.xlu0 %588
        %592 = vset.pattern.permute.xlu0 0
        %593 = vperm.xlu0 %592, %v458
        %v594 = vpop.permute.xlu0 %593
        %597 = vset.pattern.permute.xlu0 0
        %598 = vperm.xlu0 %597, %v459
        %v599 = vpop.permute.xlu0 %598
        %602 = vset.pattern.permute.xlu0 0
        %603 = vperm.xlu0 %602, %v460
        %v604 = vpop.permute.xlu0 %603
        %607 = vset.pattern.permute.xlu0 0
        %608 = vperm.xlu0 %607, %v461
        %v609 = vpop.permute.xlu0 %608
        %612 = vset.pattern.permute.xlu0 0
        %613 = vperm.xlu0 %612, %v462
        %v614 = vpop.permute.xlu0 %613
        %617 = vset.pattern.permute.xlu0 0
        %618 = vperm.xlu0 %617, %v463
        %v619 = vpop.permute.xlu0 %618
        %v621 = vmul.f32 %v565, %v584
        %v622 = vmul.f32 %v566, %v584
        %v623 = vmul.f32 %v567, %v589
        %v624 = vmul.f32 %v568, %v589
        %v625 = vmul.f32 %v569, %v594
        %v626 = vmul.f32 %v570, %v594
        %v627 = vmul.f32 %v571, %v599
        %v628 = vmul.f32 %v572, %v599
        %v629 = vmul.f32 %v573, %v604
        %v630 = vmul.f32 %v574, %v604
        %v631 = vmul.f32 %v575, %v609
        %v632 = vmul.f32 %v576, %v609
        %v633 = vmul.f32 %v577, %v614
        %v634 = vmul.f32 %v578, %v614
        %v635 = vmul.f32 %v579, %v619
        %v636 = vmul.f32 %v580, %v619
        %638 = vset.pattern.permute.xlu0 0
        %639 = vperm.xlu0 %638, %v464
        %v640 = vpop.permute.xlu0 %639
        %643 = vset.pattern.permute.xlu0 0
        %644 = vperm.xlu0 %643, %v465
        %v645 = vpop.permute.xlu0 %644
        %648 = vset.pattern.permute.xlu0 0
        %649 = vperm.xlu0 %648, %v466
        %v650 = vpop.permute.xlu0 %649
        %653 = vset.pattern.permute.xlu0 0
        %654 = vperm.xlu0 %653, %v467
        %v655 = vpop.permute.xlu0 %654
        %658 = vset.pattern.permute.xlu0 0
        %659 = vperm.xlu0 %658, %v468
        %v660 = vpop.permute.xlu0 %659
        %663 = vset.pattern.permute.xlu0 0
        %664 = vperm.xlu0 %663, %v469
        %v665 = vpop.permute.xlu0 %664
        %668 = vset.pattern.permute.xlu0 0
        %669 = vperm.xlu0 %668, %v470
        %v670 = vpop.permute.xlu0 %669
        %673 = vset.pattern.permute.xlu0 0
        %674 = vperm.xlu0 %673, %v471
        %v675 = vpop.permute.xlu0 %674
        %v677 = vadd.f32 %v621, %v640
        %v678 = vadd.f32 %v622, %v640
        %v679 = vadd.f32 %v623, %v645
        %v680 = vadd.f32 %v624, %v645
        %v681 = vadd.f32 %v625, %v650
        %v682 = vadd.f32 %v626, %v650
        %v683 = vadd.f32 %v627, %v655
        %v684 = vadd.f32 %v628, %v655
        %v685 = vadd.f32 %v629, %v660
        %v686 = vadd.f32 %v630, %v660
        %v687 = vadd.f32 %v631, %v665
        %v688 = vadd.f32 %v632, %v665
        %v689 = vadd.f32 %v633, %v670
        %v690 = vadd.f32 %v634, %v670
        %v691 = vadd.f32 %v635, %v675
        %v692 = vadd.f32 %v636, %v675
        %v693 = vpack.c.bf16 %v679, %v677
        %v694 = vpack.c.bf16 %v680, %v678
        %v695 = vpack.c.bf16 %v683, %v681
        %v696 = vpack.c.bf16 %v684, %v682
        %v697 = vpack.c.bf16 %v687, %v685
        %v698 = vpack.c.bf16 %v688, %v686
        %v699 = vpack.c.bf16 %v691, %v689
        %v700 = vpack.c.bf16 %v692, %v690
        %v701 = vld [vmem:[%s1] sm:$0xf]
        %v702 = vld [vmem:[%s1 + $0x4] sm:$0xf]
        %v703 = vld [vmem:[%s1 + $0x8] sm:$0xf]
        %v704 = vld [vmem:[%s1 + $0xc] sm:$0xf]
        %v705 = vld [vmem:[%s1 + $0x10] sm:$0xf]
        %v706 = vld [vmem:[%s1 + $0x14] sm:$0xf]
        %v707 = vld [vmem:[%s1 + $0x18] sm:$0xf]
        %v708 = vld [vmem:[%s1 + $0x1c] sm:$0xf]
        %v709 = vld [vmem:[%s1 + $0x20] sm:$0xf]
        %v710 = vld [vmem:[%s1 + $0x24] sm:$0xf]
        %v711 = vld [vmem:[%s1 + $0x28] sm:$0xf]
        %v712 = vld [vmem:[%s1 + $0x2c] sm:$0xf]
        %v713 = vld [vmem:[%s1 + $0x30] sm:$0xf]
        %v714 = vld [vmem:[%s1 + $0x34] sm:$0xf]
        %v715 = vld [vmem:[%s1 + $0x38] sm:$0xf]
        %v716 = vld [vmem:[%s1 + $0x3c] sm:$0xf]
        %v717 = vld [vmem:[%s1 + $0x40] sm:$0xf]
        %v718 = vld [vmem:[%s1 + $0x44] sm:$0xf]
        %v719 = vld [vmem:[%s1 + $0x48] sm:$0xf]
        %v720 = vld [vmem:[%s1 + $0x4c] sm:$0xf]
        %v721 = vld [vmem:[%s1 + $0x50] sm:$0xf]
        %v722 = vld [vmem:[%s1 + $0x54] sm:$0xf]
        %v723 = vld [vmem:[%s1 + $0x58] sm:$0xf]
        %v724 = vld [vmem:[%s1 + $0x5c] sm:$0xf]
        %v725 = vld [vmem:[%s2] sm:$0xff]
        %v726 = vld [vmem:[%s2 + $0x8] sm:$0xff]
        %v727 = vld [vmem:[%s2 + $0x10] sm:$0xff]
        %v728 = vld [vmem:[%s2 + $0x18] sm:$0xff]
        %v729 = vld [vmem:[%s2 + $0x20] sm:$0xff]
        %v730 = vld [vmem:[%s2 + $0x28] sm:$0xff]
        %v731 = vld [vmem:[%s2 + $0x30] sm:$0xff]
        %v732 = vld [vmem:[%s2 + $0x38] sm:$0xff]
        %v733 = vld [vmem:[%s2 + $0x40] sm:$0xff]
        %v734 = vld [vmem:[%s2 + $0x48] sm:$0xff]
        %v735 = vld [vmem:[%s2 + $0x50] sm:$0xff]
        %v736 = vld [vmem:[%s2 + $0x58] sm:$0xff]
        %v737 = vld [vmem:[%s2 + $0x60] sm:$0xff]
        %v738 = vld [vmem:[%s2 + $0x68] sm:$0xff]
        %v739 = vld [vmem:[%s2 + $0x70] sm:$0xff]
        %v740 = vld [vmem:[%s2 + $0x78] sm:$0xff]
        %v741 = vld [vmem:[%s2 + $0x80] sm:$0xff]
        %v742 = vld [vmem:[%s2 + $0x88] sm:$0xff]
        %v743 = vld [vmem:[%s2 + $0x90] sm:$0xff]
        %v744 = vld [vmem:[%s2 + $0x98] sm:$0xff]
        %v745 = vld [vmem:[%s2 + $0xa0] sm:$0xff]
        %v746 = vld [vmem:[%s2 + $0xa8] sm:$0xff]
        %v747 = vld [vmem:[%s2 + $0xb0] sm:$0xff]
        %v748 = vld [vmem:[%s2 + $0xb8] sm:$0xff]
        %750 = vset.pattern.permute.xlu0 0
        %751 = vperm.xlu0 %750, %v725
        %v752 = vpop.permute.xlu0 %751
        %755 = vset.pattern.permute.xlu0 0
        %756 = vperm.xlu0 %755, %v726
        %v757 = vpop.permute.xlu0 %756
        %760 = vset.pattern.permute.xlu0 0
        %761 = vperm.xlu0 %760, %v727
        %v762 = vpop.permute.xlu0 %761
        %765 = vset.pattern.permute.xlu0 0
        %766 = vperm.xlu0 %765, %v728
        %v767 = vpop.permute.xlu0 %766
        %770 = vset.pattern.permute.xlu0 0
        %771 = vperm.xlu0 %770, %v729
        %v772 = vpop.permute.xlu0 %771
        %775 = vset.pattern.permute.xlu0 0
        %776 = vperm.xlu0 %775, %v730
        %v777 = vpop.permute.xlu0 %776
        %780 = vset.pattern.permute.xlu0 0
        %781 = vperm.xlu0 %780, %v731
        %v782 = vpop.permute.xlu0 %781
        %785 = vset.pattern.permute.xlu0 0
        %786 = vperm.xlu0 %785, %v732
        %v787 = vpop.permute.xlu0 %786
        %790 = vset.pattern.permute.xlu0 0
        %791 = vperm.xlu0 %790, %v733
        %v792 = vpop.permute.xlu0 %791
        %795 = vset.pattern.permute.xlu0 0
        %796 = vperm.xlu0 %795, %v734
        %v797 = vpop.permute.xlu0 %796
        %800 = vset.pattern.permute.xlu0 0
        %801 = vperm.xlu0 %800, %v735
        %v802 = vpop.permute.xlu0 %801
        %805 = vset.pattern.permute.xlu0 0
        %806 = vperm.xlu0 %805, %v736
        %v807 = vpop.permute.xlu0 %806
        %810 = vset.pattern.permute.xlu0 0
        %811 = vperm.xlu0 %810, %v737
        %v812 = vpop.permute.xlu0 %811
        %815 = vset.pattern.permute.xlu0 0
        %816 = vperm.xlu0 %815, %v738
        %v817 = vpop.permute.xlu0 %816
        %820 = vset.pattern.permute.xlu0 0
        %821 = vperm.xlu0 %820, %v739
        %v822 = vpop.permute.xlu0 %821
        %825 = vset.pattern.permute.xlu0 0
        %826 = vperm.xlu0 %825, %v740
        %v827 = vpop.permute.xlu0 %826
        %830 = vset.pattern.permute.xlu0 0
        %831 = vperm.xlu0 %830, %v741
        %v832 = vpop.permute.xlu0 %831
        %835 = vset.pattern.permute.xlu0 0
        %836 = vperm.xlu0 %835, %v742
        %v837 = vpop.permute.xlu0 %836
        %840 = vset.pattern.permute.xlu0 0
        %841 = vperm.xlu0 %840, %v743
        %v842 = vpop.permute.xlu0 %841
        %845 = vset.pattern.permute.xlu0 0
        %846 = vperm.xlu0 %845, %v744
        %v847 = vpop.permute.xlu0 %846
        %850 = vset.pattern.permute.xlu0 0
        %851 = vperm.xlu0 %850, %v745
        %v852 = vpop.permute.xlu0 %851
        %855 = vset.pattern.permute.xlu0 0
        %856 = vperm.xlu0 %855, %v746
        %v857 = vpop.permute.xlu0 %856
        %860 = vset.pattern.permute.xlu0 0
        %861 = vperm.xlu0 %860, %v747
        %v862 = vpop.permute.xlu0 %861
        %865 = vset.pattern.permute.xlu0 0
        %866 = vperm.xlu0 %865, %v748
        %v867 = vpop.permute.xlu0 %866
        %v893 = vunpack.c.l.b16 %v701
        %v894 = vunpack.c.l.b16 %v702
        %v895 = vunpack.c.l.b16 %v703
        %v896 = vunpack.c.l.b16 %v704
        %v897 = vunpack.c.l.b16 %v705
        %v898 = vunpack.c.l.b16 %v706
        %v899 = vunpack.c.l.b16 %v707
        %v900 = vunpack.c.l.b16 %v708
        %v901 = vunpack.c.l.b16 %v709
        %v902 = vunpack.c.l.b16 %v710
        %v903 = vunpack.c.l.b16 %v711
        %v904 = vunpack.c.l.b16 %v712
        %v905 = vunpack.c.l.b16 %v713
        %v906 = vunpack.c.l.b16 %v714
        %v907 = vunpack.c.l.b16 %v715
        %v908 = vunpack.c.l.b16 %v716
        %v909 = vunpack.c.l.b16 %v717
        %v910 = vunpack.c.l.b16 %v718
        %v911 = vunpack.c.l.b16 %v719
        %v912 = vunpack.c.l.b16 %v720
        %v913 = vunpack.c.l.b16 %v721
        %v914 = vunpack.c.l.b16 %v722
        %v915 = vunpack.c.l.b16 %v723
        %v916 = vunpack.c.l.b16 %v724
        %v917 = vpack.c.b16 %v894, %v893
        %v918 = vpack.c.b16 %v896, %v895
        %v919 = vpack.c.b16 %v898, %v897
        %v920 = vpack.c.b16 %v900, %v899
        %v921 = vpack.c.b16 %v902, %v901
        %v922 = vpack.c.b16 %v904, %v903
        %v923 = vpack.c.b16 %v906, %v905
        %v924 = vpack.c.b16 %v908, %v907
        %v925 = vpack.c.b16 %v910, %v909
        %v926 = vpack.c.b16 %v912, %v911
        %v927 = vpack.c.b16 %v914, %v913
        %v928 = vpack.c.b16 %v916, %v915
        %vm929 = vcmask 523264
        %v931 = vsel %vm929, %v917, 0
        %v934 = vsel %vm929, %v918, 0
        %v937 = vsel %vm929, %v919, 0
        %v940 = vsel %vm929, %v920, 0
        %v943 = vsel %vm929, %v921, 0
        %v946 = vsel %vm929, %v922, 0
        %v949 = vsel %vm929, %v923, 0
        %v952 = vsel %vm929, %v924, 0
        %v955 = vsel %vm929, %v925, 0
        %v958 = vsel %vm929, %v926, 0
        %v961 = vsel %vm929, %v927, 0
        %v964 = vsel %vm929, %v928, 0
        %966 = vmatprep.subr.bf16.mxu0 0
        %967 = vmatpush1.bf16.msra.mxu0 0
        %968 = vmatprep.subr.bf16.mxu0 0
        %969 = vmatpush1.bf16.msra.mxu0 0
        %970 = vmatprep.subr.bf16.mxu0 0
        %971 = vmatpush1.bf16.msra.mxu0 0
        %972 = vmatprep.subr.bf16.mxu0 0
        %973 = vmatpush1.bf16.msra.mxu0 0
        %974 = vmatprep.subr.bf16.mxu0 %v700
        %975 = vmatpush1.bf16.msra.mxu0 %v699
        %976 = vmatprep.subr.bf16.mxu0 %v698
        %977 = vmatpush1.bf16.msra.mxu0 %v697
        %978 = vmatprep.subr.bf16.mxu0 %v696
        %979 = vmatpush1.bf16.msra.mxu0 %v695
        %980 = vmatprep.subr.bf16.mxu0 %v694
        %981 = vmatpush1.bf16.msra.mxu0 %v693
        %982 = vmatprep.subr.bf16.mxu0 0
        %983 = vmatpush2.bf16.msra.mxu0 0
        %984 = vmatprep.subr.bf16.mxu0 0
        %985 = vmatpush2.bf16.msra.mxu0 0
        %986 = vmatprep.subr.bf16.mxu0 0
        %987 = vmatpush2.bf16.msra.mxu0 0
        %988 = vmatprep.subr.bf16.mxu0 0
        %989 = vmatpush2.bf16.msra.mxu0 0
        %990 = vmatprep.subr.bf16.mxu0 0
        %991 = vmatpush2.bf16.msra.mxu0 0
        %992 = vmatprep.subr.bf16.mxu0 0
        %993 = vmatpush2.bf16.msra.mxu0 0
        %994 = vmatprep.subr.bf16.mxu0 0
        %995 = vmatpush2.bf16.msra.mxu0 0
        %996 = vmatprep.subr.bf16.mxu0 0
        %997 = vmatpush2.bf16.msra.mxu0 0
        %998 = vmatprep.mubr.bf16.mxu0 0
        %999 = vmatmul.mubr.bf16.gmra.mxu0 %v931
        %v1000 = vpop.f32.mrf.mxu0
        %v1001 = vadd.f32 %v752, %v1000
        %v1002 = vpop.f32.mrf.mxu0
        %v1003 = vadd.f32 %v752, %v1002
        %v1004 = vpop.f32.mrf.mxu0
        %v1005 = vadd.f32 %v757, %v1004
        %v1006 = vpop.f32.mrf.mxu0
        %v1007 = vadd.f32 %v757, %v1006
        %1008 = vmatprep.mubr.bf16.mxu0 0
        %1009 = vmatmul.mubr.bf16.gmra.mxu0 %v934
        %v1010 = vpop.f32.mrf.mxu0
        %v1011 = vadd.f32 %v762, %v1010
        %v1012 = vpop.f32.mrf.mxu0
        %v1013 = vadd.f32 %v762, %v1012
        %v1014 = vpop.f32.mrf.mxu0
        %v1015 = vadd.f32 %v767, %v1014
        %v1016 = vpop.f32.mrf.mxu0
        %v1017 = vadd.f32 %v767, %v1016
        %1018 = vmatprep.mubr.bf16.mxu0 0
        %1019 = vmatmul.mubr.bf16.gmra.mxu0 %v937
        %v1020 = vpop.f32.mrf.mxu0
        %v1021 = vadd.f32 %v772, %v1020
        %v1022 = vpop.f32.mrf.mxu0
        %v1023 = vadd.f32 %v772, %v1022
        %v1024 = vpop.f32.mrf.mxu0
        %v1025 = vadd.f32 %v777, %v1024
        %v1026 = vpop.f32.mrf.mxu0
        %v1027 = vadd.f32 %v777, %v1026
        %1028 = vmatprep.mubr.bf16.mxu0 0
        %1029 = vmatmul.mubr.bf16.gmra.mxu0 %v940
        %v1030 = vpop.f32.mrf.mxu0
        %v1031 = vadd.f32 %v782, %v1030
        %v1032 = vpop.f32.mrf.mxu0
        %v1033 = vadd.f32 %v782, %v1032
        %v1034 = vpop.f32.mrf.mxu0
        %v1035 = vadd.f32 %v787, %v1034
        %v1036 = vpop.f32.mrf.mxu0
        %v1037 = vadd.f32 %v787, %v1036
        %1038 = vmatprep.mubr.bf16.mxu0 0
        %1039 = vmatmul.mubr.bf16.gmra.mxu0 %v943
        %v1040 = vpop.f32.mrf.mxu0
        %v1041 = vadd.f32 %v792, %v1040
        %v1042 = vpop.f32.mrf.mxu0
        %v1043 = vadd.f32 %v792, %v1042
        %v1044 = vpop.f32.mrf.mxu0
        %v1045 = vadd.f32 %v797, %v1044
        %v1046 = vpop.f32.mrf.mxu0
        %v1047 = vadd.f32 %v797, %v1046
        %1048 = vmatprep.mubr.bf16.mxu0 0
        %1049 = vmatmul.mubr.bf16.gmra.mxu0 %v946
        %v1050 = vpop.f32.mrf.mxu0
        %v1051 = vadd.f32 %v802, %v1050
        %v1052 = vpop.f32.mrf.mxu0
        %v1053 = vadd.f32 %v802, %v1052
        %v1054 = vpop.f32.mrf.mxu0
        %v1055 = vadd.f32 %v807, %v1054
        %v1056 = vpop.f32.mrf.mxu0
        %v1057 = vadd.f32 %v807, %v1056
        %1058 = vmatprep.mubr.bf16.mxu0 0
        %1059 = vmatmul.mubr.bf16.gmra.mxu0 %v949
        %v1060 = vpop.f32.mrf.mxu0
        %v1061 = vadd.f32 %v812, %v1060
        %v1062 = vpop.f32.mrf.mxu0
        %v1063 = vadd.f32 %v812, %v1062
        %v1064 = vpop.f32.mrf.mxu0
        %v1065 = vadd.f32 %v817, %v1064
        %v1066 = vpop.f32.mrf.mxu0
        %v1067 = vadd.f32 %v817, %v1066
        %1068 = vmatprep.mubr.bf16.mxu0 0
        %1069 = vmatmul.mubr.bf16.gmra.mxu0 %v952
        %v1070 = vpop.f32.mrf.mxu0
        %v1071 = vadd.f32 %v822, %v1070
        %v1072 = vpop.f32.mrf.mxu0
        %v1073 = vadd.f32 %v822, %v1072
        %v1074 = vpop.f32.mrf.mxu0
        %v1075 = vadd.f32 %v827, %v1074
        %v1076 = vpop.f32.mrf.mxu0
        %v1077 = vadd.f32 %v827, %v1076
        %1078 = vmatprep.mubr.bf16.mxu0 0
        %1079 = vmatmul.mubr.bf16.gmra.mxu0 %v955
        %v1080 = vpop.f32.mrf.mxu0
        %v1081 = vadd.f32 %v832, %v1080
        %v1082 = vpop.f32.mrf.mxu0
        %v1083 = vadd.f32 %v832, %v1082
        %v1084 = vpop.f32.mrf.mxu0
        %v1085 = vadd.f32 %v837, %v1084
        %v1086 = vpop.f32.mrf.mxu0
        %v1087 = vadd.f32 %v837, %v1086
        %1088 = vmatprep.mubr.bf16.mxu0 0
        %1089 = vmatmul.mubr.bf16.gmra.mxu0 %v958
        %v1090 = vpop.f32.mrf.mxu0
        %v1091 = vadd.f32 %v842, %v1090
        %v1092 = vpop.f32.mrf.mxu0
        %v1093 = vadd.f32 %v842, %v1092
        %v1094 = vpop.f32.mrf.mxu0
        %v1095 = vadd.f32 %v847, %v1094
        %v1096 = vpop.f32.mrf.mxu0
        %v1097 = vadd.f32 %v847, %v1096
        %1098 = vmatprep.mubr.bf16.mxu0 0
        %1099 = vmatmul.mubr.bf16.gmra.mxu0 %v961
        %v1100 = vpop.f32.mrf.mxu0
        %v1101 = vadd.f32 %v852, %v1100
        %v1102 = vpop.f32.mrf.mxu0
        %v1103 = vadd.f32 %v852, %v1102
        %v1104 = vpop.f32.mrf.mxu0
        %v1105 = vadd.f32 %v857, %v1104
        %v1106 = vpop.f32.mrf.mxu0
        %v1107 = vadd.f32 %v857, %v1106
        %1108 = vmatprep.mubr.bf16.mxu0 0
        %1109 = vmatmul.mubr.bf16.gmra.mxu0 %v964
        %v1110 = vpop.f32.mrf.mxu0
        %v1111 = vadd.f32 %v862, %v1110
        %v1112 = vpop.f32.mrf.mxu0
        %v1113 = vadd.f32 %v862, %v1112
        %v1114 = vpop.f32.mrf.mxu0
        %v1115 = vadd.f32 %v867, %v1114
        %v1116 = vpop.f32.mrf.mxu0
        %v1117 = vadd.f32 %v867, %v1116
        %1118 = vdwg.mxu0
        %v1119 = vpack.c.bf16 %v1005, %v1001
        %v1120 = vpack.c.bf16 %v1007, %v1003
        %v1121 = vpack.c.bf16 %v1015, %v1011
        %v1122 = vpack.c.bf16 %v1017, %v1013
        %v1123 = vpack.c.bf16 %v1025, %v1021
        %v1124 = vpack.c.bf16 %v1027, %v1023
        %v1125 = vpack.c.bf16 %v1035, %v1031
        %v1126 = vpack.c.bf16 %v1037, %v1033
        %v1135 = vunpack.c.l.b16 %v1119
        %v1136 = vunpack.c.l.b16 %v1120
        %v1137 = vunpack.c.h.b16 %v1119
        %v1138 = vunpack.c.h.b16 %v1120
        %v1139 = vunpack.c.l.b16 %v1121
        %v1140 = vunpack.c.l.b16 %v1122
        %v1141 = vunpack.c.h.b16 %v1121
        %v1142 = vunpack.c.h.b16 %v1122
        %v1143 = vunpack.c.l.b16 %v1123
        %v1144 = vunpack.c.l.b16 %v1124
        %v1145 = vunpack.c.h.b16 %v1123
        %v1146 = vunpack.c.h.b16 %v1124
        %v1147 = vunpack.c.l.b16 %v1125
        %v1148 = vunpack.c.l.b16 %v1126
        %v1149 = vunpack.c.h.b16 %v1125
        %v1150 = vunpack.c.h.b16 %v1126
        %v1151 = vpack.c.b16 %v1136, %v1135
        %v1152 = vpack.c.b16 %v1138, %v1137
        %v1153 = vpack.c.b16 %v1140, %v1139
        %v1154 = vpack.c.b16 %v1142, %v1141
        %v1155 = vpack.c.b16 %v1144, %v1143
        %v1156 = vpack.c.b16 %v1146, %v1145
        %v1157 = vpack.c.b16 %v1148, %v1147
        %v1158 = vpack.c.b16 %v1150, %v1149
        %1167 = vst [vmem:[#allocation2] sm:$0xff] %v1151
        %1168 = vst [vmem:[#allocation2 + $0x8] sm:$0xff] %v1152
        %1169 = vst [vmem:[#allocation2 + $0x10] sm:$0xff] %v1153
        %1170 = vst [vmem:[#allocation2 + $0x18] sm:$0xff] %v1154
        %1171 = vst [vmem:[#allocation2 + $0x20] sm:$0xff] %v1155
        %1172 = vst [vmem:[#allocation2 + $0x28] sm:$0xff] %v1156
        %1173 = vst [vmem:[#allocation2 + $0x30] sm:$0xff] %v1157
        %1174 = vst [vmem:[#allocation2 + $0x38] sm:$0xff] %v1158
        %v1175 = vpack.c.bf16 %v1045, %v1041
        %v1176 = vpack.c.bf16 %v1047, %v1043
        %v1177 = vpack.c.bf16 %v1055, %v1051
        %v1178 = vpack.c.bf16 %v1057, %v1053
        %v1179 = vpack.c.bf16 %v1065, %v1061
        %v1180 = vpack.c.bf16 %v1067, %v1063
        %v1181 = vpack.c.bf16 %v1075, %v1071
        %v1182 = vpack.c.bf16 %v1077, %v1073
        %v1183 = vpack.c.bf16 %v1085, %v1081
        %v1184 = vpack.c.bf16 %v1087, %v1083
        %v1185 = vpack.c.bf16 %v1095, %v1091
        %v1186 = vpack.c.bf16 %v1097, %v1093
        %v1187 = vpack.c.bf16 %v1105, %v1101
        %v1188 = vpack.c.bf16 %v1107, %v1103
        %v1189 = vpack.c.bf16 %v1115, %v1111
        %v1190 = vpack.c.bf16 %v1117, %v1113
        loop: start=0, step=1, limit=2
        $region73: #{tpu_custom_call.1} parent=71 // loop_pre_header
          _
        $region74: #{tpu_custom_call.1} parent=71 // loop_header
          %s1192 = sphi 0, %s1196
          %p1193 = scmp.ge.s32.totalorder %s1192, 2
        $region75: #{tpu_custom_call.1} parent=71 // loop_header_branch
          %1195 = sbr.rel (%p1193) target = $region79
        $region76: #{tpu_custom_call.1} parent=71 // loop_body
          %s1197 = smul.u32 %s1192, 128
          %s1198 = sshra.s32 %s1197, 7
          %s1199 = sand.u32 %s1197, 127
          %s1200 = smul.addr %s1198, 4
          %s1201 = scalar_lea.vmem [#allocation2], %s1200
          %v1202 = vld [vmem:[%s1201] sm:$0xf]
          %v1203 = vld [vmem:[%s1201 + $0x8] sm:$0xf]
          %v1204 = vld [vmem:[%s1201 + $0x10] sm:$0xf]
          %v1205 = vld [vmem:[%s1201 + $0x18] sm:$0xf]
          %v1206 = vld [vmem:[%s1201 + $0x20] sm:$0xf]
          %v1207 = vld [vmem:[%s1201 + $0x28] sm:$0xf]
          %v1208 = vld [vmem:[%s1201 + $0x30] sm:$0xf]
          %v1209 = vld [vmem:[%s1201 + $0x38] sm:$0xf]
          %v1218 = vunpack.c.l.b16 %v1202
          %v1219 = vunpack.c.l.b16 %v1203
          %v1220 = vunpack.c.l.b16 %v1204
          %v1221 = vunpack.c.l.b16 %v1205
          %v1222 = vunpack.c.l.b16 %v1206
          %v1223 = vunpack.c.l.b16 %v1207
          %v1224 = vunpack.c.l.b16 %v1208
          %v1225 = vunpack.c.l.b16 %v1209
          %v1226 = vpack.c.b16 %v1219, %v1218
          %v1227 = vpack.c.b16 %v1221, %v1220
          %v1228 = vpack.c.b16 %v1223, %v1222
          %v1229 = vpack.c.b16 %v1225, %v1224
          %1234 = vxpose.xlu0.c.b16.start [1/8] %v1226, 128
          %1235 = vxpose.xlu0.c.b16.cont [2/8] 0, 128
          %1236 = vxpose.xlu0.c.b16.cont [3/8] 0, 128
          %1237 = vxpose.xlu0.c.b16.cont [4/8] 0, 128
          %1238 = vxpose.xlu0.c.b16.cont [5/8] 0, 128
          %1239 = vxpose.xlu0.c.b16.cont [6/8] 0, 128
          %1240 = vxpose.xlu0.c.b16.cont [7/8] 0, 128
          %1241 = vxpose.xlu0.c.b16.end [8/8] 0, 128
          %v1242 = vpop.trf.xlu0
          %v1243 = vpop.trf.xlu0
          %v1244 = vpop.trf.xlu0
          %v1245 = vpop.trf.xlu0
          %v1246 = vpop.trf.xlu0
          %v1247 = vpop.trf.xlu0
          %v1248 = vpop.trf.xlu0
          %v1249 = vpop.trf.xlu0
          %1250 = vxpose.xlu0.c.b16.start [1/8] %v1227, 128
          %1251 = vxpose.xlu0.c.b16.cont [2/8] 0, 128
          %1252 = vxpose.xlu0.c.b16.cont [3/8] 0, 128
          %1253 = vxpose.xlu0.c.b16.cont [4/8] 0, 128
          %1254 = vxpose.xlu0.c.b16.cont [5/8] 0, 128
          %1255 = vxpose.xlu0.c.b16.cont [6/8] 0, 128
          %1256 = vxpose.xlu0.c.b16.cont [7/8] 0, 128
          %1257 = vxpose.xlu0.c.b16.end [8/8] 0, 128
          %v1258 = vpop.trf.xlu0
          %v1259 = vpop.trf.xlu0
          %v1260 = vpop.trf.xlu0
          %v1261 = vpop.trf.xlu0
          %v1262 = vpop.trf.xlu0
          %v1263 = vpop.trf.xlu0
          %v1264 = vpop.trf.xlu0
          %v1265 = vpop.trf.xlu0
          %1266 = vxpose.xlu0.c.b16.start [1/8] %v1228, 128
          %1267 = vxpose.xlu0.c.b16.cont [2/8] 0, 128
          %1268 = vxpose.xlu0.c.b16.cont [3/8] 0, 128
          %1269 = vxpose.xlu0.c.b16.cont [4/8] 0, 128
          %1270 = vxpose.xlu0.c.b16.cont [5/8] 0, 128
          %1271 = vxpose.xlu0.c.b16.cont [6/8] 0, 128
          %1272 = vxpose.xlu0.c.b16.cont [7/8] 0, 128
          %1273 = vxpose.xlu0.c.b16.end [8/8] 0, 128
          %v1274 = vpop.trf.xlu0
          %v1275 = vpop.trf.xlu0
          %v1276 = vpop.trf.xlu0
          %v1277 = vpop.trf.xlu0
          %v1278 = vpop.trf.xlu0
          %v1279 = vpop.trf.xlu0
          %v1280 = vpop.trf.xlu0
          %v1281 = vpop.trf.xlu0
          %1282 = vxpose.xlu0.c.b16.start [1/8] %v1229, 128
          %1283 = vxpose.xlu0.c.b16.cont [2/8] 0, 128
          %1284 = vxpose.xlu0.c.b16.cont [3/8] 0, 128
          %1285 = vxpose.xlu0.c.b16.cont [4/8] 0, 128
          %1286 = vxpose.xlu0.c.b16.cont [5/8] 0, 128
          %1287 = vxpose.xlu0.c.b16.cont [6/8] 0, 128
          %1288 = vxpose.xlu0.c.b16.cont [7/8] 0, 128
          %1289 = vxpose.xlu0.c.b16.end [8/8] 0, 128
          %v1290 = vpop.trf.xlu0
          %v1291 = vpop.trf.xlu0
          %v1292 = vpop.trf.xlu0
          %v1293 = vpop.trf.xlu0
          %v1294 = vpop.trf.xlu0
          %v1295 = vpop.trf.xlu0
          %v1296 = vpop.trf.xlu0
          %v1297 = vpop.trf.xlu0
          %vm1298 = vcmask 130048
          %v1300 = vsel %vm1298, %v1242, 0
          %v1303 = vsel %vm1298, %v1243, 0
          %v1306 = vsel %vm1298, %v1244, 0
          %v1309 = vsel %vm1298, %v1245, 0
          %v1312 = vsel %vm1298, %v1246, 0
          %v1315 = vsel %vm1298, %v1247, 0
          %v1318 = vsel %vm1298, %v1248, 0
          %v1321 = vsel %vm1298, %v1249, 0
          %1323 = vmatprep.subr.bf16.mxu0 0
          %1324 = vmatpush1.bf16.msra.mxu0 0
          %1325 = vmatprep.subr.bf16.mxu0 0
          %1326 = vmatpush1.bf16.msra.mxu0 0
          %1327 = vmatprep.subr.bf16.mxu0 0
          %1328 = vmatpush1.bf16.msra.mxu0 0
          %1329 = vmatprep.subr.bf16.mxu0 0
          %1330 = vmatpush1.bf16.msra.mxu0 0
          %1331 = vmatprep.subr.bf16.mxu0 0
          %1332 = vmatpush1.bf16.msra.mxu0 0
          %1333 = vmatprep.subr.bf16.mxu0 0
          %1334 = vmatpush1.bf16.msra.mxu0 0
          %1335 = vmatprep.subr.bf16.mxu0 0
          %1336 = vmatpush1.bf16.msra.mxu0 0
          %1337 = vmatprep.subr.bf16.mxu0 %v1176
          %1338 = vmatpush1.bf16.msra.mxu0 %v1175
          %1339 = vmatprep.subr.bf16.mxu0 0
          %1340 = vmatpush2.bf16.msra.mxu0 0
          %1341 = vmatprep.subr.bf16.mxu0 0
          %1342 = vmatpush2.bf16.msra.mxu0 0
          %1343 = vmatprep.subr.bf16.mxu0 0
          %1344 = vmatpush2.bf16.msra.mxu0 0
          %1345 = vmatprep.subr.bf16.mxu0 0
          %1346 = vmatpush2.bf16.msra.mxu0 0
          %1347 = vmatprep.subr.bf16.mxu0 0
          %1348 = vmatpush2.bf16.msra.mxu0 0
          %1349 = vmatprep.subr.bf16.mxu0 0
          %1350 = vmatpush2.bf16.msra.mxu0 0
          %1351 = vmatprep.subr.bf16.mxu0 0
          %1352 = vmatpush2.bf16.msra.mxu0 0
          %1353 = vmatprep.subr.bf16.mxu0 0
          %1354 = vmatpush2.bf16.msra.mxu0 0
          %1355 = vmatprep.mubr.bf16.mxu0 0
          %1356 = vmatmul.mubr.bf16.gmra.mxu0 %v1300
          %v1357 = vpop.f32.mrf.mxu0
          %v1358 = vadd.f32 0.0, %v1357
          %v1359 = vpop.f32.mrf.mxu0
          %v1360 = vadd.f32 0.0, %v1359
          %v1361 = vpop.f32.mrf.mxu0
          %v1362 = vadd.f32 0.0, %v1361
          %v1363 = vpop.f32.mrf.mxu0
          %v1364 = vadd.f32 0.0, %v1363
          %1365 = vmatprep.mubr.bf16.mxu0 0
          %1366 = vmatmul.mubr.bf16.gmra.mxu0 %v1303
          %v1367 = vpop.f32.mrf.mxu0
          %v1368 = vadd.f32 0.0, %v1367
          %v1369 = vpop.f32.mrf.mxu0
          %v1370 = vadd.f32 0.0, %v1369
          %v1371 = vpop.f32.mrf.mxu0
          %v1372 = vadd.f32 0.0, %v1371
          %v1373 = vpop.f32.mrf.mxu0
          %v1374 = vadd.f32 0.0, %v1373
          %1375 = vmatprep.mubr.bf16.mxu0 0
          %1376 = vmatmul.mubr.bf16.gmra.mxu0 %v1306
          %v1377 = vpop.f32.mrf.mxu0
          %v1378 = vadd.f32 0.0, %v1377
          %v1379 = vpop.f32.mrf.mxu0
          %v1380 = vadd.f32 0.0, %v1379
          %v1381 = vpop.f32.mrf.mxu0
          %v1382 = vadd.f32 0.0, %v1381
          %v1383 = vpop.f32.mrf.mxu0
          %v1384 = vadd.f32 0.0, %v1383
          %1385 = vmatprep.mubr.bf16.mxu0 0
          %1386 = vmatmul.mubr.bf16.gmra.mxu0 %v1309
          %v1387 = vpop.f32.mrf.mxu0
          %v1388 = vadd.f32 0.0, %v1387
          %v1389 = vpop.f32.mrf.mxu0
          %v1390 = vadd.f32 0.0, %v1389
          %v1391 = vpop.f32.mrf.mxu0
          %v1392 = vadd.f32 0.0, %v1391
          %v1393 = vpop.f32.mrf.mxu0
          %v1394 = vadd.f32 0.0, %v1393
          %1395 = vmatprep.mubr.bf16.mxu0 0
          %1396 = vmatmul.mubr.bf16.gmra.mxu0 %v1312
          %v1397 = vpop.f32.mrf.mxu0
          %v1398 = vadd.f32 0.0, %v1397
          %v1399 = vpop.f32.mrf.mxu0
          %v1400 = vadd.f32 0.0, %v1399
          %v1401 = vpop.f32.mrf.mxu0
          %v1402 = vadd.f32 0.0, %v1401
          %v1403 = vpop.f32.mrf.mxu0
          %v1404 = vadd.f32 0.0, %v1403
          %1405 = vmatprep.mubr.bf16.mxu0 0
          %1406 = vmatmul.mubr.bf16.gmra.mxu0 %v1315
          %v1407 = vpop.f32.mrf.mxu0
          %v1408 = vadd.f32 0.0, %v1407
          %v1409 = vpop.f32.mrf.mxu0
          %v1410 = vadd.f32 0.0, %v1409
          %v1411 = vpop.f32.mrf.mxu0
          %v1412 = vadd.f32 0.0, %v1411
          %v1413 = vpop.f32.mrf.mxu0
          %v1414 = vadd.f32 0.0, %v1413
          %1415 = vmatprep.mubr.bf16.mxu0 0
          %1416 = vmatmul.mubr.bf16.gmra.mxu0 %v1318
          %v1417 = vpop.f32.mrf.mxu0
          %v1418 = vadd.f32 0.0, %v1417
          %v1419 = vpop.f32.mrf.mxu0
          %v1420 = vadd.f32 0.0, %v1419
          %v1421 = vpop.f32.mrf.mxu0
          %v1422 = vadd.f32 0.0, %v1421
          %v1423 = vpop.f32.mrf.mxu0
          %v1424 = vadd.f32 0.0, %v1423
          %1425 = vmatprep.mubr.bf16.mxu0 0
          %1426 = vmatmul.mubr.bf16.gmra.mxu0 %v1321
          %v1427 = vpop.f32.mrf.mxu0
          %v1428 = vadd.f32 0.0, %v1427
          %v1429 = vpop.f32.mrf.mxu0
          %v1430 = vadd.f32 0.0, %v1429
          %v1431 = vpop.f32.mrf.mxu0
          %v1432 = vadd.f32 0.0, %v1431
          %v1433 = vpop.f32.mrf.mxu0
          %v1434 = vadd.f32 0.0, %v1433
          %1435 = vdwg.mxu0
          %v1437 = vsel %vm1298, %v1258, 0
          %v1440 = vsel %vm1298, %v1259, 0
          %v1443 = vsel %vm1298, %v1260, 0
          %v1446 = vsel %vm1298, %v1261, 0
          %v1449 = vsel %vm1298, %v1262, 0
          %v1452 = vsel %vm1298, %v1263, 0
          %v1455 = vsel %vm1298, %v1264, 0
          %v1458 = vsel %vm1298, %v1265, 0
          %1460 = vmatprep.subr.bf16.mxu0 0
          %1461 = vmatpush1.bf16.msra.mxu0 0
          %1462 = vmatprep.subr.bf16.mxu0 0
          %1463 = vmatpush1.bf16.msra.mxu0 0
          %1464 = vmatprep.subr.bf16.mxu0 0
          %1465 = vmatpush1.bf16.msra.mxu0 0
          %1466 = vmatprep.subr.bf16.mxu0 0
          %1467 = vmatpush1.bf16.msra.mxu0 0
          %1468 = vmatprep.subr.bf16.mxu0 0
          %1469 = vmatpush1.bf16.msra.mxu0 0
          %1470 = vmatprep.subr.bf16.mxu0 0
          %1471 = vmatpush1.bf16.msra.mxu0 0
          %1472 = vmatprep.subr.bf16.mxu0 0
          %1473 = vmatpush1.bf16.msra.mxu0 0
          %1474 = vmatprep.subr.bf16.mxu0 %v1178
          %1475 = vmatpush1.bf16.msra.mxu0 %v1177
          %1476 = vmatprep.subr.bf16.mxu0 0
          %1477 = vmatpush2.bf16.msra.mxu0 0
          %1478 = vmatprep.subr.bf16.mxu0 0
          %1479 = vmatpush2.bf16.msra.mxu0 0
          %1480 = vmatprep.subr.bf16.mxu0 0
          %1481 = vmatpush2.bf16.msra.mxu0 0
          %1482 = vmatprep.subr.bf16.mxu0 0
          %1483 = vmatpush2.bf16.msra.mxu0 0
          %1484 = vmatprep.subr.bf16.mxu0 0
          %1485 = vmatpush2.bf16.msra.mxu0 0
          %1486 = vmatprep.subr.bf16.mxu0 0
          %1487 = vmatpush2.bf16.msra.mxu0 0
          %1488 = vmatprep.subr.bf16.mxu0 0
          %1489 = vmatpush2.bf16.msra.mxu0 0
          %1490 = vmatprep.subr.bf16.mxu0 0
          %1491 = vmatpush2.bf16.msra.mxu0 0
          %1492 = vmatprep.mubr.bf16.mxu0 0
          %1493 = vmatmul.mubr.bf16.gmra.mxu0 %v1437
          %v1494 = vpop.f32.mrf.mxu0
          %v1495 = vadd.f32 0.0, %v1494
          %v1496 = vpop.f32.mrf.mxu0
          %v1497 = vadd.f32 0.0, %v1496
          %v1498 = vpop.f32.mrf.mxu0
          %v1499 = vadd.f32 0.0, %v1498
          %v1500 = vpop.f32.mrf.mxu0
          %v1501 = vadd.f32 0.0, %v1500
          %1502 = vmatprep.mubr.bf16.mxu0 0
          %1503 = vmatmul.mubr.bf16.gmra.mxu0 %v1440
          %v1504 = vpop.f32.mrf.mxu0
          %v1505 = vadd.f32 0.0, %v1504
          %v1506 = vpop.f32.mrf.mxu0
          %v1507 = vadd.f32 0.0, %v1506
          %v1508 = vpop.f32.mrf.mxu0
          %v1509 = vadd.f32 0.0, %v1508
          %v1510 = vpop.f32.mrf.mxu0
          %v1511 = vadd.f32 0.0, %v1510
          %1512 = vmatprep.mubr.bf16.mxu0 0
          %1513 = vmatmul.mubr.bf16.gmra.mxu0 %v1443
          %v1514 = vpop.f32.mrf.mxu0
          %v1515 = vadd.f32 0.0, %v1514
          %v1516 = vpop.f32.mrf.mxu0
          %v1517 = vadd.f32 0.0, %v1516
          %v1518 = vpop.f32.mrf.mxu0
          %v1519 = vadd.f32 0.0, %v1518
          %v1520 = vpop.f32.mrf.mxu0
          %v1521 = vadd.f32 0.0, %v1520
          %1522 = vmatprep.mubr.bf16.mxu0 0
          %1523 = vmatmul.mubr.bf16.gmra.mxu0 %v1446
          %v1524 = vpop.f32.mrf.mxu0
          %v1525 = vadd.f32 0.0, %v1524
          %v1526 = vpop.f32.mrf.mxu0
          %v1527 = vadd.f32 0.0, %v1526
          %v1528 = vpop.f32.mrf.mxu0
          %v1529 = vadd.f32 0.0, %v1528
          %v1530 = vpop.f32.mrf.mxu0
          %v1531 = vadd.f32 0.0, %v1530
          %1532 = vmatprep.mubr.bf16.mxu0 0
          %1533 = vmatmul.mubr.bf16.gmra.mxu0 %v1449
          %v1534 = vpop.f32.mrf.mxu0
          %v1535 = vadd.f32 0.0, %v1534
          %v1536 = vpop.f32.mrf.mxu0
          %v1537 = vadd.f32 0.0, %v1536
          %v1538 = vpop.f32.mrf.mxu0
          %v1539 = vadd.f32 0.0, %v1538
          %v1540 = vpop.f32.mrf.mxu0
          %v1541 = vadd.f32 0.0, %v1540
          %1542 = vmatprep.mubr.bf16.mxu0 0
          %1543 = vmatmul.mubr.bf16.gmra.mxu0 %v1452
          %v1544 = vpop.f32.mrf.mxu0
          %v1545 = vadd.f32 0.0, %v1544
          %v1546 = vpop.f32.mrf.mxu0
          %v1547 = vadd.f32 0.0, %v1546
          %v1548 = vpop.f32.mrf.mxu0
          %v1549 = vadd.f32 0.0, %v1548
          %v1550 = vpop.f32.mrf.mxu0
          %v1551 = vadd.f32 0.0, %v1550
          %1552 = vmatprep.mubr.bf16.mxu0 0
          %1553 = vmatmul.mubr.bf16.gmra.mxu0 %v1455
          %v1554 = vpop.f32.mrf.mxu0
          %v1555 = vadd.f32 0.0, %v1554
          %v1556 = vpop.f32.mrf.mxu0
          %v1557 = vadd.f32 0.0, %v1556
          %v1558 = vpop.f32.mrf.mxu0
          %v1559 = vadd.f32 0.0, %v1558
          %v1560 = vpop.f32.mrf.mxu0
          %v1561 = vadd.f32 0.0, %v1560
          %1562 = vmatprep.mubr.bf16.mxu0 0
          %1563 = vmatmul.mubr.bf16.gmra.mxu0 %v1458
          %v1564 = vpop.f32.mrf.mxu0
          %v1565 = vadd.f32 0.0, %v1564
          %v1566 = vpop.f32.mrf.mxu0
          %v1567 = vadd.f32 0.0, %v1566
          %v1568 = vpop.f32.mrf.mxu0
          %v1569 = vadd.f32 0.0, %v1568
          %v1570 = vpop.f32.mrf.mxu0
          %v1571 = vadd.f32 0.0, %v1570
          %1572 = vdwg.mxu0
          %v1574 = vsel %vm1298, %v1274, 0
          %v1577 = vsel %vm1298, %v1275, 0
          %v1580 = vsel %vm1298, %v1276, 0
          %v1583 = vsel %vm1298, %v1277, 0
          %v1586 = vsel %vm1298, %v1278, 0
          %v1589 = vsel %vm1298, %v1279, 0
          %v1592 = vsel %vm1298, %v1280, 0
          %v1595 = vsel %vm1298, %v1281, 0
          %1597 = vmatprep.subr.bf16.mxu0 0
          %1598 = vmatpush1.bf16.msra.mxu0 0
          %1599 = vmatprep.subr.bf16.mxu0 0
          %1600 = vmatpush1.bf16.msra.mxu0 0
          %1601 = vmatprep.subr.bf16.mxu0 0
          %1602 = vmatpush1.bf16.msra.mxu0 0
          %1603 = vmatprep.subr.bf16.mxu0 0
          %1604 = vmatpush1.bf16.msra.mxu0 0
          %1605 = vmatprep.subr.bf16.mxu0 0
          %1606 = vmatpush1.bf16.msra.mxu0 0
          %1607 = vmatprep.subr.bf16.mxu0 0
          %1608 = vmatpush1.bf16.msra.mxu0 0
          %1609 = vmatprep.subr.bf16.mxu0 0
          %1610 = vmatpush1.bf16.msra.mxu0 0
          %1611 = vmatprep.subr.bf16.mxu0 %v1180
          %1612 = vmatpush1.bf16.msra.mxu0 %v1179
          %1613 = vmatprep.subr.bf16.mxu0 0
          %1614 = vmatpush2.bf16.msra.mxu0 0
          %1615 = vmatprep.subr.bf16.mxu0 0
          %1616 = vmatpush2.bf16.msra.mxu0 0
          %1617 = vmatprep.subr.bf16.mxu0 0
          %1618 = vmatpush2.bf16.msra.mxu0 0
          %1619 = vmatprep.subr.bf16.mxu0 0
          %1620 = vmatpush2.bf16.msra.mxu0 0
          %1621 = vmatprep.subr.bf16.mxu0 0
          %1622 = vmatpush2.bf16.msra.mxu0 0
          %1623 = vmatprep.subr.bf16.mxu0 0
          %1624 = vmatpush2.bf16.msra.mxu0 0
          %1625 = vmatprep.subr.bf16.mxu0 0
          %1626 = vmatpush2.bf16.msra.mxu0 0
          %1627 = vmatprep.subr.bf16.mxu0 0
          %1628 = vmatpush2.bf16.msra.mxu0 0
          %1629 = vmatprep.mubr.bf16.mxu0 0
          %1630 = vmatmul.mubr.bf16.gmra.mxu0 %v1574
          %v1631 = vpop.f32.mrf.mxu0
          %v1632 = vadd.f32 0.0, %v1631
          %v1633 = vpop.f32.mrf.mxu0
          %v1634 = vadd.f32 0.0, %v1633
          %v1635 = vpop.f32.mrf.mxu0
          %v1636 = vadd.f32 0.0, %v1635
          %v1637 = vpop.f32.mrf.mxu0
          %v1638 = vadd.f32 0.0, %v1637
          %1639 = vmatprep.mubr.bf16.mxu0 0
          %1640 = vmatmul.mubr.bf16.gmra.mxu0 %v1577
          %v1641 = vpop.f32.mrf.mxu0
          %v1642 = vadd.f32 0.0, %v1641
          %v1643 = vpop.f32.mrf.mxu0
          %v1644 = vadd.f32 0.0, %v1643
          %v1645 = vpop.f32.mrf.mxu0
          %v1646 = vadd.f32 0.0, %v1645
          %v1647 = vpop.f32.mrf.mxu0
          %v1648 = vadd.f32 0.0, %v1647
          %1649 = vmatprep.mubr.bf16.mxu0 0
          %1650 = vmatmul.mubr.bf16.gmra.mxu0 %v1580
          %v1651 = vpop.f32.mrf.mxu0
          %v1652 = vadd.f32 0.0, %v1651
          %v1653 = vpop.f32.mrf.mxu0
          %v1654 = vadd.f32 0.0, %v1653
          %v1655 = vpop.f32.mrf.mxu0
          %v1656 = vadd.f32 0.0, %v1655
          %v1657 = vpop.f32.mrf.mxu0
          %v1658 = vadd.f32 0.0, %v1657
          %1659 = vmatprep.mubr.bf16.mxu0 0
          %1660 = vmatmul.mubr.bf16.gmra.mxu0 %v1583
          %v1661 = vpop.f32.mrf.mxu0
          %v1662 = vadd.f32 0.0, %v1661
          %v1663 = vpop.f32.mrf.mxu0
          %v1664 = vadd.f32 0.0, %v1663
          %v1665 = vpop.f32.mrf.mxu0
          %v1666 = vadd.f32 0.0, %v1665
          %v1667 = vpop.f32.mrf.mxu0
          %v1668 = vadd.f32 0.0, %v1667
          %1669 = vmatprep.mubr.bf16.mxu0 0
          %1670 = vmatmul.mubr.bf16.gmra.mxu0 %v1586
          %v1671 = vpop.f32.mrf.mxu0
          %v1672 = vadd.f32 0.0, %v1671
          %v1673 = vpop.f32.mrf.mxu0
          %v1674 = vadd.f32 0.0, %v1673
          %v1675 = vpop.f32.mrf.mxu0
          %v1676 = vadd.f32 0.0, %v1675
          %v1677 = vpop.f32.mrf.mxu0
          %v1678 = vadd.f32 0.0, %v1677
          %1679 = vmatprep.mubr.bf16.mxu0 0
          %1680 = vmatmul.mubr.bf16.gmra.mxu0 %v1589
          %v1681 = vpop.f32.mrf.mxu0
          %v1682 = vadd.f32 0.0, %v1681
          %v1683 = vpop.f32.mrf.mxu0
          %v1684 = vadd.f32 0.0, %v1683
          %v1685 = vpop.f32.mrf.mxu0
          %v1686 = vadd.f32 0.0, %v1685
          %v1687 = vpop.f32.mrf.mxu0
          %v1688 = vadd.f32 0.0, %v1687
          %1689 = vmatprep.mubr.bf16.mxu0 0
          %1690 = vmatmul.mubr.bf16.gmra.mxu0 %v1592
          %v1691 = vpop.f32.mrf.mxu0
          %v1692 = vadd.f32 0.0, %v1691
          %v1693 = vpop.f32.mrf.mxu0
          %v1694 = vadd.f32 0.0, %v1693
          %v1695 = vpop.f32.mrf.mxu0
          %v1696 = vadd.f32 0.0, %v1695
          %v1697 = vpop.f32.mrf.mxu0
          %v1698 = vadd.f32 0.0, %v1697
          %1699 = vmatprep.mubr.bf16.mxu0 0
          %1700 = vmatmul.mubr.bf16.gmra.mxu0 %v1595
          %v1701 = vpop.f32.mrf.mxu0
          %v1702 = vadd.f32 0.0, %v1701
          %v1703 = vpop.f32.mrf.mxu0
          %v1704 = vadd.f32 0.0, %v1703
          %v1705 = vpop.f32.mrf.mxu0
          %v1706 = vadd.f32 0.0, %v1705
          %v1707 = vpop.f32.mrf.mxu0
          %v1708 = vadd.f32 0.0, %v1707
          %1709 = vdwg.mxu0
          %v1711 = vsel %vm1298, %v1290, 0
          %v1714 = vsel %vm1298, %v1291, 0
          %v1717 = vsel %vm1298, %v1292, 0
          %v1720 = vsel %vm1298, %v1293, 0
          %v1723 = vsel %vm1298, %v1294, 0
          %v1726 = vsel %vm1298, %v1295, 0
          %v1729 = vsel %vm1298, %v1296, 0
          %v1732 = vsel %vm1298, %v1297, 0
          %1734 = vmatprep.subr.bf16.mxu0 0
          %1735 = vmatpush1.bf16.msra.mxu0 0
          %1736 = vmatprep.subr.bf16.mxu0 0
          %1737 = vmatpush1.bf16.msra.mxu0 0
          %1738 = vmatprep.subr.bf16.mxu0 0
          %1739 = vmatpush1.bf16.msra.mxu0 0
          %1740 = vmatprep.subr.bf16.mxu0 0
          %1741 = vmatpush1.bf16.msra.mxu0 0
          %1742 = vmatprep.subr.bf16.mxu0 0
          %1743 = vmatpush1.bf16.msra.mxu0 0
          %1744 = vmatprep.subr.bf16.mxu0 0
          %1745 = vmatpush1.bf16.msra.mxu0 0
          %1746 = vmatprep.subr.bf16.mxu0 0
          %1747 = vmatpush1.bf16.msra.mxu0 0
          %1748 = vmatprep.subr.bf16.mxu0 %v1182
          %1749 = vmatpush1.bf16.msra.mxu0 %v1181
          %1750 = vmatprep.subr.bf16.mxu0 0
          %1751 = vmatpush2.bf16.msra.mxu0 0
          %1752 = vmatprep.subr.bf16.mxu0 0
          %1753 = vmatpush2.bf16.msra.mxu0 0
          %1754 = vmatprep.subr.bf16.mxu0 0
          %1755 = vmatpush2.bf16.msra.mxu0 0
          %1756 = vmatprep.subr.bf16.mxu0 0
          %1757 = vmatpush2.bf16.msra.mxu0 0
          %1758 = vmatprep.subr.bf16.mxu0 0
          %1759 = vmatpush2.bf16.msra.mxu0 0
          %1760 = vmatprep.subr.bf16.mxu0 0
          %1761 = vmatpush2.bf16.msra.mxu0 0
          %1762 = vmatprep.subr.bf16.mxu0 0
          %1763 = vmatpush2.bf16.msra.mxu0 0
          %1764 = vmatprep.subr.bf16.mxu0 0
          %1765 = vmatpush2.bf16.msra.mxu0 0
          %1766 = vmatprep.mubr.bf16.mxu0 0
          %1767 = vmatmul.mubr.bf16.gmra.mxu0 %v1711
          %v1768 = vpop.f32.mrf.mxu0
          %v1769 = vadd.f32 0.0, %v1768
          %v1770 = vpop.f32.mrf.mxu0
          %v1771 = vadd.f32 0.0, %v1770
          %v1772 = vpop.f32.mrf.mxu0
          %v1773 = vadd.f32 0.0, %v1772
          %v1774 = vpop.f32.mrf.mxu0
          %v1775 = vadd.f32 0.0, %v1774
          %1776 = vmatprep.mubr.bf16.mxu0 0
          %1777 = vmatmul.mubr.bf16.gmra.mxu0 %v1714
          %v1778 = vpop.f32.mrf.mxu0
          %v1779 = vadd.f32 0.0, %v1778
          %v1780 = vpop.f32.mrf.mxu0
          %v1781 = vadd.f32 0.0, %v1780
          %v1782 = vpop.f32.mrf.mxu0
          %v1783 = vadd.f32 0.0, %v1782
          %v1784 = vpop.f32.mrf.mxu0
          %v1785 = vadd.f32 0.0, %v1784
          %1786 = vmatprep.mubr.bf16.mxu0 0
          %1787 = vmatmul.mubr.bf16.gmra.mxu0 %v1717
          %v1788 = vpop.f32.mrf.mxu0
          %v1789 = vadd.f32 0.0, %v1788
          %v1790 = vpop.f32.mrf.mxu0
          %v1791 = vadd.f32 0.0, %v1790
          %v1792 = vpop.f32.mrf.mxu0
          %v1793 = vadd.f32 0.0, %v1792
          %v1794 = vpop.f32.mrf.mxu0
          %v1795 = vadd.f32 0.0, %v1794
          %1796 = vmatprep.mubr.bf16.mxu0 0
          %1797 = vmatmul.mubr.bf16.gmra.mxu0 %v1720
          %v1798 = vpop.f32.mrf.mxu0
          %v1799 = vadd.f32 0.0, %v1798
          %v1800 = vpop.f32.mrf.mxu0
          %v1801 = vadd.f32 0.0, %v1800
          %v1802 = vpop.f32.mrf.mxu0
          %v1803 = vadd.f32 0.0, %v1802
          %v1804 = vpop.f32.mrf.mxu0
          %v1805 = vadd.f32 0.0, %v1804
          %1806 = vmatprep.mubr.bf16.mxu0 0
          %1807 = vmatmul.mubr.bf16.gmra.mxu0 %v1723
          %v1808 = vpop.f32.mrf.mxu0
          %v1809 = vadd.f32 0.0, %v1808
          %v1810 = vpop.f32.mrf.mxu0
          %v1811 = vadd.f32 0.0, %v1810
          %v1812 = vpop.f32.mrf.mxu0
          %v1813 = vadd.f32 0.0, %v1812
          %v1814 = vpop.f32.mrf.mxu0
          %v1815 = vadd.f32 0.0, %v1814
          %1816 = vmatprep.mubr.bf16.mxu0 0
          %1817 = vmatmul.mubr.bf16.gmra.mxu0 %v1726
          %v1818 = vpop.f32.mrf.mxu0
          %v1819 = vadd.f32 0.0, %v1818
          %v1820 = vpop.f32.mrf.mxu0
          %v1821 = vadd.f32 0.0, %v1820
          %v1822 = vpop.f32.mrf.mxu0
          %v1823 = vadd.f32 0.0, %v1822
          %v1824 = vpop.f32.mrf.mxu0
          %v1825 = vadd.f32 0.0, %v1824
          %1826 = vmatprep.mubr.bf16.mxu0 0
          %1827 = vmatmul.mubr.bf16.gmra.mxu0 %v1729
          %v1828 = vpop.f32.mrf.mxu0
          %v1829 = vadd.f32 0.0, %v1828
          %v1830 = vpop.f32.mrf.mxu0
          %v1831 = vadd.f32 0.0, %v1830
          %v1832 = vpop.f32.mrf.mxu0
          %v1833 = vadd.f32 0.0, %v1832
          %v1834 = vpop.f32.mrf.mxu0
          %v1835 = vadd.f32 0.0, %v1834
          %1836 = vmatprep.mubr.bf16.mxu0 0
          %1837 = vmatmul.mubr.bf16.gmra.mxu0 %v1732
          %v1838 = vpop.f32.mrf.mxu0
          %v1839 = vadd.f32 0.0, %v1838
          %v1840 = vpop.f32.mrf.mxu0
          %v1841 = vadd.f32 0.0, %v1840
          %v1842 = vpop.f32.mrf.mxu0
          %v1843 = vadd.f32 0.0, %v1842
          %v1844 = vpop.f32.mrf.mxu0
          %v1845 = vadd.f32 0.0, %v1844
          %1846 = vdwg.mxu0
          %v1847 = vmax.f32 %v1358, %v1360
          %1848 = vmax.xlane.f32.xlu0 %v1847
          %v1849 = vpop.xlane.xlu0 %1848
          %v1850 = vmax.f32 %v1362, %v1364
          %1851 = vmax.xlane.f32.xlu0 %v1850
          %v1852 = vpop.xlane.xlu0 %1851
          %v1853 = vmax.f32 %v1368, %v1370
          %1854 = vmax.xlane.f32.xlu0 %v1853
          %v1855 = vpop.xlane.xlu0 %1854
          %v1856 = vmax.f32 %v1372, %v1374
          %1857 = vmax.xlane.f32.xlu0 %v1856
          %v1858 = vpop.xlane.xlu0 %1857
          %v1859 = vmax.f32 %v1378, %v1380
          %1860 = vmax.xlane.f32.xlu0 %v1859
          %v1861 = vpop.xlane.xlu0 %1860
          %v1862 = vmax.f32 %v1382, %v1384
          %1863 = vmax.xlane.f32.xlu0 %v1862
          %v1864 = vpop.xlane.xlu0 %1863
          %v1865 = vmax.f32 %v1388, %v1390
          %1866 = vmax.xlane.f32.xlu0 %v1865
          %v1867 = vpop.xlane.xlu0 %1866
          %v1868 = vmax.f32 %v1392, %v1394
          %1869 = vmax.xlane.f32.xlu0 %v1868
          %v1870 = vpop.xlane.xlu0 %1869
          %v1871 = vmax.f32 %v1398, %v1400
          %1872 = vmax.xlane.f32.xlu0 %v1871
          %v1873 = vpop.xlane.xlu0 %1872
          %v1874 = vmax.f32 %v1402, %v1404
          %1875 = vmax.xlane.f32.xlu0 %v1874
          %v1876 = vpop.xlane.xlu0 %1875
          %v1877 = vmax.f32 %v1408, %v1410
          %1878 = vmax.xlane.f32.xlu0 %v1877
          %v1879 = vpop.xlane.xlu0 %1878
          %v1880 = vmax.f32 %v1412, %v1414
          %1881 = vmax.xlane.f32.xlu0 %v1880
          %v1882 = vpop.xlane.xlu0 %1881
          %v1883 = vmax.f32 %v1418, %v1420
          %1884 = vmax.xlane.f32.xlu0 %v1883
          %v1885 = vpop.xlane.xlu0 %1884
          %v1886 = vmax.f32 %v1422, %v1424
          %1887 = vmax.xlane.f32.xlu0 %v1886
          %v1888 = vpop.xlane.xlu0 %1887
          %v1889 = vmax.f32 %v1428, %v1430
          %1890 = vmax.xlane.f32.xlu0 %v1889
          %v1891 = vpop.xlane.xlu0 %1890
          %v1892 = vmax.f32 %v1432, %v1434
          %1893 = vmax.xlane.f32.xlu0 %v1892
          %v1894 = vpop.xlane.xlu0 %1893
          %v1895 = vmax.f32 %v1495, %v1497
          %1896 = vmax.xlane.f32.xlu0 %v1895
          %v1897 = vpop.xlane.xlu0 %1896
          %v1898 = vmax.f32 %v1499, %v1501
          %1899 = vmax.xlane.f32.xlu0 %v1898
          %v1900 = vpop.xlane.xlu0 %1899
          %v1901 = vmax.f32 %v1505, %v1507
          %1902 = vmax.xlane.f32.xlu0 %v1901
          %v1903 = vpop.xlane.xlu0 %1902
          %v1904 = vmax.f32 %v1509, %v1511
          %1905 = vmax.xlane.f32.xlu0 %v1904
          %v1906 = vpop.xlane.xlu0 %1905
          %v1907 = vmax.f32 %v1515, %v1517
          %1908 = vmax.xlane.f32.xlu0 %v1907
          %v1909 = vpop.xlane.xlu0 %1908
          %v1910 = vmax.f32 %v1519, %v1521
          %1911 = vmax.xlane.f32.xlu0 %v1910
          %v1912 = vpop.xlane.xlu0 %1911
          %v1913 = vmax.f32 %v1525, %v1527
          %1914 = vmax.xlane.f32.xlu0 %v1913
          %v1915 = vpop.xlane.xlu0 %1914
          %v1916 = vmax.f32 %v1529, %v1531
          %1917 = vmax.xlane.f32.xlu0 %v1916
          %v1918 = vpop.xlane.xlu0 %1917
          %v1919 = vmax.f32 %v1535, %v1537
          %1920 = vmax.xlane.f32.xlu0 %v1919
          %v1921 = vpop.xlane.xlu0 %1920
          %v1922 = vmax.f32 %v1539, %v1541
          %1923 = vmax.xlane.f32.xlu0 %v1922
          %v1924 = vpop.xlane.xlu0 %1923
          %v1925 = vmax.f32 %v1545, %v1547
          %1926 = vmax.xlane.f32.xlu0 %v1925
          %v1927 = vpop.xlane.xlu0 %1926
          %v1928 = vmax.f32 %v1549, %v1551
          %1929 = vmax.xlane.f32.xlu0 %v1928
          %v1930 = vpop.xlane.xlu0 %1929
          %v1931 = vmax.f32 %v1555, %v1557
          %1932 = vmax.xlane.f32.xlu0 %v1931
          %v1933 = vpop.xlane.xlu0 %1932
          %v1934 = vmax.f32 %v1559, %v1561
          %1935 = vmax.xlane.f32.xlu0 %v1934
          %v1936 = vpop.xlane.xlu0 %1935
          %v1937 = vmax.f32 %v1565, %v1567
          %1938 = vmax.xlane.f32.xlu0 %v1937
          %v1939 = vpop.xlane.xlu0 %1938
          %v1940 = vmax.f32 %v1569, %v1571
          %1941 = vmax.xlane.f32.xlu0 %v1940
          %v1942 = vpop.xlane.xlu0 %1941
          %v1943 = vmax.f32 %v1632, %v1634
          %1944 = vmax.xlane.f32.xlu0 %v1943
          %v1945 = vpop.xlane.xlu0 %1944
          %v1946 = vmax.f32 %v1636, %v1638
          %1947 = vmax.xlane.f32.xlu0 %v1946
          %v1948 = vpop.xlane.xlu0 %1947
          %v1949 = vmax.f32 %v1642, %v1644
          %1950 = vmax.xlane.f32.xlu0 %v1949
          %v1951 = vpop.xlane.xlu0 %1950
          %v1952 = vmax.f32 %v1646, %v1648
          %1953 = vmax.xlane.f32.xlu0 %v1952
          %v1954 = vpop.xlane.xlu0 %1953
          %v1955 = vmax.f32 %v1652, %v1654
          %1956 = vmax.xlane.f32.xlu0 %v1955
          %v1957 = vpop.xlane.xlu0 %1956
          %v1958 = vmax.f32 %v1656, %v1658
          %1959 = vmax.xlane.f32.xlu0 %v1958
          %v1960 = vpop.xlane.xlu0 %1959
          %v1961 = vmax.f32 %v1662, %v1664
          %1962 = vmax.xlane.f32.xlu0 %v1961
          %v1963 = vpop.xlane.xlu0 %1962
          %v1964 = vmax.f32 %v1666, %v1668
          %1965 = vmax.xlane.f32.xlu0 %v1964
          %v1966 = vpop.xlane.xlu0 %1965
          %v1967 = vmax.f32 %v1672, %v1674
          %1968 = vmax.xlane.f32.xlu0 %v1967
          %v1969 = vpop.xlane.xlu0 %1968
          %v1970 = vmax.f32 %v1676, %v1678
          %1971 = vmax.xlane.f32.xlu0 %v1970
          %v1972 = vpop.xlane.xlu0 %1971
          %v1973 = vmax.f32 %v1682, %v1684
          %1974 = vmax.xlane.f32.xlu0 %v1973
          %v1975 = vpop.xlane.xlu0 %1974
          %v1976 = vmax.f32 %v1686, %v1688
          %1977 = vmax.xlane.f32.xlu0 %v1976
          %v1978 = vpop.xlane.xlu0 %1977
          %v1979 = vmax.f32 %v1692, %v1694
          %1980 = vmax.xlane.f32.xlu0 %v1979
          %v1981 = vpop.xlane.xlu0 %1980
          %v1982 = vmax.f32 %v1696, %v1698
          %1983 = vmax.xlane.f32.xlu0 %v1982
          %v1984 = vpop.xlane.xlu0 %1983
          %v1985 = vmax.f32 %v1702, %v1704
          %1986 = vmax.xlane.f32.xlu0 %v1985
          %v1987 = vpop.xlane.xlu0 %1986
          %v1988 = vmax.f32 %v1706, %v1708
          %1989 = vmax.xlane.f32.xlu0 %v1988
          %v1990 = vpop.xlane.xlu0 %1989
          %v1991 = vmax.f32 %v1769, %v1771
          %1992 = vmax.xlane.f32.xlu0 %v1991
          %v1993 = vpop.xlane.xlu0 %1992
          %v1994 = vmax.f32 %v1773, %v1775
          %1995 = vmax.xlane.f32.xlu0 %v1994
          %v1996 = vpop.xlane.xlu0 %1995
          %v1997 = vmax.f32 %v1779, %v1781
          %1998 = vmax.xlane.f32.xlu0 %v1997
          %v1999 = vpop.xlane.xlu0 %1998
          %v2000 = vmax.f32 %v1783, %v1785
          %2001 = vmax.xlane.f32.xlu0 %v2000
          %v2002 = vpop.xlane.xlu0 %2001
          %v2003 = vmax.f32 %v1789, %v1791
          %2004 = vmax.xlane.f32.xlu0 %v2003
          %v2005 = vpop.xlane.xlu0 %2004
          %v2006 = vmax.f32 %v1793, %v1795
          %2007 = vmax.xlane.f32.xlu0 %v2006
          %v2008 = vpop.xlane.xlu0 %2007
          %v2009 = vmax.f32 %v1799, %v1801
          %2010 = vmax.xlane.f32.xlu0 %v2009
          %v2011 = vpop.xlane.xlu0 %2010
          %v2012 = vmax.f32 %v1803, %v1805
          %2013 = vmax.xlane.f32.xlu0 %v2012
          %v2014 = vpop.xlane.xlu0 %2013
          %v2015 = vmax.f32 %v1809, %v1811
          %2016 = vmax.xlane.f32.xlu0 %v2015
          %v2017 = vpop.xlane.xlu0 %2016
          %v2018 = vmax.f32 %v1813, %v1815
          %2019 = vmax.xlane.f32.xlu0 %v2018
          %v2020 = vpop.xlane.xlu0 %2019
          %v2021 = vmax.f32 %v1819, %v1821
          %2022 = vmax.xlane.f32.xlu0 %v2021
          %v2023 = vpop.xlane.xlu0 %2022
          %v2024 = vmax.f32 %v1823, %v1825
          %2025 = vmax.xlane.f32.xlu0 %v2024
          %v2026 = vpop.xlane.xlu0 %2025
          %v2027 = vmax.f32 %v1829, %v1831
          %2028 = vmax.xlane.f32.xlu0 %v2027
          %v2029 = vpop.xlane.xlu0 %2028
          %v2030 = vmax.f32 %v1833, %v1835
          %2031 = vmax.xlane.f32.xlu0 %v2030
          %v2032 = vpop.xlane.xlu0 %2031
          %v2033 = vmax.f32 %v1839, %v1841
          %2034 = vmax.xlane.f32.xlu0 %v2033
          %v2035 = vpop.xlane.xlu0 %2034
          %v2036 = vmax.f32 %v1843, %v1845
          %2037 = vmax.xlane.f32.xlu0 %v2036
          %v2038 = vpop.xlane.xlu0 %2037
          %v2039 = vsub.f32 %v1358, %v1849
          %v2040 = vsub.f32 %v1360, %v1849
          %v2041 = vsub.f32 %v1362, %v1852
          %v2042 = vsub.f32 %v1364, %v1852
          %v2043 = vsub.f32 %v1368, %v1855
          %v2044 = vsub.f32 %v1370, %v1855
          %v2045 = vsub.f32 %v1372, %v1858
          %v2046 = vsub.f32 %v1374, %v1858
          %v2047 = vsub.f32 %v1378, %v1861
          %v2048 = vsub.f32 %v1380, %v1861
          %v2049 = vsub.f32 %v1382, %v1864
          %v2050 = vsub.f32 %v1384, %v1864
          %v2051 = vsub.f32 %v1388, %v1867
          %v2052 = vsub.f32 %v1390, %v1867
          %v2053 = vsub.f32 %v1392, %v1870
          %v2054 = vsub.f32 %v1394, %v1870
          %v2055 = vsub.f32 %v1398, %v1873
          %v2056 = vsub.f32 %v1400, %v1873
          %v2057 = vsub.f32 %v1402, %v1876
          %v2058 = vsub.f32 %v1404, %v1876
          %v2059 = vsub.f32 %v1408, %v1879
          %v2060 = vsub.f32 %v1410, %v1879
          %v2061 = vsub.f32 %v1412, %v1882
          %v2062 = vsub.f32 %v1414, %v1882
          %v2063 = vsub.f32 %v1418, %v1885
          %v2064 = vsub.f32 %v1420, %v1885
          %v2065 = vsub.f32 %v1422, %v1888
          %v2066 = vsub.f32 %v1424, %v1888
          %v2067 = vsub.f32 %v1428, %v1891
          %v2068 = vsub.f32 %v1430, %v1891
          %v2069 = vsub.f32 %v1432, %v1894
          %v2070 = vsub.f32 %v1434, %v1894
          %v2071 = vsub.f32 %v1495, %v1897
          %v2072 = vsub.f32 %v1497, %v1897
          %v2073 = vsub.f32 %v1499, %v1900
          %v2074 = vsub.f32 %v1501, %v1900
          %v2075 = vsub.f32 %v1505, %v1903
          %v2076 = vsub.f32 %v1507, %v1903
          %v2077 = vsub.f32 %v1509, %v1906
          %v2078 = vsub.f32 %v1511, %v1906
          %v2079 = vsub.f32 %v1515, %v1909
          %v2080 = vsub.f32 %v1517, %v1909
          %v2081 = vsub.f32 %v1519, %v1912
          %v2082 = vsub.f32 %v1521, %v1912
          %v2083 = vsub.f32 %v1525, %v1915
          %v2084 = vsub.f32 %v1527, %v1915
          %v2085 = vsub.f32 %v1529, %v1918
          %v2086 = vsub.f32 %v1531, %v1918
          %v2087 = vsub.f32 %v1535, %v1921
          %v2088 = vsub.f32 %v1537, %v1921
          %v2089 = vsub.f32 %v1539, %v1924
          %v2090 = vsub.f32 %v1541, %v1924
          %v2091 = vsub.f32 %v1545, %v1927
          %v2092 = vsub.f32 %v1547, %v1927
          %v2093 = vsub.f32 %v1549, %v1930
          %v2094 = vsub.f32 %v1551, %v1930
          %v2095 = vsub.f32 %v1555, %v1933
          %v2096 = vsub.f32 %v1557, %v1933
          %v2097 = vsub.f32 %v1559, %v1936
          %v2098 = vsub.f32 %v1561, %v1936
          %v2099 = vsub.f32 %v1565, %v1939
          %v2100 = vsub.f32 %v1567, %v1939
          %v2101 = vsub.f32 %v1569, %v1942
          %v2102 = vsub.f32 %v1571, %v1942
          %v2103 = vsub.f32 %v1632, %v1945
          %v2104 = vsub.f32 %v1634, %v1945
          %v2105 = vsub.f32 %v1636, %v1948
          %v2106 = vsub.f32 %v1638, %v1948
          %v2107 = vsub.f32 %v1642, %v1951
          %v2108 = vsub.f32 %v1644, %v1951
          %v2109 = vsub.f32 %v1646, %v1954
          %v2110 = vsub.f32 %v1648, %v1954
          %v2111 = vsub.f32 %v1652, %v1957
          %v2112 = vsub.f32 %v1654, %v1957
          %v2113 = vsub.f32 %v1656, %v1960
          %v2114 = vsub.f32 %v1658, %v1960
          %v2115 = vsub.f32 %v1662, %v1963
          %v2116 = vsub.f32 %v1664, %v1963
          %v2117 = vsub.f32 %v1666, %v1966
          %v2118 = vsub.f32 %v1668, %v1966
          %v2119 = vsub.f32 %v1672, %v1969
          %v2120 = vsub.f32 %v1674, %v1969
          %v2121 = vsub.f32 %v1676, %v1972
          %v2122 = vsub.f32 %v1678, %v1972
          %v2123 = vsub.f32 %v1682, %v1975
          %v2124 = vsub.f32 %v1684, %v1975
          %v2125 = vsub.f32 %v1686, %v1978
          %v2126 = vsub.f32 %v1688, %v1978
          %v2127 = vsub.f32 %v1692, %v1981
          %v2128 = vsub.f32 %v1694, %v1981
          %v2129 = vsub.f32 %v1696, %v1984
          %v2130 = vsub.f32 %v1698, %v1984
          %v2131 = vsub.f32 %v1702, %v1987
          %v2132 = vsub.f32 %v1704, %v1987
          %v2133 = vsub.f32 %v1706, %v1990
          %v2134 = vsub.f32 %v1708, %v1990
          %v2135 = vsub.f32 %v1769, %v1993
          %v2136 = vsub.f32 %v1771, %v1993
          %v2137 = vsub.f32 %v1773, %v1996
          %v2138 = vsub.f32 %v1775, %v1996
          %v2139 = vsub.f32 %v1779, %v1999
          %v2140 = vsub.f32 %v1781, %v1999
          %v2141 = vsub.f32 %v1783, %v2002
          %v2142 = vsub.f32 %v1785, %v2002
          %v2143 = vsub.f32 %v1789, %v2005
          %v2144 = vsub.f32 %v1791, %v2005
          %v2145 = vsub.f32 %v1793, %v2008
          %v2146 = vsub.f32 %v1795, %v2008
          %v2147 = vsub.f32 %v1799, %v2011
          %v2148 = vsub.f32 %v1801, %v2011
          %v2149 = vsub.f32 %v1803, %v2014
          %v2150 = vsub.f32 %v1805, %v2014
          %v2151 = vsub.f32 %v1809, %v2017
          %v2152 = vsub.f32 %v1811, %v2017
          %v2153 = vsub.f32 %v1813, %v2020
          %v2154 = vsub.f32 %v1815, %v2020
          %v2155 = vsub.f32 %v1819, %v2023
          %v2156 = vsub.f32 %v1821, %v2023
          %v2157 = vsub.f32 %v1823, %v2026
          %v2158 = vsub.f32 %v1825, %v2026
          %v2159 = vsub.f32 %v1829, %v2029
          %v2160 = vsub.f32 %v1831, %v2029
          %v2161 = vsub.f32 %v1833, %v2032
          %v2162 = vsub.f32 %v1835, %v2032
          %v2163 = vsub.f32 %v1839, %v2035
          %v2164 = vsub.f32 %v1841, %v2035
          %v2165 = vsub.f32 %v1843, %v2038
          %v2166 = vsub.f32 %v1845, %v2038
          %v2167 = vmul.f32 %v2039, 1.442695
          %v2168 = vpow.pop %v2167
          %v2169 = vmul.f32 %v2040, 1.442695
          %v2170 = vpow.pop %v2169
          %v2171 = vmul.f32 %v2041, 1.442695
          %v2172 = vpow.pop %v2171
          %v2173 = vmul.f32 %v2042, 1.442695
          %v2174 = vpow.pop %v2173
          %v2175 = vmul.f32 %v2043, 1.442695
          %v2176 = vpow.pop %v2175
          %v2177 = vmul.f32 %v2044, 1.442695
          %v2178 = vpow.pop %v2177
          %v2179 = vmul.f32 %v2045, 1.442695
          %v2180 = vpow.pop %v2179
          %v2181 = vmul.f32 %v2046, 1.442695
          %v2182 = vpow.pop %v2181
          %v2183 = vmul.f32 %v2047, 1.442695
          %v2184 = vpow.pop %v2183
          %v2185 = vmul.f32 %v2048, 1.442695
          %v2186 = vpow.pop %v2185
          %v2187 = vmul.f32 %v2049, 1.442695
          %v2188 = vpow.pop %v2187
          %v2189 = vmul.f32 %v2050, 1.442695
          %v2190 = vpow.pop %v2189
          %v2191 = vmul.f32 %v2051, 1.442695
          %v2192 = vpow.pop %v2191
          %v2193 = vmul.f32 %v2052, 1.442695
          %v2194 = vpow.pop %v2193
          %v2195 = vmul.f32 %v2053, 1.442695
          %v2196 = vpow.pop %v2195
          %v2197 = vmul.f32 %v2054, 1.442695
          %v2198 = vpow.pop %v2197
          %v2199 = vmul.f32 %v2055, 1.442695
          %v2200 = vpow.pop %v2199
          %v2201 = vmul.f32 %v2056, 1.442695
          %v2202 = vpow.pop %v2201
          %v2203 = vmul.f32 %v2057, 1.442695
          %v2204 = vpow.pop %v2203
          %v2205 = vmul.f32 %v2058, 1.442695
          %v2206 = vpow.pop %v2205
          %v2207 = vmul.f32 %v2059, 1.442695
          %v2208 = vpow.pop %v2207
          %v2209 = vmul.f32 %v2060, 1.442695
          %v2210 = vpow.pop %v2209
          %v2211 = vmul.f32 %v2061, 1.442695
          %v2212 = vpow.pop %v2211
          %v2213 = vmul.f32 %v2062, 1.442695
          %v2214 = vpow.pop %v2213
          %v2215 = vmul.f32 %v2063, 1.442695
          %v2216 = vpow.pop %v2215
          %v2217 = vmul.f32 %v2064, 1.442695
          %v2218 = vpow.pop %v2217
          %v2219 = vmul.f32 %v2065, 1.442695
          %v2220 = vpow.pop %v2219
          %v2221 = vmul.f32 %v2066, 1.442695
          %v2222 = vpow.pop %v2221
          %v2223 = vmul.f32 %v2067, 1.442695
          %v2224 = vpow.pop %v2223
          %v2225 = vmul.f32 %v2068, 1.442695
          %v2226 = vpow.pop %v2225
          %v2227 = vmul.f32 %v2069, 1.442695
          %v2228 = vpow.pop %v2227
          %v2229 = vmul.f32 %v2070, 1.442695
          %v2230 = vpow.pop %v2229
          %v2231 = vmul.f32 %v2071, 1.442695
          %v2232 = vpow.pop %v2231
          %v2233 = vmul.f32 %v2072, 1.442695
          %v2234 = vpow.pop %v2233
          %v2235 = vmul.f32 %v2073, 1.442695
          %v2236 = vpow.pop %v2235
          %v2237 = vmul.f32 %v2074, 1.442695
          %v2238 = vpow.pop %v2237
          %v2239 = vmul.f32 %v2075, 1.442695
          %v2240 = vpow.pop %v2239
          %v2241 = vmul.f32 %v2076, 1.442695
          %v2242 = vpow.pop %v2241
          %v2243 = vmul.f32 %v2077, 1.442695
          %v2244 = vpow.pop %v2243
          %v2245 = vmul.f32 %v2078, 1.442695
          %v2246 = vpow.pop %v2245
          %v2247 = vmul.f32 %v2079, 1.442695
          %v2248 = vpow.pop %v2247
          %v2249 = vmul.f32 %v2080, 1.442695
          %v2250 = vpow.pop %v2249
          %v2251 = vmul.f32 %v2081, 1.442695
          %v2252 = vpow.pop %v2251
          %v2253 = vmul.f32 %v2082, 1.442695
          %v2254 = vpow.pop %v2253
          %v2255 = vmul.f32 %v2083, 1.442695
          %v2256 = vpow.pop %v2255
          %v2257 = vmul.f32 %v2084, 1.442695
          %v2258 = vpow.pop %v2257
          %v2259 = vmul.f32 %v2085, 1.442695
          %v2260 = vpow.pop %v2259
          %v2261 = vmul.f32 %v2086, 1.442695
          %v2262 = vpow.pop %v2261
          %v2263 = vmul.f32 %v2087, 1.442695
          %v2264 = vpow.pop %v2263
          %v2265 = vmul.f32 %v2088, 1.442695
          %v2266 = vpow.pop %v2265
          %v2267 = vmul.f32 %v2089, 1.442695
          %v2268 = vpow.pop %v2267
          %v2269 = vmul.f32 %v2090, 1.442695
          %v2270 = vpow.pop %v2269
          %v2271 = vmul.f32 %v2091, 1.442695
          %v2272 = vpow.pop %v2271
          %v2273 = vmul.f32 %v2092, 1.442695
          %v2274 = vpow.pop %v2273
          %v2275 = vmul.f32 %v2093, 1.442695
          %v2276 = vpow.pop %v2275
          %v2277 = vmul.f32 %v2094, 1.442695
          %v2278 = vpow.pop %v2277
          %v2279 = vmul.f32 %v2095, 1.442695
          %v2280 = vpow.pop %v2279
          %v2281 = vmul.f32 %v2096, 1.442695
          %v2282 = vpow.pop %v2281
          %v2283 = vmul.f32 %v2097, 1.442695
          %v2284 = vpow.pop %v2283
          %v2285 = vmul.f32 %v2098, 1.442695
          %v2286 = vpow.pop %v2285
          %v2287 = vmul.f32 %v2099, 1.442695
          %v2288 = vpow.pop %v2287
          %v2289 = vmul.f32 %v2100, 1.442695
          %v2290 = vpow.pop %v2289
          %v2291 = vmul.f32 %v2101, 1.442695
          %v2292 = vpow.pop %v2291
          %v2293 = vmul.f32 %v2102, 1.442695
          %v2294 = vpow.pop %v2293
          %v2295 = vmul.f32 %v2103, 1.442695
          %v2296 = vpow.pop %v2295
          %v2297 = vmul.f32 %v2104, 1.442695
          %v2298 = vpow.pop %v2297
          %v2299 = vmul.f32 %v2105, 1.442695
          %v2300 = vpow.pop %v2299
          %v2301 = vmul.f32 %v2106, 1.442695
          %v2302 = vpow.pop %v2301
          %v2303 = vmul.f32 %v2107, 1.442695
          %v2304 = vpow.pop %v2303
          %v2305 = vmul.f32 %v2108, 1.442695
          %v2306 = vpow.pop %v2305
          %v2307 = vmul.f32 %v2109, 1.442695
          %v2308 = vpow.pop %v2307
          %v2309 = vmul.f32 %v2110, 1.442695
          %v2310 = vpow.pop %v2309
          %v2311 = vmul.f32 %v2111, 1.442695
          %v2312 = vpow.pop %v2311
          %v2313 = vmul.f32 %v2112, 1.442695
          %v2314 = vpow.pop %v2313
          %v2315 = vmul.f32 %v2113, 1.442695
          %v2316 = vpow.pop %v2315
          %v2317 = vmul.f32 %v2114, 1.442695
          %v2318 = vpow.pop %v2317
          %v2319 = vmul.f32 %v2115, 1.442695
          %v2320 = vpow.pop %v2319
          %v2321 = vmul.f32 %v2116, 1.442695
          %v2322 = vpow.pop %v2321
          %v2323 = vmul.f32 %v2117, 1.442695
          %v2324 = vpow.pop %v2323
          %v2325 = vmul.f32 %v2118, 1.442695
          %v2326 = vpow.pop %v2325
          %v2327 = vmul.f32 %v2119, 1.442695
          %v2328 = vpow.pop %v2327
          %v2329 = vmul.f32 %v2120, 1.442695
          %v2330 = vpow.pop %v2329
          %v2331 = vmul.f32 %v2121, 1.442695
          %v2332 = vpow.pop %v2331
          %v2333 = vmul.f32 %v2122, 1.442695
          %v2334 = vpow.pop %v2333
          %v2335 = vmul.f32 %v2123, 1.442695
          %v2336 = vpow.pop %v2335
          %v2337 = vmul.f32 %v2124, 1.442695
          %v2338 = vpow.pop %v2337
          %v2339 = vmul.f32 %v2125, 1.442695
          %v2340 = vpow.pop %v2339
          %v2341 = vmul.f32 %v2126, 1.442695
          %v2342 = vpow.pop %v2341
          %v2343 = vmul.f32 %v2127, 1.442695
          %v2344 = vpow.pop %v2343
          %v2345 = vmul.f32 %v2128, 1.442695
          %v2346 = vpow.pop %v2345
          %v2347 = vmul.f32 %v2129, 1.442695
          %v2348 = vpow.pop %v2347
          %v2349 = vmul.f32 %v2130, 1.442695
          %v2350 = vpow.pop %v2349
          %v2351 = vmul.f32 %v2131, 1.442695
          %v2352 = vpow.pop %v2351
          %v2353 = vmul.f32 %v2132, 1.442695
          %v2354 = vpow.pop %v2353
          %v2355 = vmul.f32 %v2133, 1.442695
          %v2356 = vpow.pop %v2355
          %v2357 = vmul.f32 %v2134, 1.442695
          %v2358 = vpow.pop %v2357
          %v2359 = vmul.f32 %v2135, 1.442695
          %v2360 = vpow.pop %v2359
          %v2361 = vmul.f32 %v2136, 1.442695
          %v2362 = vpow.pop %v2361
          %v2363 = vmul.f32 %v2137, 1.442695
          %v2364 = vpow.pop %v2363
          %v2365 = vmul.f32 %v2138, 1.442695
          %v2366 = vpow.pop %v2365
          %v2367 = vmul.f32 %v2139, 1.442695
          %v2368 = vpow.pop %v2367
          %v2369 = vmul.f32 %v2140, 1.442695
          %v2370 = vpow.pop %v2369
          %v2371 = vmul.f32 %v2141, 1.442695
          %v2372 = vpow.pop %v2371
          %v2373 = vmul.f32 %v2142, 1.442695
          %v2374 = vpow.pop %v2373
          %v2375 = vmul.f32 %v2143, 1.442695
          %v2376 = vpow.pop %v2375
          %v2377 = vmul.f32 %v2144, 1.442695
          %v2378 = vpow.pop %v2377
          %v2379 = vmul.f32 %v2145, 1.442695
          %v2380 = vpow.pop %v2379
          %v2381 = vmul.f32 %v2146, 1.442695
          %v2382 = vpow.pop %v2381
          %v2383 = vmul.f32 %v2147, 1.442695
          %v2384 = vpow.pop %v2383
          %v2385 = vmul.f32 %v2148, 1.442695
          %v2386 = vpow.pop %v2385
          %v2387 = vmul.f32 %v2149, 1.442695
          %v2388 = vpow.pop %v2387
          %v2389 = vmul.f32 %v2150, 1.442695
          %v2390 = vpow.pop %v2389
          %v2391 = vmul.f32 %v2151, 1.442695
          %v2392 = vpow.pop %v2391
          %v2393 = vmul.f32 %v2152, 1.442695
          %v2394 = vpow.pop %v2393
          %v2395 = vmul.f32 %v2153, 1.442695
          %v2396 = vpow.pop %v2395
          %v2397 = vmul.f32 %v2154, 1.442695
          %v2398 = vpow.pop %v2397
          %v2399 = vmul.f32 %v2155, 1.442695
          %v2400 = vpow.pop %v2399
          %v2401 = vmul.f32 %v2156, 1.442695
          %v2402 = vpow.pop %v2401
          %v2403 = vmul.f32 %v2157, 1.442695
          %v2404 = vpow.pop %v2403
          %v2405 = vmul.f32 %v2158, 1.442695
          %v2406 = vpow.pop %v2405
          %v2407 = vmul.f32 %v2159, 1.442695
          %v2408 = vpow.pop %v2407
          %v2409 = vmul.f32 %v2160, 1.442695
          %v2410 = vpow.pop %v2409
          %v2411 = vmul.f32 %v2161, 1.442695
          %v2412 = vpow.pop %v2411
          %v2413 = vmul.f32 %v2162, 1.442695
          %v2414 = vpow.pop %v2413
          %v2415 = vmul.f32 %v2163, 1.442695
          %v2416 = vpow.pop %v2415
          %v2417 = vmul.f32 %v2164, 1.442695
          %v2418 = vpow.pop %v2417
          %v2419 = vmul.f32 %v2165, 1.442695
          %v2420 = vpow.pop %v2419
          %v2421 = vmul.f32 %v2166, 1.442695
          %v2422 = vpow.pop %v2421
          %v2423 = vadd.f32 %v2168, %v2170
          %2424 = vadd.xlane.f32.xlu0 %v2423
          %v2425 = vpop.xlane.xlu0 %2424
          %v2426 = vadd.f32 %v2172, %v2174
          %2427 = vadd.xlane.f32.xlu0 %v2426
          %v2428 = vpop.xlane.xlu0 %2427
          %v2429 = vadd.f32 %v2176, %v2178
          %2430 = vadd.xlane.f32.xlu0 %v2429
          %v2431 = vpop.xlane.xlu0 %2430
          %v2432 = vadd.f32 %v2180, %v2182
          %2433 = vadd.xlane.f32.xlu0 %v2432
          %v2434 = vpop.xlane.xlu0 %2433
          %v2435 = vadd.f32 %v2184, %v2186
          %2436 = vadd.xlane.f32.xlu0 %v2435
          %v2437 = vpop.xlane.xlu0 %2436
          %v2438 = vadd.f32 %v2188, %v2190
          %2439 = vadd.xlane.f32.xlu0 %v2438
          %v2440 = vpop.xlane.xlu0 %2439
          %v2441 = vadd.f32 %v2192, %v2194
          %2442 = vadd.xlane.f32.xlu0 %v2441
          %v2443 = vpop.xlane.xlu0 %2442
          %v2444 = vadd.f32 %v2196, %v2198
          %2445 = vadd.xlane.f32.xlu0 %v2444
          %v2446 = vpop.xlane.xlu0 %2445
          %v2447 = vadd.f32 %v2200, %v2202
          %2448 = vadd.xlane.f32.xlu0 %v2447
          %v2449 = vpop.xlane.xlu0 %2448
          %v2450 = vadd.f32 %v2204, %v2206
          %2451 = vadd.xlane.f32.xlu0 %v2450
          %v2452 = vpop.xlane.xlu0 %2451
          %v2453 = vadd.f32 %v2208, %v2210
          %2454 = vadd.xlane.f32.xlu0 %v2453
          %v2455 = vpop.xlane.xlu0 %2454
          %v2456 = vadd.f32 %v2212, %v2214
          %2457 = vadd.xlane.f32.xlu0 %v2456
          %v2458 = vpop.xlane.xlu0 %2457
          %v2459 = vadd.f32 %v2216, %v2218
          %2460 = vadd.xlane.f32.xlu0 %v2459
          %v2461 = vpop.xlane.xlu0 %2460
          %v2462 = vadd.f32 %v2220, %v2222
          %2463 = vadd.xlane.f32.xlu0 %v2462
          %v2464 = vpop.xlane.xlu0 %2463
          %v2465 = vadd.f32 %v2224, %v2226
          %2466 = vadd.xlane.f32.xlu0 %v2465
          %v2467 = vpop.xlane.xlu0 %2466
          %v2468 = vadd.f32 %v2228, %v2230
          %2469 = vadd.xlane.f32.xlu0 %v2468
          %v2470 = vpop.xlane.xlu0 %2469
          %v2471 = vadd.f32 %v2232, %v2234
          %2472 = vadd.xlane.f32.xlu0 %v2471
          %v2473 = vpop.xlane.xlu0 %2472
          %v2474 = vadd.f32 %v2236, %v2238
          %2475 = vadd.xlane.f32.xlu0 %v2474
          %v2476 = vpop.xlane.xlu0 %2475
          %v2477 = vadd.f32 %v2240, %v2242
          %2478 = vadd.xlane.f32.xlu0 %v2477
          %v2479 = vpop.xlane.xlu0 %2478
          %v2480 = vadd.f32 %v2244, %v2246
          %2481 = vadd.xlane.f32.xlu0 %v2480
          %v2482 = vpop.xlane.xlu0 %2481
          %v2483 = vadd.f32 %v2248, %v2250
          %2484 = vadd.xlane.f32.xlu0 %v2483
          %v2485 = vpop.xlane.xlu0 %2484
          %v2486 = vadd.f32 %v2252, %v2254
          %2487 = vadd.xlane.f32.xlu0 %v2486
          %v2488 = vpop.xlane.xlu0 %2487
          %v2489 = vadd.f32 %v2256, %v2258
          %2490 = vadd.xlane.f32.xlu0 %v2489
          %v2491 = vpop.xlane.xlu0 %2490
          %v2492 = vadd.f32 %v2260, %v2262
          %2493 = vadd.xlane.f32.xlu0 %v2492
          %v2494 = vpop.xlane.xlu0 %2493
          %v2495 = vadd.f32 %v2264, %v2266
          %2496 = vadd.xlane.f32.xlu0 %v2495
          %v2497 = vpop.xlane.xlu0 %2496
          %v2498 = vadd.f32 %v2268, %v2270
          %2499 = vadd.xlane.f32.xlu0 %v2498
          %v2500 = vpop.xlane.xlu0 %2499
          %v2501 = vadd.f32 %v2272, %v2274
          %2502 = vadd.xlane.f32.xlu0 %v2501
          %v2503 = vpop.xlane.xlu0 %2502
          %v2504 = vadd.f32 %v2276, %v2278
          %2505 = vadd.xlane.f32.xlu0 %v2504
          %v2506 = vpop.xlane.xlu0 %2505
          %v2507 = vadd.f32 %v2280, %v2282
          %2508 = vadd.xlane.f32.xlu0 %v2507
          %v2509 = vpop.xlane.xlu0 %2508
          %v2510 = vadd.f32 %v2284, %v2286
          %2511 = vadd.xlane.f32.xlu0 %v2510
          %v2512 = vpop.xlane.xlu0 %2511
          %v2513 = vadd.f32 %v2288, %v2290
          %2514 = vadd.xlane.f32.xlu0 %v2513
          %v2515 = vpop.xlane.xlu0 %2514
          %v2516 = vadd.f32 %v2292, %v2294
          %2517 = vadd.xlane.f32.xlu0 %v2516
          %v2518 = vpop.xlane.xlu0 %2517
          %v2519 = vadd.f32 %v2296, %v2298
          %2520 = vadd.xlane.f32.xlu0 %v2519
          %v2521 = vpop.xlane.xlu0 %2520
          %v2522 = vadd.f32 %v2300, %v2302
          %2523 = vadd.xlane.f32.xlu0 %v2522
          %v2524 = vpop.xlane.xlu0 %2523
          %v2525 = vadd.f32 %v2304, %v2306
          %2526 = vadd.xlane.f32.xlu0 %v2525
          %v2527 = vpop.xlane.xlu0 %2526
          %v2528 = vadd.f32 %v2308, %v2310
          %2529 = vadd.xlane.f32.xlu0 %v2528
          %v2530 = vpop.xlane.xlu0 %2529
          %v2531 = vadd.f32 %v2312, %v2314
          %2532 = vadd.xlane.f32.xlu0 %v2531
          %v2533 = vpop.xlane.xlu0 %2532
          %v2534 = vadd.f32 %v2316, %v2318
          %2535 = vadd.xlane.f32.xlu0 %v2534
          %v2536 = vpop.xlane.xlu0 %2535
          %v2537 = vadd.f32 %v2320, %v2322
          %2538 = vadd.xlane.f32.xlu0 %v2537
          %v2539 = vpop.xlane.xlu0 %2538
          %v2540 = vadd.f32 %v2324, %v2326
          %2541 = vadd.xlane.f32.xlu0 %v2540
          %v2542 = vpop.xlane.xlu0 %2541
          %v2543 = vadd.f32 %v2328, %v2330
          %2544 = vadd.xlane.f32.xlu0 %v2543
          %v2545 = vpop.xlane.xlu0 %2544
          %v2546 = vadd.f32 %v2332, %v2334
          %2547 = vadd.xlane.f32.xlu0 %v2546
          %v2548 = vpop.xlane.xlu0 %2547
          %v2549 = vadd.f32 %v2336, %v2338
          %2550 = vadd.xlane.f32.xlu0 %v2549
          %v2551 = vpop.xlane.xlu0 %2550
          %v2552 = vadd.f32 %v2340, %v2342
          %2553 = vadd.xlane.f32.xlu0 %v2552
          %v2554 = vpop.xlane.xlu0 %2553
          %v2555 = vadd.f32 %v2344, %v2346
          %2556 = vadd.xlane.f32.xlu0 %v2555
          %v2557 = vpop.xlane.xlu0 %2556
          %v2558 = vadd.f32 %v2348, %v2350
          %2559 = vadd.xlane.f32.xlu0 %v2558
          %v2560 = vpop.xlane.xlu0 %2559
          %v2561 = vadd.f32 %v2352, %v2354
          %2562 = vadd.xlane.f32.xlu0 %v2561
          %v2563 = vpop.xlane.xlu0 %2562
          %v2564 = vadd.f32 %v2356, %v2358
          %2565 = vadd.xlane.f32.xlu0 %v2564
          %v2566 = vpop.xlane.xlu0 %2565
          %v2567 = vadd.f32 %v2360, %v2362
          %2568 = vadd.xlane.f32.xlu0 %v2567
          %v2569 = vpop.xlane.xlu0 %2568
          %v2570 = vadd.f32 %v2364, %v2366
          %2571 = vadd.xlane.f32.xlu0 %v2570
          %v2572 = vpop.xlane.xlu0 %2571
          %v2573 = vadd.f32 %v2368, %v2370
          %2574 = vadd.xlane.f32.xlu0 %v2573
          %v2575 = vpop.xlane.xlu0 %2574
          %v2576 = vadd.f32 %v2372, %v2374
          %2577 = vadd.xlane.f32.xlu0 %v2576
          %v2578 = vpop.xlane.xlu0 %2577
          %v2579 = vadd.f32 %v2376, %v2378
          %2580 = vadd.xlane.f32.xlu0 %v2579
          %v2581 = vpop.xlane.xlu0 %2580
          %v2582 = vadd.f32 %v2380, %v2382
          %2583 = vadd.xlane.f32.xlu0 %v2582
          %v2584 = vpop.xlane.xlu0 %2583
          %v2585 = vadd.f32 %v2384, %v2386
          %2586 = vadd.xlane.f32.xlu0 %v2585
          %v2587 = vpop.xlane.xlu0 %2586
          %v2588 = vadd.f32 %v2388, %v2390
          %2589 = vadd.xlane.f32.xlu0 %v2588
          %v2590 = vpop.xlane.xlu0 %2589
          %v2591 = vadd.f32 %v2392, %v2394
          %2592 = vadd.xlane.f32.xlu0 %v2591
          %v2593 = vpop.xlane.xlu0 %2592
          %v2594 = vadd.f32 %v2396, %v2398
          %2595 = vadd.xlane.f32.xlu0 %v2594
          %v2596 = vpop.xlane.xlu0 %2595
          %v2597 = vadd.f32 %v2400, %v2402
          %2598 = vadd.xlane.f32.xlu0 %v2597
          %v2599 = vpop.xlane.xlu0 %2598
          %v2600 = vadd.f32 %v2404, %v2406
          %2601 = vadd.xlane.f32.xlu0 %v2600
          %v2602 = vpop.xlane.xlu0 %2601
          %v2603 = vadd.f32 %v2408, %v2410
          %2604 = vadd.xlane.f32.xlu0 %v2603
          %v2605 = vpop.xlane.xlu0 %2604
          %v2606 = vadd.f32 %v2412, %v2414
          %2607 = vadd.xlane.f32.xlu0 %v2606
          %v2608 = vpop.xlane.xlu0 %2607
          %v2609 = vadd.f32 %v2416, %v2418
          %2610 = vadd.xlane.f32.xlu0 %v2609
          %v2611 = vpop.xlane.xlu0 %2610
          %v2612 = vadd.f32 %v2420, %v2422
          %2613 = vadd.xlane.f32.xlu0 %v2612
          %v2614 = vpop.xlane.xlu0 %2613
          %v2615 = vpack.c.bf16 %v2172, %v2168
          %v2616 = vpack.c.bf16 %v2174, %v2170
          %v2617 = vpack.c.bf16 %v2180, %v2176
          %v2618 = vpack.c.bf16 %v2182, %v2178
          %v2619 = vpack.c.bf16 %v2188, %v2184
          %v2620 = vpack.c.bf16 %v2190, %v2186
          %v2621 = vpack.c.bf16 %v2196, %v2192
          %v2622 = vpack.c.bf16 %v2198, %v2194
          %v2623 = vpack.c.bf16 %v2204, %v2200
          %v2624 = vpack.c.bf16 %v2206, %v2202
          %v2625 = vpack.c.bf16 %v2212, %v2208
          %v2626 = vpack.c.bf16 %v2214, %v2210
          %v2627 = vpack.c.bf16 %v2220, %v2216
          %v2628 = vpack.c.bf16 %v2222, %v2218
          %v2629 = vpack.c.bf16 %v2228, %v2224
          %v2630 = vpack.c.bf16 %v2230, %v2226
          %v2631 = vpack.c.bf16 %v2236, %v2232
          %v2632 = vpack.c.bf16 %v2238, %v2234
          %v2633 = vpack.c.bf16 %v2244, %v2240
          %v2634 = vpack.c.bf16 %v2246, %v2242
          %v2635 = vpack.c.bf16 %v2252, %v2248
          %v2636 = vpack.c.bf16 %v2254, %v2250
          %v2637 = vpack.c.bf16 %v2260, %v2256
          %v2638 = vpack.c.bf16 %v2262, %v2258
          %v2639 = vpack.c.bf16 %v2268, %v2264
          %v2640 = vpack.c.bf16 %v2270, %v2266
          %v2641 = vpack.c.bf16 %v2276, %v2272
          %v2642 = vpack.c.bf16 %v2278, %v2274
          %v2643 = vpack.c.bf16 %v2284, %v2280
          %v2644 = vpack.c.bf16 %v2286, %v2282
          %v2645 = vpack.c.bf16 %v2292, %v2288
          %v2646 = vpack.c.bf16 %v2294, %v2290
          %v2647 = vpack.c.bf16 %v2300, %v2296
          %v2648 = vpack.c.bf16 %v2302, %v2298
          %v2649 = vpack.c.bf16 %v2308, %v2304
          %v2650 = vpack.c.bf16 %v2310, %v2306
          %v2651 = vpack.c.bf16 %v2316, %v2312
          %v2652 = vpack.c.bf16 %v2318, %v2314
          %v2653 = vpack.c.bf16 %v2324, %v2320
          %v2654 = vpack.c.bf16 %v2326, %v2322
          %v2655 = vpack.c.bf16 %v2332, %v2328
          %v2656 = vpack.c.bf16 %v2334, %v2330
          %v2657 = vpack.c.bf16 %v2340, %v2336
          %v2658 = vpack.c.bf16 %v2342, %v2338
          %v2659 = vpack.c.bf16 %v2348, %v2344
          %v2660 = vpack.c.bf16 %v2350, %v2346
          %v2661 = vpack.c.bf16 %v2356, %v2352
          %v2662 = vpack.c.bf16 %v2358, %v2354
          %v2663 = vpack.c.bf16 %v2364, %v2360
          %v2664 = vpack.c.bf16 %v2366, %v2362
          %v2665 = vpack.c.bf16 %v2372, %v2368
          %v2666 = vpack.c.bf16 %v2374, %v2370
          %v2667 = vpack.c.bf16 %v2380, %v2376
          %v2668 = vpack.c.bf16 %v2382, %v2378
          %v2669 = vpack.c.bf16 %v2388, %v2384
          %v2670 = vpack.c.bf16 %v2390, %v2386
          %v2671 = vpack.c.bf16 %v2396, %v2392
          %v2672 = vpack.c.bf16 %v2398, %v2394
          %v2673 = vpack.c.bf16 %v2404, %v2400
          %v2674 = vpack.c.bf16 %v2406, %v2402
          %v2675 = vpack.c.bf16 %v2412, %v2408
          %v2676 = vpack.c.bf16 %v2414, %v2410
          %v2677 = vpack.c.bf16 %v2420, %v2416
          %v2678 = vpack.c.bf16 %v2422, %v2418
          %2679 = vmatprep.subr.bf16.mxu0 0
          %2680 = vmatpush1.bf16.xpose.msra.mxu0 0
          %2681 = vmatprep.subr.bf16.mxu0 0
          %2682 = vmatpush1.bf16.xpose.msra.mxu0 0
          %2683 = vmatprep.subr.bf16.mxu0 0
          %2684 = vmatpush1.bf16.xpose.msra.mxu0 0
          %2685 = vmatprep.subr.bf16.mxu0 0
          %2686 = vmatpush1.bf16.xpose.msra.mxu0 0
          %2687 = vmatprep.subr.bf16.mxu0 0
          %2688 = vmatpush1.bf16.xpose.msra.mxu0 0
          %2689 = vmatprep.subr.bf16.mxu0 0
          %2690 = vmatpush1.bf16.xpose.msra.mxu0 0
          %2691 = vmatprep.subr.bf16.mxu0 0
          %2692 = vmatpush1.bf16.xpose.msra.mxu0 0
          %2693 = vmatprep.subr.bf16.mxu0 %v1184
          %2694 = vmatpush1.bf16.xpose.msra.mxu0 %v1183
          %2695 = vmatprep.subr.bf16.mxu0 0
          %2696 = vmatpush2.bf16.xpose.msra.mxu0 0
          %2697 = vmatprep.subr.bf16.mxu0 0
          %2698 = vmatpush2.bf16.xpose.msra.mxu0 0
          %2699 = vmatprep.subr.bf16.mxu0 0
          %2700 = vmatpush2.bf16.xpose.msra.mxu0 0
          %2701 = vmatprep.subr.bf16.mxu0 0
          %2702 = vmatpush2.bf16.xpose.msra.mxu0 0
          %2703 = vmatprep.subr.bf16.mxu0 0
          %2704 = vmatpush2.bf16.xpose.msra.mxu0 0
          %2705 = vmatprep.subr.bf16.mxu0 0
          %2706 = vmatpush2.bf16.xpose.msra.mxu0 0
          %2707 = vmatprep.subr.bf16.mxu0 0
          %2708 = vmatpush2.bf16.xpose.msra.mxu0 0
          %2709 = vmatprep.subr.bf16.mxu0 0
          %2710 = vmatpush2.bf16.xpose.msra.mxu0 0
          %2711 = vmatprep.mubr.bf16.mxu0 %v2616
          %2712 = vmatmul.mubr.bf16.gmra.mxu0 %v2615
          %v2713 = vpop.f32.mrf.mxu0
          %v2714 = vadd.f32 0.0, %v2713
          %v2715 = vpop.f32.mrf.mxu0
          %v2716 = vpop.f32.mrf.mxu0
          %v2717 = vadd.f32 0.0, %v2716
          %v2718 = vpop.f32.mrf.mxu0
          %2719 = vmatprep.mubr.bf16.mxu0 %v2618
          %2720 = vmatmul.mubr.bf16.gmra.mxu0 %v2617
          %v2721 = vpop.f32.mrf.mxu0
          %v2722 = vadd.f32 0.0, %v2721
          %v2723 = vpop.f32.mrf.mxu0
          %v2724 = vpop.f32.mrf.mxu0
          %v2725 = vadd.f32 0.0, %v2724
          %v2726 = vpop.f32.mrf.mxu0
          %2727 = vmatprep.mubr.bf16.mxu0 %v2620
          %2728 = vmatmul.mubr.bf16.gmra.mxu0 %v2619
          %v2729 = vpop.f32.mrf.mxu0
          %v2730 = vadd.f32 0.0, %v2729
          %v2731 = vpop.f32.mrf.mxu0
          %v2732 = vpop.f32.mrf.mxu0
          %v2733 = vadd.f32 0.0, %v2732
          %v2734 = vpop.f32.mrf.mxu0
          %2735 = vmatprep.mubr.bf16.mxu0 %v2622
          %2736 = vmatmul.mubr.bf16.gmra.mxu0 %v2621
          %v2737 = vpop.f32.mrf.mxu0
          %v2738 = vadd.f32 0.0, %v2737
          %v2739 = vpop.f32.mrf.mxu0
          %v2740 = vpop.f32.mrf.mxu0
          %v2741 = vadd.f32 0.0, %v2740
          %v2742 = vpop.f32.mrf.mxu0
          %2743 = vmatprep.mubr.bf16.mxu0 %v2624
          %2744 = vmatmul.mubr.bf16.gmra.mxu0 %v2623
          %v2745 = vpop.f32.mrf.mxu0
          %v2746 = vadd.f32 0.0, %v2745
          %v2747 = vpop.f32.mrf.mxu0
          %v2748 = vpop.f32.mrf.mxu0
          %v2749 = vadd.f32 0.0, %v2748
          %v2750 = vpop.f32.mrf.mxu0
          %2751 = vmatprep.mubr.bf16.mxu0 %v2626
          %2752 = vmatmul.mubr.bf16.gmra.mxu0 %v2625
          %v2753 = vpop.f32.mrf.mxu0
          %v2754 = vadd.f32 0.0, %v2753
          %v2755 = vpop.f32.mrf.mxu0
          %v2756 = vpop.f32.mrf.mxu0
          %v2757 = vadd.f32 0.0, %v2756
          %v2758 = vpop.f32.mrf.mxu0
          %2759 = vmatprep.mubr.bf16.mxu0 %v2628
          %2760 = vmatmul.mubr.bf16.gmra.mxu0 %v2627
          %v2761 = vpop.f32.mrf.mxu0
          %v2762 = vadd.f32 0.0, %v2761
          %v2763 = vpop.f32.mrf.mxu0
          %v2764 = vpop.f32.mrf.mxu0
          %v2765 = vadd.f32 0.0, %v2764
          %v2766 = vpop.f32.mrf.mxu0
          %2767 = vmatprep.mubr.bf16.mxu0 %v2630
          %2768 = vmatmul.mubr.bf16.gmra.mxu0 %v2629
          %v2769 = vpop.f32.mrf.mxu0
          %v2770 = vadd.f32 0.0, %v2769
          %v2771 = vpop.f32.mrf.mxu0
          %v2772 = vpop.f32.mrf.mxu0
          %v2773 = vadd.f32 0.0, %v2772
          %v2774 = vpop.f32.mrf.mxu0
          %2775 = vdwg.mxu0
          %2776 = vmatprep.subr.bf16.mxu0 0
          %2777 = vmatpush1.bf16.xpose.msra.mxu0 0
          %2778 = vmatprep.subr.bf16.mxu0 0
          %2779 = vmatpush1.bf16.xpose.msra.mxu0 0
          %2780 = vmatprep.subr.bf16.mxu0 0
          %2781 = vmatpush1.bf16.xpose.msra.mxu0 0
          %2782 = vmatprep.subr.bf16.mxu0 0
          %2783 = vmatpush1.bf16.xpose.msra.mxu0 0
          %2784 = vmatprep.subr.bf16.mxu0 0
          %2785 = vmatpush1.bf16.xpose.msra.mxu0 0
          %2786 = vmatprep.subr.bf16.mxu0 0
          %2787 = vmatpush1.bf16.xpose.msra.mxu0 0
          %2788 = vmatprep.subr.bf16.mxu0 0
          %2789 = vmatpush1.bf16.xpose.msra.mxu0 0
          %2790 = vmatprep.subr.bf16.mxu0 %v1186
          %2791 = vmatpush1.bf16.xpose.msra.mxu0 %v1185
          %2792 = vmatprep.subr.bf16.mxu0 0
          %2793 = vmatpush2.bf16.xpose.msra.mxu0 0
          %2794 = vmatprep.subr.bf16.mxu0 0
          %2795 = vmatpush2.bf16.xpose.msra.mxu0 0
          %2796 = vmatprep.subr.bf16.mxu0 0
          %2797 = vmatpush2.bf16.xpose.msra.mxu0 0
          %2798 = vmatprep.subr.bf16.mxu0 0
          %2799 = vmatpush2.bf16.xpose.msra.mxu0 0
          %2800 = vmatprep.subr.bf16.mxu0 0
          %2801 = vmatpush2.bf16.xpose.msra.mxu0 0
          %2802 = vmatprep.subr.bf16.mxu0 0
          %2803 = vmatpush2.bf16.xpose.msra.mxu0 0
          %2804 = vmatprep.subr.bf16.mxu0 0
          %2805 = vmatpush2.bf16.xpose.msra.mxu0 0
          %2806 = vmatprep.subr.bf16.mxu0 0
          %2807 = vmatpush2.bf16.xpose.msra.mxu0 0
          %2808 = vmatprep.mubr.bf16.mxu0 %v2632
          %2809 = vmatmul.mubr.bf16.gmra.mxu0 %v2631
          %v2810 = vpop.f32.mrf.mxu0
          %v2811 = vadd.f32 0.0, %v2810
          %v2812 = vpop.f32.mrf.mxu0
          %v2813 = vpop.f32.mrf.mxu0
          %v2814 = vadd.f32 0.0, %v2813
          %v2815 = vpop.f32.mrf.mxu0
          %2816 = vmatprep.mubr.bf16.mxu0 %v2634
          %2817 = vmatmul.mubr.bf16.gmra.mxu0 %v2633
          %v2818 = vpop.f32.mrf.mxu0
          %v2819 = vadd.f32 0.0, %v2818
          %v2820 = vpop.f32.mrf.mxu0
          %v2821 = vpop.f32.mrf.mxu0
          %v2822 = vadd.f32 0.0, %v2821
          %v2823 = vpop.f32.mrf.mxu0
          %2824 = vmatprep.mubr.bf16.mxu0 %v2636
          %2825 = vmatmul.mubr.bf16.gmra.mxu0 %v2635
          %v2826 = vpop.f32.mrf.mxu0
          %v2827 = vadd.f32 0.0, %v2826
          %v2828 = vpop.f32.mrf.mxu0
          %v2829 = vpop.f32.mrf.mxu0
          %v2830 = vadd.f32 0.0, %v2829
          %v2831 = vpop.f32.mrf.mxu0
          %2832 = vmatprep.mubr.bf16.mxu0 %v2638
          %2833 = vmatmul.mubr.bf16.gmra.mxu0 %v2637
          %v2834 = vpop.f32.mrf.mxu0
          %v2835 = vadd.f32 0.0, %v2834
          %v2836 = vpop.f32.mrf.mxu0
          %v2837 = vpop.f32.mrf.mxu0
          %v2838 = vadd.f32 0.0, %v2837
          %v2839 = vpop.f32.mrf.mxu0
          %2840 = vmatprep.mubr.bf16.mxu0 %v2640
          %2841 = vmatmul.mubr.bf16.gmra.mxu0 %v2639
          %v2842 = vpop.f32.mrf.mxu0
          %v2843 = vadd.f32 0.0, %v2842
          %v2844 = vpop.f32.mrf.mxu0
          %v2845 = vpop.f32.mrf.mxu0
          %v2846 = vadd.f32 0.0, %v2845
          %v2847 = vpop.f32.mrf.mxu0
          %2848 = vmatprep.mubr.bf16.mxu0 %v2642
          %2849 = vmatmul.mubr.bf16.gmra.mxu0 %v2641
          %v2850 = vpop.f32.mrf.mxu0
          %v2851 = vadd.f32 0.0, %v2850
          %v2852 = vpop.f32.mrf.mxu0
          %v2853 = vpop.f32.mrf.mxu0
          %v2854 = vadd.f32 0.0, %v2853
          %v2855 = vpop.f32.mrf.mxu0
          %2856 = vmatprep.mubr.bf16.mxu0 %v2644
          %2857 = vmatmul.mubr.bf16.gmra.mxu0 %v2643
          %v2858 = vpop.f32.mrf.mxu0
          %v2859 = vadd.f32 0.0, %v2858
          %v2860 = vpop.f32.mrf.mxu0
          %v2861 = vpop.f32.mrf.mxu0
          %v2862 = vadd.f32 0.0, %v2861
          %v2863 = vpop.f32.mrf.mxu0
          %2864 = vmatprep.mubr.bf16.mxu0 %v2646
          %2865 = vmatmul.mubr.bf16.gmra.mxu0 %v2645
          %v2866 = vpop.f32.mrf.mxu0
          %v2867 = vadd.f32 0.0, %v2866
          %v2868 = vpop.f32.mrf.mxu0
          %v2869 = vpop.f32.mrf.mxu0
          %v2870 = vadd.f32 0.0, %v2869
          %v2871 = vpop.f32.mrf.mxu0
          %2872 = vdwg.mxu0
          %2873 = vmatprep.subr.bf16.mxu0 0
          %2874 = vmatpush1.bf16.xpose.msra.mxu0 0
          %2875 = vmatprep.subr.bf16.mxu0 0
          %2876 = vmatpush1.bf16.xpose.msra.mxu0 0
          %2877 = vmatprep.subr.bf16.mxu0 0
          %2878 = vmatpush1.bf16.xpose.msra.mxu0 0
          %2879 = vmatprep.subr.bf16.mxu0 0
          %2880 = vmatpush1.bf16.xpose.msra.mxu0 0
          %2881 = vmatprep.subr.bf16.mxu0 0
          %2882 = vmatpush1.bf16.xpose.msra.mxu0 0
          %2883 = vmatprep.subr.bf16.mxu0 0
          %2884 = vmatpush1.bf16.xpose.msra.mxu0 0
          %2885 = vmatprep.subr.bf16.mxu0 0
          %2886 = vmatpush1.bf16.xpose.msra.mxu0 0
          %2887 = vmatprep.subr.bf16.mxu0 %v1188
          %2888 = vmatpush1.bf16.xpose.msra.mxu0 %v1187
          %2889 = vmatprep.subr.bf16.mxu0 0
          %2890 = vmatpush2.bf16.xpose.msra.mxu0 0
          %2891 = vmatprep.subr.bf16.mxu0 0
          %2892 = vmatpush2.bf16.xpose.msra.mxu0 0
          %2893 = vmatprep.subr.bf16.mxu0 0
          %2894 = vmatpush2.bf16.xpose.msra.mxu0 0
          %2895 = vmatprep.subr.bf16.mxu0 0
          %2896 = vmatpush2.bf16.xpose.msra.mxu0 0
          %2897 = vmatprep.subr.bf16.mxu0 0
          %2898 = vmatpush2.bf16.xpose.msra.mxu0 0
          %2899 = vmatprep.subr.bf16.mxu0 0
          %2900 = vmatpush2.bf16.xpose.msra.mxu0 0
          %2901 = vmatprep.subr.bf16.mxu0 0
          %2902 = vmatpush2.bf16.xpose.msra.mxu0 0
          %2903 = vmatprep.subr.bf16.mxu0 0
          %2904 = vmatpush2.bf16.xpose.msra.mxu0 0
          %2905 = vmatprep.mubr.bf16.mxu0 %v2648
          %2906 = vmatmul.mubr.bf16.gmra.mxu0 %v2647
          %v2907 = vpop.f32.mrf.mxu0
          %v2908 = vadd.f32 0.0, %v2907
          %v2909 = vpop.f32.mrf.mxu0
          %v2910 = vpop.f32.mrf.mxu0
          %v2911 = vadd.f32 0.0, %v2910
          %v2912 = vpop.f32.mrf.mxu0
          %2913 = vmatprep.mubr.bf16.mxu0 %v2650
          %2914 = vmatmul.mubr.bf16.gmra.mxu0 %v2649
          %v2915 = vpop.f32.mrf.mxu0
          %v2916 = vadd.f32 0.0, %v2915
          %v2917 = vpop.f32.mrf.mxu0
          %v2918 = vpop.f32.mrf.mxu0
          %v2919 = vadd.f32 0.0, %v2918
          %v2920 = vpop.f32.mrf.mxu0
          %2921 = vmatprep.mubr.bf16.mxu0 %v2652
          %2922 = vmatmul.mubr.bf16.gmra.mxu0 %v2651
          %v2923 = vpop.f32.mrf.mxu0
          %v2924 = vadd.f32 0.0, %v2923
          %v2925 = vpop.f32.mrf.mxu0
          %v2926 = vpop.f32.mrf.mxu0
          %v2927 = vadd.f32 0.0, %v2926
          %v2928 = vpop.f32.mrf.mxu0
          %2929 = vmatprep.mubr.bf16.mxu0 %v2654
          %2930 = vmatmul.mubr.bf16.gmra.mxu0 %v2653
          %v2931 = vpop.f32.mrf.mxu0
          %v2932 = vadd.f32 0.0, %v2931
          %v2933 = vpop.f32.mrf.mxu0
          %v2934 = vpop.f32.mrf.mxu0
          %v2935 = vadd.f32 0.0, %v2934
          %v2936 = vpop.f32.mrf.mxu0
          %2937 = vmatprep.mubr.bf16.mxu0 %v2656
          %2938 = vmatmul.mubr.bf16.gmra.mxu0 %v2655
          %v2939 = vpop.f32.mrf.mxu0
          %v2940 = vadd.f32 0.0, %v2939
          %v2941 = vpop.f32.mrf.mxu0
          %v2942 = vpop.f32.mrf.mxu0
          %v2943 = vadd.f32 0.0, %v2942
          %v2944 = vpop.f32.mrf.mxu0
          %2945 = vmatprep.mubr.bf16.mxu0 %v2658
          %2946 = vmatmul.mubr.bf16.gmra.mxu0 %v2657
          %v2947 = vpop.f32.mrf.mxu0
          %v2948 = vadd.f32 0.0, %v2947
          %v2949 = vpop.f32.mrf.mxu0
          %v2950 = vpop.f32.mrf.mxu0
          %v2951 = vadd.f32 0.0, %v2950
          %v2952 = vpop.f32.mrf.mxu0
          %2953 = vmatprep.mubr.bf16.mxu0 %v2660
          %2954 = vmatmul.mubr.bf16.gmra.mxu0 %v2659
          %v2955 = vpop.f32.mrf.mxu0
          %v2956 = vadd.f32 0.0, %v2955
          %v2957 = vpop.f32.mrf.mxu0
          %v2958 = vpop.f32.mrf.mxu0
          %v2959 = vadd.f32 0.0, %v2958
          %v2960 = vpop.f32.mrf.mxu0
          %2961 = vmatprep.mubr.bf16.mxu0 %v2662
          %2962 = vmatmul.mubr.bf16.gmra.mxu0 %v2661
          %v2963 = vpop.f32.mrf.mxu0
          %v2964 = vadd.f32 0.0, %v2963
          %v2965 = vpop.f32.mrf.mxu0
          %v2966 = vpop.f32.mrf.mxu0
          %v2967 = vadd.f32 0.0, %v2966
          %v2968 = vpop.f32.mrf.mxu0
          %2969 = vdwg.mxu0
          %2970 = vmatprep.subr.bf16.mxu0 0
          %2971 = vmatpush1.bf16.xpose.msra.mxu0 0
          %2972 = vmatprep.subr.bf16.mxu0 0
          %2973 = vmatpush1.bf16.xpose.msra.mxu0 0
          %2974 = vmatprep.subr.bf16.mxu0 0
          %2975 = vmatpush1.bf16.xpose.msra.mxu0 0
          %2976 = vmatprep.subr.bf16.mxu0 0
          %2977 = vmatpush1.bf16.xpose.msra.mxu0 0
          %2978 = vmatprep.subr.bf16.mxu0 0
          %2979 = vmatpush1.bf16.xpose.msra.mxu0 0
          %2980 = vmatprep.subr.bf16.mxu0 0
          %2981 = vmatpush1.bf16.xpose.msra.mxu0 0
          %2982 = vmatprep.subr.bf16.mxu0 0
          %2983 = vmatpush1.bf16.xpose.msra.mxu0 0
          %2984 = vmatprep.subr.bf16.mxu0 %v1190
          %2985 = vmatpush1.bf16.xpose.msra.mxu0 %v1189
          %2986 = vmatprep.subr.bf16.mxu0 0
          %2987 = vmatpush2.bf16.xpose.msra.mxu0 0
          %2988 = vmatprep.subr.bf16.mxu0 0
          %2989 = vmatpush2.bf16.xpose.msra.mxu0 0
          %2990 = vmatprep.subr.bf16.mxu0 0
          %2991 = vmatpush2.bf16.xpose.msra.mxu0 0
          %2992 = vmatprep.subr.bf16.mxu0 0
          %2993 = vmatpush2.bf16.xpose.msra.mxu0 0
          %2994 = vmatprep.subr.bf16.mxu0 0
          %2995 = vmatpush2.bf16.xpose.msra.mxu0 0
          %2996 = vmatprep.subr.bf16.mxu0 0
          %2997 = vmatpush2.bf16.xpose.msra.mxu0 0
          %2998 = vmatprep.subr.bf16.mxu0 0
          %2999 = vmatpush2.bf16.xpose.msra.mxu0 0
          %3000 = vmatprep.subr.bf16.mxu0 0
          %3001 = vmatpush2.bf16.xpose.msra.mxu0 0
          %3002 = vmatprep.mubr.bf16.mxu0 %v2664
          %3003 = vmatmul.mubr.bf16.gmra.mxu0 %v2663
          %v3004 = vpop.f32.mrf.mxu0
          %v3005 = vadd.f32 0.0, %v3004
          %v3006 = vpop.f32.mrf.mxu0
          %v3007 = vpop.f32.mrf.mxu0
          %v3008 = vadd.f32 0.0, %v3007
          %v3009 = vpop.f32.mrf.mxu0
          %3010 = vmatprep.mubr.bf16.mxu0 %v2666
          %3011 = vmatmul.mubr.bf16.gmra.mxu0 %v2665
          %v3012 = vpop.f32.mrf.mxu0
          %v3013 = vadd.f32 0.0, %v3012
          %v3014 = vpop.f32.mrf.mxu0
          %v3015 = vpop.f32.mrf.mxu0
          %v3016 = vadd.f32 0.0, %v3015
          %v3017 = vpop.f32.mrf.mxu0
          %3018 = vmatprep.mubr.bf16.mxu0 %v2668
          %3019 = vmatmul.mubr.bf16.gmra.mxu0 %v2667
          %v3020 = vpop.f32.mrf.mxu0
          %v3021 = vadd.f32 0.0, %v3020
          %v3022 = vpop.f32.mrf.mxu0
          %v3023 = vpop.f32.mrf.mxu0
          %v3024 = vadd.f32 0.0, %v3023
          %v3025 = vpop.f32.mrf.mxu0
          %3026 = vmatprep.mubr.bf16.mxu0 %v2670
          %3027 = vmatmul.mubr.bf16.gmra.mxu0 %v2669
          %v3028 = vpop.f32.mrf.mxu0
          %v3029 = vadd.f32 0.0, %v3028
          %v3030 = vpop.f32.mrf.mxu0
          %v3031 = vpop.f32.mrf.mxu0
          %v3032 = vadd.f32 0.0, %v3031
          %v3033 = vpop.f32.mrf.mxu0
          %3034 = vmatprep.mubr.bf16.mxu0 %v2672
          %3035 = vmatmul.mubr.bf16.gmra.mxu0 %v2671
          %v3036 = vpop.f32.mrf.mxu0
          %v3037 = vadd.f32 0.0, %v3036
          %v3038 = vpop.f32.mrf.mxu0
          %v3039 = vpop.f32.mrf.mxu0
          %v3040 = vadd.f32 0.0, %v3039
          %v3041 = vpop.f32.mrf.mxu0
          %3042 = vmatprep.mubr.bf16.mxu0 %v2674
          %3043 = vmatmul.mubr.bf16.gmra.mxu0 %v2673
          %v3044 = vpop.f32.mrf.mxu0
          %v3045 = vadd.f32 0.0, %v3044
          %v3046 = vpop.f32.mrf.mxu0
          %v3047 = vpop.f32.mrf.mxu0
          %v3048 = vadd.f32 0.0, %v3047
          %v3049 = vpop.f32.mrf.mxu0
          %3050 = vmatprep.mubr.bf16.mxu0 %v2676
          %3051 = vmatmul.mubr.bf16.gmra.mxu0 %v2675
          %v3052 = vpop.f32.mrf.mxu0
          %v3053 = vadd.f32 0.0, %v3052
          %v3054 = vpop.f32.mrf.mxu0
          %v3055 = vpop.f32.mrf.mxu0
          %v3056 = vadd.f32 0.0, %v3055
          %v3057 = vpop.f32.mrf.mxu0
          %3058 = vmatprep.mubr.bf16.mxu0 %v2678
          %3059 = vmatmul.mubr.bf16.gmra.mxu0 %v2677
          %v3060 = vpop.f32.mrf.mxu0
          %v3061 = vadd.f32 0.0, %v3060
          %v3062 = vpop.f32.mrf.mxu0
          %v3063 = vpop.f32.mrf.mxu0
          %v3064 = vadd.f32 0.0, %v3063
          %v3065 = vpop.f32.mrf.mxu0
          %3066 = vdwg.mxu0
          %v3067 = vrcp.pop %v2425
          %v3068 = vrcp.pop %v2428
          %v3069 = vrcp.pop %v2431
          %v3070 = vrcp.pop %v2434
          %v3071 = vrcp.pop %v2437
          %v3072 = vrcp.pop %v2440
          %v3073 = vrcp.pop %v2443
          %v3074 = vrcp.pop %v2446
          %v3075 = vrcp.pop %v2449
          %v3076 = vrcp.pop %v2452
          %v3077 = vrcp.pop %v2455
          %v3078 = vrcp.pop %v2458
          %v3079 = vrcp.pop %v2461
          %v3080 = vrcp.pop %v2464
          %v3081 = vrcp.pop %v2467
          %v3082 = vrcp.pop %v2470
          %v3083 = vrcp.pop %v2473
          %v3084 = vrcp.pop %v2476
          %v3085 = vrcp.pop %v2479
          %v3086 = vrcp.pop %v2482
          %v3087 = vrcp.pop %v2485
          %v3088 = vrcp.pop %v2488
          %v3089 = vrcp.pop %v2491
          %v3090 = vrcp.pop %v2494
          %v3091 = vrcp.pop %v2497
          %v3092 = vrcp.pop %v2500
          %v3093 = vrcp.pop %v2503
          %v3094 = vrcp.pop %v2506
          %v3095 = vrcp.pop %v2509
          %v3096 = vrcp.pop %v2512
          %v3097 = vrcp.pop %v2515
          %v3098 = vrcp.pop %v2518
          %v3099 = vrcp.pop %v2521
          %v3100 = vrcp.pop %v2524
          %v3101 = vrcp.pop %v2527
          %v3102 = vrcp.pop %v2530
          %v3103 = vrcp.pop %v2533
          %v3104 = vrcp.pop %v2536
          %v3105 = vrcp.pop %v2539
          %v3106 = vrcp.pop %v2542
          %v3107 = vrcp.pop %v2545
          %v3108 = vrcp.pop %v2548
          %v3109 = vrcp.pop %v2551
          %v3110 = vrcp.pop %v2554
          %v3111 = vrcp.pop %v2557
          %v3112 = vrcp.pop %v2560
          %v3113 = vrcp.pop %v2563
          %v3114 = vrcp.pop %v2566
          %v3115 = vrcp.pop %v2569
          %v3116 = vrcp.pop %v2572
          %v3117 = vrcp.pop %v2575
          %v3118 = vrcp.pop %v2578
          %v3119 = vrcp.pop %v2581
          %v3120 = vrcp.pop %v2584
          %v3121 = vrcp.pop %v2587
          %v3122 = vrcp.pop %v2590
          %v3123 = vrcp.pop %v2593
          %v3124 = vrcp.pop %v2596
          %v3125 = vrcp.pop %v2599
          %v3126 = vrcp.pop %v2602
          %v3127 = vrcp.pop %v2605
          %v3128 = vrcp.pop %v2608
          %v3129 = vrcp.pop %v2611
          %v3130 = vrcp.pop %v2614
          %v3131 = vmul.f32 %v2714, %v3067
          %v3132 = vmul.f32 %v2717, %v3068
          %v3133 = vmul.f32 %v2722, %v3069
          %v3134 = vmul.f32 %v2725, %v3070
          %v3135 = vmul.f32 %v2730, %v3071
          %v3136 = vmul.f32 %v2733, %v3072
          %v3137 = vmul.f32 %v2738, %v3073
          %v3138 = vmul.f32 %v2741, %v3074
          %v3139 = vmul.f32 %v2746, %v3075
          %v3140 = vmul.f32 %v2749, %v3076
          %v3141 = vmul.f32 %v2754, %v3077
          %v3142 = vmul.f32 %v2757, %v3078
          %v3143 = vmul.f32 %v2762, %v3079
          %v3144 = vmul.f32 %v2765, %v3080
          %v3145 = vmul.f32 %v2770, %v3081
          %v3146 = vmul.f32 %v2773, %v3082
          %v3147 = vmul.f32 %v2811, %v3083
          %v3148 = vmul.f32 %v2814, %v3084
          %v3149 = vmul.f32 %v2819, %v3085
          %v3150 = vmul.f32 %v2822, %v3086
          %v3151 = vmul.f32 %v2827, %v3087
          %v3152 = vmul.f32 %v2830, %v3088
          %v3153 = vmul.f32 %v2835, %v3089
          %v3154 = vmul.f32 %v2838, %v3090
          %v3155 = vmul.f32 %v2843, %v3091
          %v3156 = vmul.f32 %v2846, %v3092
          %v3157 = vmul.f32 %v2851, %v3093
          %v3158 = vmul.f32 %v2854, %v3094
          %v3159 = vmul.f32 %v2859, %v3095
          %v3160 = vmul.f32 %v2862, %v3096
          %v3161 = vmul.f32 %v2867, %v3097
          %v3162 = vmul.f32 %v2870, %v3098
          %v3163 = vmul.f32 %v2908, %v3099
          %v3164 = vmul.f32 %v2911, %v3100
          %v3165 = vmul.f32 %v2916, %v3101
          %v3166 = vmul.f32 %v2919, %v3102
          %v3167 = vmul.f32 %v2924, %v3103
          %v3168 = vmul.f32 %v2927, %v3104
          %v3169 = vmul.f32 %v2932, %v3105
          %v3170 = vmul.f32 %v2935, %v3106
          %v3171 = vmul.f32 %v2940, %v3107
          %v3172 = vmul.f32 %v2943, %v3108
          %v3173 = vmul.f32 %v2948, %v3109
          %v3174 = vmul.f32 %v2951, %v3110
          %v3175 = vmul.f32 %v2956, %v3111
          %v3176 = vmul.f32 %v2959, %v3112
          %v3177 = vmul.f32 %v2964, %v3113
          %v3178 = vmul.f32 %v2967, %v3114
          %v3179 = vmul.f32 %v3005, %v3115
          %v3180 = vmul.f32 %v3008, %v3116
          %v3181 = vmul.f32 %v3013, %v3117
          %v3182 = vmul.f32 %v3016, %v3118
          %v3183 = vmul.f32 %v3021, %v3119
          %v3184 = vmul.f32 %v3024, %v3120
          %v3185 = vmul.f32 %v3029, %v3121
          %v3186 = vmul.f32 %v3032, %v3122
          %v3187 = vmul.f32 %v3037, %v3123
          %v3188 = vmul.f32 %v3040, %v3124
          %v3189 = vmul.f32 %v3045, %v3125
          %v3190 = vmul.f32 %v3048, %v3126
          %v3191 = vmul.f32 %v3053, %v3127
          %v3192 = vmul.f32 %v3056, %v3128
          %v3193 = vmul.f32 %v3061, %v3129
          %v3194 = vmul.f32 %v3064, %v3130
          %v3195 = vpack.c.bf16 %v3132, %v3131
          %v3196 = vpack.c.bf16 %v3134, %v3133
          %v3197 = vpack.c.bf16 %v3136, %v3135
          %v3198 = vpack.c.bf16 %v3138, %v3137
          %v3199 = vpack.c.bf16 %v3140, %v3139
          %v3200 = vpack.c.bf16 %v3142, %v3141
          %v3201 = vpack.c.bf16 %v3144, %v3143
          %v3202 = vpack.c.bf16 %v3146, %v3145
          %v3203 = vpack.c.bf16 %v3148, %v3147
          %v3204 = vpack.c.bf16 %v3150, %v3149
          %v3205 = vpack.c.bf16 %v3152, %v3151
          %v3206 = vpack.c.bf16 %v3154, %v3153
          %v3207 = vpack.c.bf16 %v3156, %v3155
          %v3208 = vpack.c.bf16 %v3158, %v3157
          %v3209 = vpack.c.bf16 %v3160, %v3159
          %v3210 = vpack.c.bf16 %v3162, %v3161
          %v3211 = vpack.c.bf16 %v3164, %v3163
          %v3212 = vpack.c.bf16 %v3166, %v3165
          %v3213 = vpack.c.bf16 %v3168, %v3167
          %v3214 = vpack.c.bf16 %v3170, %v3169
          %v3215 = vpack.c.bf16 %v3172, %v3171
          %v3216 = vpack.c.bf16 %v3174, %v3173
          %v3217 = vpack.c.bf16 %v3176, %v3175
          %v3218 = vpack.c.bf16 %v3178, %v3177
          %v3219 = vpack.c.bf16 %v3180, %v3179
          %v3220 = vpack.c.bf16 %v3182, %v3181
          %v3221 = vpack.c.bf16 %v3184, %v3183
          %v3222 = vpack.c.bf16 %v3186, %v3185
          %v3223 = vpack.c.bf16 %v3188, %v3187
          %v3224 = vpack.c.bf16 %v3190, %v3189
          %v3225 = vpack.c.bf16 %v3192, %v3191
          %v3226 = vpack.c.bf16 %v3194, %v3193
          %3227 = vxpose.xlu0.c.b16.start [1/8] %v3195, 128
          %3228 = vxpose.xlu0.c.b16.cont [2/8] %v3196, 128
          %3229 = vxpose.xlu0.c.b16.cont [3/8] %v3197, 128
          %3230 = vxpose.xlu0.c.b16.cont [4/8] %v3198, 128
          %3231 = vxpose.xlu0.c.b16.cont [5/8] %v3199, 128
          %3232 = vxpose.xlu0.c.b16.cont [6/8] %v3200, 128
          %3233 = vxpose.xlu0.c.b16.cont [7/8] %v3201, 128
          %3234 = vxpose.xlu0.c.b16.end [8/8] %v3202, 128
          %v3235 = vpop.trf.xlu0
          %v3236 = vpop.trf.xlu0
          %v3237 = vpop.trf.xlu0
          %v3238 = vpop.trf.xlu0
          %v3239 = vpop.trf.xlu0
          %v3240 = vpop.trf.xlu0
          %v3241 = vpop.trf.xlu0
          %v3242 = vpop.trf.xlu0
          %3243 = vxpose.xlu0.c.b16.start [1/8] %v3203, 128
          %3244 = vxpose.xlu0.c.b16.cont [2/8] %v3204, 128
          %3245 = vxpose.xlu0.c.b16.cont [3/8] %v3205, 128
          %3246 = vxpose.xlu0.c.b16.cont [4/8] %v3206, 128
          %3247 = vxpose.xlu0.c.b16.cont [5/8] %v3207, 128
          %3248 = vxpose.xlu0.c.b16.cont [6/8] %v3208, 128
          %3249 = vxpose.xlu0.c.b16.cont [7/8] %v3209, 128
          %3250 = vxpose.xlu0.c.b16.end [8/8] %v3210, 128
          %v3251 = vpop.trf.xlu0
          %v3252 = vpop.trf.xlu0
          %v3253 = vpop.trf.xlu0
          %v3254 = vpop.trf.xlu0
          %v3255 = vpop.trf.xlu0
          %v3256 = vpop.trf.xlu0
          %v3257 = vpop.trf.xlu0
          %v3258 = vpop.trf.xlu0
          %3259 = vxpose.xlu0.c.b16.start [1/8] %v3211, 128
          %3260 = vxpose.xlu0.c.b16.cont [2/8] %v3212, 128
          %3261 = vxpose.xlu0.c.b16.cont [3/8] %v3213, 128
          %3262 = vxpose.xlu0.c.b16.cont [4/8] %v3214, 128
          %3263 = vxpose.xlu0.c.b16.cont [5/8] %v3215, 128
          %3264 = vxpose.xlu0.c.b16.cont [6/8] %v3216, 128
          %3265 = vxpose.xlu0.c.b16.cont [7/8] %v3217, 128
          %3266 = vxpose.xlu0.c.b16.end [8/8] %v3218, 128
          %v3267 = vpop.trf.xlu0
          %v3268 = vpop.trf.xlu0
          %v3269 = vpop.trf.xlu0
          %v3270 = vpop.trf.xlu0
          %v3271 = vpop.trf.xlu0
          %v3272 = vpop.trf.xlu0
          %v3273 = vpop.trf.xlu0
          %v3274 = vpop.trf.xlu0
          %3275 = vxpose.xlu0.c.b16.start [1/8] %v3219, 128
          %3276 = vxpose.xlu0.c.b16.cont [2/8] %v3220, 128
          %3277 = vxpose.xlu0.c.b16.cont [3/8] %v3221, 128
          %3278 = vxpose.xlu0.c.b16.cont [4/8] %v3222, 128
          %3279 = vxpose.xlu0.c.b16.cont [5/8] %v3223, 128
          %3280 = vxpose.xlu0.c.b16.cont [6/8] %v3224, 128
          %3281 = vxpose.xlu0.c.b16.cont [7/8] %v3225, 128
          %3282 = vxpose.xlu0.c.b16.end [8/8] %v3226, 128
          %v3283 = vpop.trf.xlu0
          %v3284 = vpop.trf.xlu0
          %v3285 = vpop.trf.xlu0
          %v3286 = vpop.trf.xlu0
          %v3287 = vpop.trf.xlu0
          %v3288 = vpop.trf.xlu0
          %v3289 = vpop.trf.xlu0
          %v3290 = vpop.trf.xlu0
          %v3291 = vld [vmem:[%s3] sm:$0xf]
          %v3292 = vld [vmem:[%s3 + $0x4] sm:$0xf]
          %v3293 = vld [vmem:[%s3 + $0x8] sm:$0xf]
          %v3294 = vld [vmem:[%s3 + $0xc] sm:$0xf]
          %v3295 = vld [vmem:[%s3 + $0x10] sm:$0xf]
          %v3296 = vld [vmem:[%s3 + $0x14] sm:$0xf]
          %v3297 = vld [vmem:[%s3 + $0x18] sm:$0xf]
          %v3298 = vld [vmem:[%s3 + $0x1c] sm:$0xf]
          %v3299 = vld [vmem:[%s4] sm:$0xff]
          %v3300 = vld [vmem:[%s4 + $0x8] sm:$0xff]
          %v3301 = vld [vmem:[%s4 + $0x10] sm:$0xff]
          %v3302 = vld [vmem:[%s4 + $0x18] sm:$0xff]
          %v3303 = vld [vmem:[%s4 + $0x20] sm:$0xff]
          %v3304 = vld [vmem:[%s4 + $0x28] sm:$0xff]
          %v3305 = vld [vmem:[%s4 + $0x30] sm:$0xff]
          %v3306 = vld [vmem:[%s4 + $0x38] sm:$0xff]
          %3308 = vset.pattern.permute.xlu0 0
          %3309 = vperm.xlu0 %3308, %v3299
          %v3310 = vpop.permute.xlu0 %3309
          %3313 = vset.pattern.permute.xlu0 0
          %3314 = vperm.xlu0 %3313, %v3300
          %v3315 = vpop.permute.xlu0 %3314
          %3318 = vset.pattern.permute.xlu0 0
          %3319 = vperm.xlu0 %3318, %v3301
          %v3320 = vpop.permute.xlu0 %3319
          %3323 = vset.pattern.permute.xlu0 0
          %3324 = vperm.xlu0 %3323, %v3302
          %v3325 = vpop.permute.xlu0 %3324
          %3328 = vset.pattern.permute.xlu0 0
          %3329 = vperm.xlu0 %3328, %v3303
          %v3330 = vpop.permute.xlu0 %3329
          %3333 = vset.pattern.permute.xlu0 0
          %3334 = vperm.xlu0 %3333, %v3304
          %v3335 = vpop.permute.xlu0 %3334
          %3338 = vset.pattern.permute.xlu0 0
          %3339 = vperm.xlu0 %3338, %v3305
          %v3340 = vpop.permute.xlu0 %3339
          %3343 = vset.pattern.permute.xlu0 0
          %3344 = vperm.xlu0 %3343, %v3306
          %v3345 = vpop.permute.xlu0 %3344
          %v3355 = vunpack.c.l.b16 %v3291
          %v3356 = vunpack.c.l.b16 %v3292
          %v3357 = vunpack.c.l.b16 %v3293
          %v3358 = vunpack.c.l.b16 %v3294
          %v3359 = vunpack.c.l.b16 %v3295
          %v3360 = vunpack.c.l.b16 %v3296
          %v3361 = vunpack.c.l.b16 %v3297
          %v3362 = vunpack.c.l.b16 %v3298
          %v3363 = vpack.c.b16 %v3356, %v3355
          %v3364 = vpack.c.b16 %v3358, %v3357
          %v3365 = vpack.c.b16 %v3360, %v3359
          %v3366 = vpack.c.b16 %v3362, %v3361
          %v3368 = vsel %vm929, %v3363, 0
          %v3371 = vsel %vm929, %v3364, 0
          %v3374 = vsel %vm929, %v3365, 0
          %v3377 = vsel %vm929, %v3366, 0
          %3379 = vmatprep.subr.bf16.mxu0 0
          %3380 = vmatpush1.bf16.msra.mxu0 0
          %3381 = vmatprep.subr.bf16.mxu0 0
          %3382 = vmatpush1.bf16.msra.mxu0 0
          %3383 = vmatprep.subr.bf16.mxu0 0
          %3384 = vmatpush1.bf16.msra.mxu0 0
          %3385 = vmatprep.subr.bf16.mxu0 0
          %3386 = vmatpush1.bf16.msra.mxu0 0
          %3387 = vmatprep.subr.bf16.mxu0 0
          %3388 = vmatpush1.bf16.msra.mxu0 %v3283
          %3389 = vmatprep.subr.bf16.mxu0 0
          %3390 = vmatpush1.bf16.msra.mxu0 %v3267
          %3391 = vmatprep.subr.bf16.mxu0 0
          %3392 = vmatpush1.bf16.msra.mxu0 %v3251
          %3393 = vmatprep.subr.bf16.mxu0 0
          %3394 = vmatpush1.bf16.msra.mxu0 %v3235
          %3395 = vmatprep.subr.bf16.mxu0 0
          %3396 = vmatpush2.bf16.msra.mxu0 0
          %3397 = vmatprep.subr.bf16.mxu0 0
          %3398 = vmatpush2.bf16.msra.mxu0 0
          %3399 = vmatprep.subr.bf16.mxu0 0
          %3400 = vmatpush2.bf16.msra.mxu0 0
          %3401 = vmatprep.subr.bf16.mxu0 0
          %3402 = vmatpush2.bf16.msra.mxu0 0
          %3403 = vmatprep.subr.bf16.mxu0 0
          %3404 = vmatpush2.bf16.msra.mxu0 0
          %3405 = vmatprep.subr.bf16.mxu0 0
          %3406 = vmatpush2.bf16.msra.mxu0 0
          %3407 = vmatprep.subr.bf16.mxu0 0
          %3408 = vmatpush2.bf16.msra.mxu0 0
          %3409 = vmatprep.subr.bf16.mxu0 0
          %3410 = vmatpush2.bf16.msra.mxu0 0
          %3411 = vmatprep.mubr.bf16.mxu0 0
          %3412 = vmatmul.mubr.bf16.gmra.mxu0 %v3368
          %v3413 = vpop.f32.mrf.mxu0
          %v3414 = vadd.f32 %v3310, %v3413
          %v3415 = vpop.f32.mrf.mxu0
          %v3416 = vpop.f32.mrf.mxu0
          %v3417 = vadd.f32 %v3315, %v3416
          %v3418 = vpop.f32.mrf.mxu0
          %3419 = vmatprep.mubr.bf16.mxu0 0
          %3420 = vmatmul.mubr.bf16.gmra.mxu0 %v3371
          %v3421 = vpop.f32.mrf.mxu0
          %v3422 = vadd.f32 %v3320, %v3421
          %v3423 = vpop.f32.mrf.mxu0
          %v3424 = vpop.f32.mrf.mxu0
          %v3425 = vadd.f32 %v3325, %v3424
          %v3426 = vpop.f32.mrf.mxu0
          %3427 = vmatprep.mubr.bf16.mxu0 0
          %3428 = vmatmul.mubr.bf16.gmra.mxu0 %v3374
          %v3429 = vpop.f32.mrf.mxu0
          %v3430 = vadd.f32 %v3330, %v3429
          %v3431 = vpop.f32.mrf.mxu0
          %v3432 = vpop.f32.mrf.mxu0
          %v3433 = vadd.f32 %v3335, %v3432
          %v3434 = vpop.f32.mrf.mxu0
          %3435 = vmatprep.mubr.bf16.mxu0 0
          %3436 = vmatmul.mubr.bf16.gmra.mxu0 %v3377
          %v3437 = vpop.f32.mrf.mxu0
          %v3438 = vadd.f32 %v3340, %v3437
          %v3439 = vpop.f32.mrf.mxu0
          %v3440 = vpop.f32.mrf.mxu0
          %v3441 = vadd.f32 %v3345, %v3440
          %v3442 = vpop.f32.mrf.mxu0
          %3443 = vdwg.mxu0
          %s3444 = smul.addr %s1198, 8
          %s3445 = scalar_lea.vmem %s438, %s3444
          %v3446 = vld [vmem:[%s3445] sm:$0xff]
          %v3447 = vld [vmem:[%s3445 + $0x10] sm:$0xff]
          %v3448 = vld [vmem:[%s3445 + $0x20] sm:$0xff]
          %v3449 = vld [vmem:[%s3445 + $0x30] sm:$0xff]
          %v3450 = vld [vmem:[%s3445 + $0x40] sm:$0xff]
          %v3451 = vld [vmem:[%s3445 + $0x50] sm:$0xff]
          %v3452 = vld [vmem:[%s3445 + $0x60] sm:$0xff]
          %v3453 = vld [vmem:[%s3445 + $0x70] sm:$0xff]
          %v3454 = vadd.f32 %v3446, %v3414
          %v3455 = vadd.f32 %v3447, %v3417
          %v3456 = vadd.f32 %v3448, %v3422
          %v3457 = vadd.f32 %v3449, %v3425
          %v3458 = vadd.f32 %v3450, %v3430
          %v3459 = vadd.f32 %v3451, %v3433
          %v3460 = vadd.f32 %v3452, %v3438
          %v3461 = vadd.f32 %v3453, %v3441
          %v3462 = vld [vmem:[%s7] sm:$0xff]
          %v3463 = vld [vmem:[%s7 + $0x8] sm:$0xff]
          %v3464 = vld [vmem:[%s7 + $0x10] sm:$0xff]
          %v3465 = vld [vmem:[%s7 + $0x18] sm:$0xff]
          %v3466 = vld [vmem:[%s7 + $0x20] sm:$0xff]
          %v3467 = vld [vmem:[%s7 + $0x28] sm:$0xff]
          %v3468 = vld [vmem:[%s7 + $0x30] sm:$0xff]
          %v3469 = vld [vmem:[%s7 + $0x38] sm:$0xff]
          %v3470 = vld [vmem:[%s8] sm:$0xff]
          %v3471 = vld [vmem:[%s8 + $0x8] sm:$0xff]
          %v3472 = vld [vmem:[%s8 + $0x10] sm:$0xff]
          %v3473 = vld [vmem:[%s8 + $0x18] sm:$0xff]
          %v3474 = vld [vmem:[%s8 + $0x20] sm:$0xff]
          %v3475 = vld [vmem:[%s8 + $0x28] sm:$0xff]
          %v3476 = vld [vmem:[%s8 + $0x30] sm:$0xff]
          %v3477 = vld [vmem:[%s8 + $0x38] sm:$0xff]
          %v3478 = vadd.f32 %v3454, %v3455
          %v3479 = vadd.f32 %v3478, %v3456
          %v3480 = vadd.f32 %v3479, %v3457
          %v3481 = vadd.f32 %v3480, %v3458
          %v3482 = vadd.f32 %v3481, %v3459
          %v3483 = vadd.f32 %v3482, %v3460
          %v3484 = vadd.f32 %v3483, %v3461
          %v3485 = vrot.slane %v3484, 4
          %v3486 = vadd.f32 %v3484, %v3485
          %v3487 = vrot.slane %v3486, 2
          %v3488 = vadd.f32 %v3486, %v3487
          %v3489 = vrot.slane %v3488, 1
          %v3490 = vadd.f32 %v3488, %v3489
          %v3491 = vmul.f32 %v3490, %v498
          %v3492 = vsub.f32 %v3454, %v3491
          %v3493 = vsub.f32 %v3455, %v3491
          %v3494 = vsub.f32 %v3456, %v3491
          %v3495 = vsub.f32 %v3457, %v3491
          %v3496 = vsub.f32 %v3458, %v3491
          %v3497 = vsub.f32 %v3459, %v3491
          %v3498 = vsub.f32 %v3460, %v3491
          %v3499 = vsub.f32 %v3461, %v3491
          %v3500 = vmul.f32 %v3492, %v3492
          %v3501 = vmul.f32 %v3493, %v3493
          %v3502 = vmul.f32 %v3494, %v3494
          %v3503 = vmul.f32 %v3495, %v3495
          %v3504 = vmul.f32 %v3496, %v3496
          %v3505 = vmul.f32 %v3497, %v3497
          %v3506 = vmul.f32 %v3498, %v3498
          %v3507 = vmul.f32 %v3499, %v3499
          %v3508 = vadd.f32 %v3500, %v3501
          %v3509 = vadd.f32 %v3508, %v3502
          %v3510 = vadd.f32 %v3509, %v3503
          %v3511 = vadd.f32 %v3510, %v3504
          %v3512 = vadd.f32 %v3511, %v3505
          %v3513 = vadd.f32 %v3512, %v3506
          %v3514 = vadd.f32 %v3513, %v3507
          %v3515 = vrot.slane %v3514, 4
          %v3516 = vadd.f32 %v3514, %v3515
          %v3517 = vrot.slane %v3516, 2
          %v3518 = vadd.f32 %v3516, %v3517
          %v3519 = vrot.slane %v3518, 1
          %v3520 = vadd.f32 %v3518, %v3519
          %v3521 = vmul.f32 %v3520, %v498
          %v3522 = vadd.f32 %v3521, 1e-06
          %v3523 = vrsqrt.pop %v3522
          %v3524 = vmul.f32 %v3492, %v3523
          %v3525 = vmul.f32 %v3493, %v3523
          %v3526 = vmul.f32 %v3494, %v3523
          %v3527 = vmul.f32 %v3495, %v3523
          %v3528 = vmul.f32 %v3496, %v3523
          %v3529 = vmul.f32 %v3497, %v3523
          %v3530 = vmul.f32 %v3498, %v3523
          %v3531 = vmul.f32 %v3499, %v3523
          %3533 = vset.pattern.permute.xlu0 0
          %3534 = vperm.xlu0 %3533, %v3462
          %v3535 = vpop.permute.xlu0 %3534
          %3538 = vset.pattern.permute.xlu0 0
          %3539 = vperm.xlu0 %3538, %v3463
          %v3540 = vpop.permute.xlu0 %3539
          %3543 = vset.pattern.permute.xlu0 0
          %3544 = vperm.xlu0 %3543, %v3464
          %v3545 = vpop.permute.xlu0 %3544
          %3548 = vset.pattern.permute.xlu0 0
          %3549 = vperm.xlu0 %3548, %v3465
          %v3550 = vpop.permute.xlu0 %3549
          %3553 = vset.pattern.permute.xlu0 0
          %3554 = vperm.xlu0 %3553, %v3466
          %v3555 = vpop.permute.xlu0 %3554
          %3558 = vset.pattern.permute.xlu0 0
          %3559 = vperm.xlu0 %3558, %v3467
          %v3560 = vpop.permute.xlu0 %3559
          %3563 = vset.pattern.permute.xlu0 0
          %3564 = vperm.xlu0 %3563, %v3468
          %v3565 = vpop.permute.xlu0 %3564
          %3568 = vset.pattern.permute.xlu0 0
          %3569 = vperm.xlu0 %3568, %v3469
          %v3570 = vpop.permute.xlu0 %3569
          %v3572 = vmul.f32 %v3524, %v3535
          %v3573 = vmul.f32 %v3525, %v3540
          %v3574 = vmul.f32 %v3526, %v3545
          %v3575 = vmul.f32 %v3527, %v3550
          %v3576 = vmul.f32 %v3528, %v3555
          %v3577 = vmul.f32 %v3529, %v3560
          %v3578 = vmul.f32 %v3530, %v3565
          %v3579 = vmul.f32 %v3531, %v3570
          %3581 = vset.pattern.permute.xlu0 0
          %3582 = vperm.xlu0 %3581, %v3470
          %v3583 = vpop.permute.xlu0 %3582
          %3586 = vset.pattern.permute.xlu0 0
          %3587 = vperm.xlu0 %3586, %v3471
          %v3588 = vpop.permute.xlu0 %3587
          %3591 = vset.pattern.permute.xlu0 0
          %3592 = vperm.xlu0 %3591, %v3472
          %v3593 = vpop.permute.xlu0 %3592
          %3596 = vset.pattern.permute.xlu0 0
          %3597 = vperm.xlu0 %3596, %v3473
          %v3598 = vpop.permute.xlu0 %3597
          %3601 = vset.pattern.permute.xlu0 0
          %3602 = vperm.xlu0 %3601, %v3474
          %v3603 = vpop.permute.xlu0 %3602
          %3606 = vset.pattern.permute.xlu0 0
          %3607 = vperm.xlu0 %3606, %v3475
          %v3608 = vpop.permute.xlu0 %3607
          %3611 = vset.pattern.permute.xlu0 0
          %3612 = vperm.xlu0 %3611, %v3476
          %v3613 = vpop.permute.xlu0 %3612
          %3616 = vset.pattern.permute.xlu0 0
          %3617 = vperm.xlu0 %3616, %v3477
          %v3618 = vpop.permute.xlu0 %3617
          %v3620 = vadd.f32 %v3572, %v3583
          %v3621 = vadd.f32 %v3573, %v3588
          %v3622 = vadd.f32 %v3574, %v3593
          %v3623 = vadd.f32 %v3575, %v3598
          %v3624 = vadd.f32 %v3576, %v3603
          %v3625 = vadd.f32 %v3577, %v3608
          %v3626 = vadd.f32 %v3578, %v3613
          %v3627 = vadd.f32 %v3579, %v3618
          %v3628 = vpack.c.bf16 %v3621, %v3620
          %v3629 = vpack.c.bf16 %v3623, %v3622
          %v3630 = vpack.c.bf16 %v3625, %v3624
          %v3631 = vpack.c.bf16 %v3627, %v3626
          %v3632 = vld [vmem:[%s9] sm:$0xf]
          %v3633 = vld [vmem:[%s9 + $0x4] sm:$0xf]
          %v3634 = vld [vmem:[%s9 + $0x8] sm:$0xf]
          %v3635 = vld [vmem:[%s9 + $0xc] sm:$0xf]
          %v3636 = vld [vmem:[%s9 + $0x10] sm:$0xf]
          %v3637 = vld [vmem:[%s9 + $0x14] sm:$0xf]
          %v3638 = vld [vmem:[%s9 + $0x18] sm:$0xf]
          %v3639 = vld [vmem:[%s9 + $0x1c] sm:$0xf]
          %v3640 = vld [vmem:[%s9 + $0x20] sm:$0xf]
          %v3641 = vld [vmem:[%s9 + $0x24] sm:$0xf]
          %v3642 = vld [vmem:[%s9 + $0x28] sm:$0xf]
          %v3643 = vld [vmem:[%s9 + $0x2c] sm:$0xf]
          %v3644 = vld [vmem:[%s9 + $0x30] sm:$0xf]
          %v3645 = vld [vmem:[%s9 + $0x34] sm:$0xf]
          %v3646 = vld [vmem:[%s9 + $0x38] sm:$0xf]
          %v3647 = vld [vmem:[%s9 + $0x3c] sm:$0xf]
          %v3648 = vld [vmem:[%s9 + $0x40] sm:$0xf]
          %v3649 = vld [vmem:[%s9 + $0x44] sm:$0xf]
          %v3650 = vld [vmem:[%s9 + $0x48] sm:$0xf]
          %v3651 = vld [vmem:[%s9 + $0x4c] sm:$0xf]
          %v3652 = vld [vmem:[%s9 + $0x50] sm:$0xf]
          %v3653 = vld [vmem:[%s9 + $0x54] sm:$0xf]
          %v3654 = vld [vmem:[%s9 + $0x58] sm:$0xf]
          %v3655 = vld [vmem:[%s9 + $0x5c] sm:$0xf]
          %v3656 = vld [vmem:[%s9 + $0x60] sm:$0xf]
          %v3657 = vld [vmem:[%s9 + $0x64] sm:$0xf]
          %v3658 = vld [vmem:[%s9 + $0x68] sm:$0xf]
          %v3659 = vld [vmem:[%s9 + $0x6c] sm:$0xf]
          %v3660 = vld [vmem:[%s9 + $0x70] sm:$0xf]
          %v3661 = vld [vmem:[%s9 + $0x74] sm:$0xf]
          %v3662 = vld [vmem:[%s9 + $0x78] sm:$0xf]
          %v3663 = vld [vmem:[%s9 + $0x7c] sm:$0xf]
          %v3664 = vld [vmem:[%s10] sm:$0xff]
          %v3665 = vld [vmem:[%s10 + $0x8] sm:$0xff]
          %v3666 = vld [vmem:[%s10 + $0x10] sm:$0xff]
          %v3667 = vld [vmem:[%s10 + $0x18] sm:$0xff]
          %v3668 = vld [vmem:[%s10 + $0x20] sm:$0xff]
          %v3669 = vld [vmem:[%s10 + $0x28] sm:$0xff]
          %v3670 = vld [vmem:[%s10 + $0x30] sm:$0xff]
          %v3671 = vld [vmem:[%s10 + $0x38] sm:$0xff]
          %v3672 = vld [vmem:[%s10 + $0x40] sm:$0xff]
          %v3673 = vld [vmem:[%s10 + $0x48] sm:$0xff]
          %v3674 = vld [vmem:[%s10 + $0x50] sm:$0xff]
          %v3675 = vld [vmem:[%s10 + $0x58] sm:$0xff]
          %v3676 = vld [vmem:[%s10 + $0x60] sm:$0xff]
          %v3677 = vld [vmem:[%s10 + $0x68] sm:$0xff]
          %v3678 = vld [vmem:[%s10 + $0x70] sm:$0xff]
          %v3679 = vld [vmem:[%s10 + $0x78] sm:$0xff]
          %v3680 = vld [vmem:[%s10 + $0x80] sm:$0xff]
          %v3681 = vld [vmem:[%s10 + $0x88] sm:$0xff]
          %v3682 = vld [vmem:[%s10 + $0x90] sm:$0xff]
          %v3683 = vld [vmem:[%s10 + $0x98] sm:$0xff]
          %v3684 = vld [vmem:[%s10 + $0xa0] sm:$0xff]
          %v3685 = vld [vmem:[%s10 + $0xa8] sm:$0xff]
          %v3686 = vld [vmem:[%s10 + $0xb0] sm:$0xff]
          %v3687 = vld [vmem:[%s10 + $0xb8] sm:$0xff]
          %v3688 = vld [vmem:[%s10 + $0xc0] sm:$0xff]
          %v3689 = vld [vmem:[%s10 + $0xc8] sm:$0xff]
          %v3690 = vld [vmem:[%s10 + $0xd0] sm:$0xff]
          %v3691 = vld [vmem:[%s10 + $0xd8] sm:$0xff]
          %v3692 = vld [vmem:[%s10 + $0xe0] sm:$0xff]
          %v3693 = vld [vmem:[%s10 + $0xe8] sm:$0xff]
          %v3694 = vld [vmem:[%s10 + $0xf0] sm:$0xff]
          %v3695 = vld [vmem:[%s10 + $0xf8] sm:$0xff]
          %3697 = vset.pattern.permute.xlu0 0
          %3698 = vperm.xlu0 %3697, %v3664
          %v3699 = vpop.permute.xlu0 %3698
          %3702 = vset.pattern.permute.xlu0 0
          %3703 = vperm.xlu0 %3702, %v3665
          %v3704 = vpop.permute.xlu0 %3703
          %3707 = vset.pattern.permute.xlu0 0
          %3708 = vperm.xlu0 %3707, %v3666
          %v3709 = vpop.permute.xlu0 %3708
          %3712 = vset.pattern.permute.xlu0 0
          %3713 = vperm.xlu0 %3712, %v3667
          %v3714 = vpop.permute.xlu0 %3713
          %3717 = vset.pattern.permute.xlu0 0
          %3718 = vperm.xlu0 %3717, %v3668
          %v3719 = vpop.permute.xlu0 %3718
          %3722 = vset.pattern.permute.xlu0 0
          %3723 = vperm.xlu0 %3722, %v3669
          %v3724 = vpop.permute.xlu0 %3723
          %3727 = vset.pattern.permute.xlu0 0
          %3728 = vperm.xlu0 %3727, %v3670
          %v3729 = vpop.permute.xlu0 %3728
          %3732 = vset.pattern.permute.xlu0 0
          %3733 = vperm.xlu0 %3732, %v3671
          %v3734 = vpop.permute.xlu0 %3733
          %3737 = vset.pattern.permute.xlu0 0
          %3738 = vperm.xlu0 %3737, %v3672
          %v3739 = vpop.permute.xlu0 %3738
          %3742 = vset.pattern.permute.xlu0 0
          %3743 = vperm.xlu0 %3742, %v3673
          %v3744 = vpop.permute.xlu0 %3743
          %3747 = vset.pattern.permute.xlu0 0
          %3748 = vperm.xlu0 %3747, %v3674
          %v3749 = vpop.permute.xlu0 %3748
          %3752 = vset.pattern.permute.xlu0 0
          %3753 = vperm.xlu0 %3752, %v3675
          %v3754 = vpop.permute.xlu0 %3753
          %3757 = vset.pattern.permute.xlu0 0
          %3758 = vperm.xlu0 %3757, %v3676
          %v3759 = vpop.permute.xlu0 %3758
          %3762 = vset.pattern.permute.xlu0 0
          %3763 = vperm.xlu0 %3762, %v3677
          %v3764 = vpop.permute.xlu0 %3763
          %3767 = vset.pattern.permute.xlu0 0
          %3768 = vperm.xlu0 %3767, %v3678
          %v3769 = vpop.permute.xlu0 %3768
          %3772 = vset.pattern.permute.xlu0 0
          %3773 = vperm.xlu0 %3772, %v3679
          %v3774 = vpop.permute.xlu0 %3773
          %3777 = vset.pattern.permute.xlu0 0
          %3778 = vperm.xlu0 %3777, %v3680
          %v3779 = vpop.permute.xlu0 %3778
          %3782 = vset.pattern.permute.xlu0 0
          %3783 = vperm.xlu0 %3782, %v3681
          %v3784 = vpop.permute.xlu0 %3783
          %3787 = vset.pattern.permute.xlu0 0
          %3788 = vperm.xlu0 %3787, %v3682
          %v3789 = vpop.permute.xlu0 %3788
          %3792 = vset.pattern.permute.xlu0 0
          %3793 = vperm.xlu0 %3792, %v3683
          %v3794 = vpop.permute.xlu0 %3793
          %3797 = vset.pattern.permute.xlu0 0
          %3798 = vperm.xlu0 %3797, %v3684
          %v3799 = vpop.permute.xlu0 %3798
          %3802 = vset.pattern.permute.xlu0 0
          %3803 = vperm.xlu0 %3802, %v3685
          %v3804 = vpop.permute.xlu0 %3803
          %3807 = vset.pattern.permute.xlu0 0
          %3808 = vperm.xlu0 %3807, %v3686
          %v3809 = vpop.permute.xlu0 %3808
          %3812 = vset.pattern.permute.xlu0 0
          %3813 = vperm.xlu0 %3812, %v3687
          %v3814 = vpop.permute.xlu0 %3813
          %3817 = vset.pattern.permute.xlu0 0
          %3818 = vperm.xlu0 %3817, %v3688
          %v3819 = vpop.permute.xlu0 %3818
          %3822 = vset.pattern.permute.xlu0 0
          %3823 = vperm.xlu0 %3822, %v3689
          %v3824 = vpop.permute.xlu0 %3823
          %3827 = vset.pattern.permute.xlu0 0
          %3828 = vperm.xlu0 %3827, %v3690
          %v3829 = vpop.permute.xlu0 %3828
          %3832 = vset.pattern.permute.xlu0 0
          %3833 = vperm.xlu0 %3832, %v3691
          %v3834 = vpop.permute.xlu0 %3833
          %3837 = vset.pattern.permute.xlu0 0
          %3838 = vperm.xlu0 %3837, %v3692
          %v3839 = vpop.permute.xlu0 %3838
          %3842 = vset.pattern.permute.xlu0 0
          %3843 = vperm.xlu0 %3842, %v3693
          %v3844 = vpop.permute.xlu0 %3843
          %3847 = vset.pattern.permute.xlu0 0
          %3848 = vperm.xlu0 %3847, %v3694
          %v3849 = vpop.permute.xlu0 %3848
          %3852 = vset.pattern.permute.xlu0 0
          %3853 = vperm.xlu0 %3852, %v3695
          %v3854 = vpop.permute.xlu0 %3853
          %v3888 = vunpack.c.l.b16 %v3632
          %v3889 = vunpack.c.l.b16 %v3633
          %v3890 = vunpack.c.l.b16 %v3634
          %v3891 = vunpack.c.l.b16 %v3635
          %v3892 = vunpack.c.l.b16 %v3636
          %v3893 = vunpack.c.l.b16 %v3637
          %v3894 = vunpack.c.l.b16 %v3638
          %v3895 = vunpack.c.l.b16 %v3639
          %v3896 = vunpack.c.l.b16 %v3640
          %v3897 = vunpack.c.l.b16 %v3641
          %v3898 = vunpack.c.l.b16 %v3642
          %v3899 = vunpack.c.l.b16 %v3643
          %v3900 = vunpack.c.l.b16 %v3644
          %v3901 = vunpack.c.l.b16 %v3645
          %v3902 = vunpack.c.l.b16 %v3646
          %v3903 = vunpack.c.l.b16 %v3647
          %v3904 = vunpack.c.l.b16 %v3648
          %v3905 = vunpack.c.l.b16 %v3649
          %v3906 = vunpack.c.l.b16 %v3650
          %v3907 = vunpack.c.l.b16 %v3651
          %v3908 = vunpack.c.l.b16 %v3652
          %v3909 = vunpack.c.l.b16 %v3653
          %v3910 = vunpack.c.l.b16 %v3654
          %v3911 = vunpack.c.l.b16 %v3655
          %v3912 = vunpack.c.l.b16 %v3656
          %v3913 = vunpack.c.l.b16 %v3657
          %v3914 = vunpack.c.l.b16 %v3658
          %v3915 = vunpack.c.l.b16 %v3659
          %v3916 = vunpack.c.l.b16 %v3660
          %v3917 = vunpack.c.l.b16 %v3661
          %v3918 = vunpack.c.l.b16 %v3662
          %v3919 = vunpack.c.l.b16 %v3663
          %v3920 = vpack.c.b16 %v3889, %v3888
          %v3921 = vpack.c.b16 %v3891, %v3890
          %v3922 = vpack.c.b16 %v3893, %v3892
          %v3923 = vpack.c.b16 %v3895, %v3894
          %v3924 = vpack.c.b16 %v3897, %v3896
          %v3925 = vpack.c.b16 %v3899, %v3898
          %v3926 = vpack.c.b16 %v3901, %v3900
          %v3927 = vpack.c.b16 %v3903, %v3902
          %v3928 = vpack.c.b16 %v3905, %v3904
          %v3929 = vpack.c.b16 %v3907, %v3906
          %v3930 = vpack.c.b16 %v3909, %v3908
          %v3931 = vpack.c.b16 %v3911, %v3910
          %v3932 = vpack.c.b16 %v3913, %v3912
          %v3933 = vpack.c.b16 %v3915, %v3914
          %v3934 = vpack.c.b16 %v3917, %v3916
          %v3935 = vpack.c.b16 %v3919, %v3918
          %v3937 = vsel %vm929, %v3920, 0
          %v3940 = vsel %vm929, %v3921, 0
          %v3943 = vsel %vm929, %v3922, 0
          %v3946 = vsel %vm929, %v3923, 0
          %v3949 = vsel %vm929, %v3924, 0
          %v3952 = vsel %vm929, %v3925, 0
          %v3955 = vsel %vm929, %v3926, 0
          %v3958 = vsel %vm929, %v3927, 0
          %v3961 = vsel %vm929, %v3928, 0
          %v3964 = vsel %vm929, %v3929, 0
          %v3967 = vsel %vm929, %v3930, 0
          %v3970 = vsel %vm929, %v3931, 0
          %v3973 = vsel %vm929, %v3932, 0
          %v3976 = vsel %vm929, %v3933, 0
          %v3979 = vsel %vm929, %v3934, 0
          %v3982 = vsel %vm929, %v3935, 0
          %3984 = vmatprep.subr.bf16.mxu0 0
          %3985 = vmatpush1.bf16.msra.mxu0 0
          %3986 = vmatprep.subr.bf16.mxu0 0
          %3987 = vmatpush1.bf16.msra.mxu0 0
          %3988 = vmatprep.subr.bf16.mxu0 0
          %3989 = vmatpush1.bf16.msra.mxu0 0
          %3990 = vmatprep.subr.bf16.mxu0 0
          %3991 = vmatpush1.bf16.msra.mxu0 0
          %3992 = vmatprep.subr.bf16.mxu0 0
          %3993 = vmatpush1.bf16.msra.mxu0 %v3631
          %3994 = vmatprep.subr.bf16.mxu0 0
          %3995 = vmatpush1.bf16.msra.mxu0 %v3630
          %3996 = vmatprep.subr.bf16.mxu0 0
          %3997 = vmatpush1.bf16.msra.mxu0 %v3629
          %3998 = vmatprep.subr.bf16.mxu0 0
          %3999 = vmatpush1.bf16.msra.mxu0 %v3628
          %4000 = vmatprep.subr.bf16.mxu0 0
          %4001 = vmatpush2.bf16.msra.mxu0 0
          %4002 = vmatprep.subr.bf16.mxu0 0
          %4003 = vmatpush2.bf16.msra.mxu0 0
          %4004 = vmatprep.subr.bf16.mxu0 0
          %4005 = vmatpush2.bf16.msra.mxu0 0
          %4006 = vmatprep.subr.bf16.mxu0 0
          %4007 = vmatpush2.bf16.msra.mxu0 0
          %4008 = vmatprep.subr.bf16.mxu0 0
          %4009 = vmatpush2.bf16.msra.mxu0 0
          %4010 = vmatprep.subr.bf16.mxu0 0
          %4011 = vmatpush2.bf16.msra.mxu0 0
          %4012 = vmatprep.subr.bf16.mxu0 0
          %4013 = vmatpush2.bf16.msra.mxu0 0
          %4014 = vmatprep.subr.bf16.mxu0 0
          %4015 = vmatpush2.bf16.msra.mxu0 0
          %4016 = vmatprep.mubr.bf16.mxu0 0
          %4017 = vmatmul.mubr.bf16.gmra.mxu0 %v3937
          %v4018 = vpop.f32.mrf.mxu0
          %v4019 = vadd.f32 %v3699, %v4018
          %v4020 = vpop.f32.mrf.mxu0
          %v4021 = vpop.f32.mrf.mxu0
          %v4022 = vadd.f32 %v3704, %v4021
          %v4023 = vpop.f32.mrf.mxu0
          %4024 = vmatprep.mubr.bf16.mxu0 0
          %4025 = vmatmul.mubr.bf16.gmra.mxu0 %v3940
          %v4026 = vpop.f32.mrf.mxu0
          %v4027 = vadd.f32 %v3709, %v4026
          %v4028 = vpop.f32.mrf.mxu0
          %v4029 = vpop.f32.mrf.mxu0
          %v4030 = vadd.f32 %v3714, %v4029
          %v4031 = vpop.f32.mrf.mxu0
          %4032 = vmatprep.mubr.bf16.mxu0 0
          %4033 = vmatmul.mubr.bf16.gmra.mxu0 %v3943
          %v4034 = vpop.f32.mrf.mxu0
          %v4035 = vadd.f32 %v3719, %v4034
          %v4036 = vpop.f32.mrf.mxu0
          %v4037 = vpop.f32.mrf.mxu0
          %v4038 = vadd.f32 %v3724, %v4037
          %v4039 = vpop.f32.mrf.mxu0
          %4040 = vmatprep.mubr.bf16.mxu0 0
          %4041 = vmatmul.mubr.bf16.gmra.mxu0 %v3946
          %v4042 = vpop.f32.mrf.mxu0
          %v4043 = vadd.f32 %v3729, %v4042
          %v4044 = vpop.f32.mrf.mxu0
          %v4045 = vpop.f32.mrf.mxu0
          %v4046 = vadd.f32 %v3734, %v4045
          %v4047 = vpop.f32.mrf.mxu0
          %4048 = vmatprep.mubr.bf16.mxu0 0
          %4049 = vmatmul.mubr.bf16.gmra.mxu0 %v3949
          %v4050 = vpop.f32.mrf.mxu0
          %v4051 = vadd.f32 %v3739, %v4050
          %v4052 = vpop.f32.mrf.mxu0
          %v4053 = vpop.f32.mrf.mxu0
          %v4054 = vadd.f32 %v3744, %v4053
          %v4055 = vpop.f32.mrf.mxu0
          %4056 = vmatprep.mubr.bf16.mxu0 0
          %4057 = vmatmul.mubr.bf16.gmra.mxu0 %v3952
          %v4058 = vpop.f32.mrf.mxu0
          %v4059 = vadd.f32 %v3749, %v4058
          %v4060 = vpop.f32.mrf.mxu0
          %v4061 = vpop.f32.mrf.mxu0
          %v4062 = vadd.f32 %v3754, %v4061
          %v4063 = vpop.f32.mrf.mxu0
          %4064 = vmatprep.mubr.bf16.mxu0 0
          %4065 = vmatmul.mubr.bf16.gmra.mxu0 %v3955
          %v4066 = vpop.f32.mrf.mxu0
          %v4067 = vadd.f32 %v3759, %v4066
          %v4068 = vpop.f32.mrf.mxu0
          %v4069 = vpop.f32.mrf.mxu0
          %v4070 = vadd.f32 %v3764, %v4069
          %v4071 = vpop.f32.mrf.mxu0
          %4072 = vmatprep.mubr.bf16.mxu0 0
          %4073 = vmatmul.mubr.bf16.gmra.mxu0 %v3958
          %v4074 = vpop.f32.mrf.mxu0
          %v4075 = vadd.f32 %v3769, %v4074
          %v4076 = vpop.f32.mrf.mxu0
          %v4077 = vpop.f32.mrf.mxu0
          %v4078 = vadd.f32 %v3774, %v4077
          %v4079 = vpop.f32.mrf.mxu0
          %4080 = vmatprep.mubr.bf16.mxu0 0
          %4081 = vmatmul.mubr.bf16.gmra.mxu0 %v3961
          %v4082 = vpop.f32.mrf.mxu0
          %v4083 = vadd.f32 %v3779, %v4082
          %v4084 = vpop.f32.mrf.mxu0
          %v4085 = vpop.f32.mrf.mxu0
          %v4086 = vadd.f32 %v3784, %v4085
          %v4087 = vpop.f32.mrf.mxu0
          %4088 = vmatprep.mubr.bf16.mxu0 0
          %4089 = vmatmul.mubr.bf16.gmra.mxu0 %v3964
          %v4090 = vpop.f32.mrf.mxu0
          %v4091 = vadd.f32 %v3789, %v4090
          %v4092 = vpop.f32.mrf.mxu0
          %v4093 = vpop.f32.mrf.mxu0
          %v4094 = vadd.f32 %v3794, %v4093
          %v4095 = vpop.f32.mrf.mxu0
          %4096 = vmatprep.mubr.bf16.mxu0 0
          %4097 = vmatmul.mubr.bf16.gmra.mxu0 %v3967
          %v4098 = vpop.f32.mrf.mxu0
          %v4099 = vadd.f32 %v3799, %v4098
          %v4100 = vpop.f32.mrf.mxu0
          %v4101 = vpop.f32.mrf.mxu0
          %v4102 = vadd.f32 %v3804, %v4101
          %v4103 = vpop.f32.mrf.mxu0
          %4104 = vmatprep.mubr.bf16.mxu0 0
          %4105 = vmatmul.mubr.bf16.gmra.mxu0 %v3970
          %v4106 = vpop.f32.mrf.mxu0
          %v4107 = vadd.f32 %v3809, %v4106
          %v4108 = vpop.f32.mrf.mxu0
          %v4109 = vpop.f32.mrf.mxu0
          %v4110 = vadd.f32 %v3814, %v4109
          %v4111 = vpop.f32.mrf.mxu0
          %4112 = vmatprep.mubr.bf16.mxu0 0
          %4113 = vmatmul.mubr.bf16.gmra.mxu0 %v3973
          %v4114 = vpop.f32.mrf.mxu0
          %v4115 = vadd.f32 %v3819, %v4114
          %v4116 = vpop.f32.mrf.mxu0
          %v4117 = vpop.f32.mrf.mxu0
          %v4118 = vadd.f32 %v3824, %v4117
          %v4119 = vpop.f32.mrf.mxu0
          %4120 = vmatprep.mubr.bf16.mxu0 0
          %4121 = vmatmul.mubr.bf16.gmra.mxu0 %v3976
          %v4122 = vpop.f32.mrf.mxu0
          %v4123 = vadd.f32 %v3829, %v4122
          %v4124 = vpop.f32.mrf.mxu0
          %v4125 = vpop.f32.mrf.mxu0
          %v4126 = vadd.f32 %v3834, %v4125
          %v4127 = vpop.f32.mrf.mxu0
          %4128 = vmatprep.mubr.bf16.mxu0 0
          %4129 = vmatmul.mubr.bf16.gmra.mxu0 %v3979
          %v4130 = vpop.f32.mrf.mxu0
          %v4131 = vadd.f32 %v3839, %v4130
          %v4132 = vpop.f32.mrf.mxu0
          %v4133 = vpop.f32.mrf.mxu0
          %v4134 = vadd.f32 %v3844, %v4133
          %v4135 = vpop.f32.mrf.mxu0
          %4136 = vmatprep.mubr.bf16.mxu0 0
          %4137 = vmatmul.mubr.bf16.gmra.mxu0 %v3982
          %v4138 = vpop.f32.mrf.mxu0
          %v4139 = vadd.f32 %v3849, %v4138
          %v4140 = vpop.f32.mrf.mxu0
          %v4141 = vpop.f32.mrf.mxu0
          %v4142 = vadd.f32 %v3854, %v4141
          %v4143 = vpop.f32.mrf.mxu0
          %4144 = vdwg.mxu0
          %v4145 = vmul.f32 %v4019, 0.5
          %v4146 = vmul.f32 %v4022, 0.5
          %v4147 = vmul.f32 %v4027, 0.5
          %v4148 = vmul.f32 %v4030, 0.5
          %v4149 = vmul.f32 %v4035, 0.5
          %v4150 = vmul.f32 %v4038, 0.5
          %v4151 = vmul.f32 %v4043, 0.5
          %v4152 = vmul.f32 %v4046, 0.5
          %v4153 = vmul.f32 %v4051, 0.5
          %v4154 = vmul.f32 %v4054, 0.5
          %v4155 = vmul.f32 %v4059, 0.5
          %v4156 = vmul.f32 %v4062, 0.5
          %v4157 = vmul.f32 %v4067, 0.5
          %v4158 = vmul.f32 %v4070, 0.5
          %v4159 = vmul.f32 %v4075, 0.5
          %v4160 = vmul.f32 %v4078, 0.5
          %v4161 = vmul.f32 %v4083, 0.5
          %v4162 = vmul.f32 %v4086, 0.5
          %v4163 = vmul.f32 %v4091, 0.5
          %v4164 = vmul.f32 %v4094, 0.5
          %v4165 = vmul.f32 %v4099, 0.5
          %v4166 = vmul.f32 %v4102, 0.5
          %v4167 = vmul.f32 %v4107, 0.5
          %v4168 = vmul.f32 %v4110, 0.5
          %v4169 = vmul.f32 %v4115, 0.5
          %v4170 = vmul.f32 %v4118, 0.5
          %v4171 = vmul.f32 %v4123, 0.5
          %v4172 = vmul.f32 %v4126, 0.5
          %v4173 = vmul.f32 %v4131, 0.5
          %v4174 = vmul.f32 %v4134, 0.5
          %v4175 = vmul.f32 %v4139, 0.5
          %v4176 = vmul.f32 %v4142, 0.5
          %v4177 = vmul.f32 %v4019, 0.70710677
          %v4178 = vmul.f32 %v4022, 0.70710677
          %v4179 = vmul.f32 %v4027, 0.70710677
          %v4180 = vmul.f32 %v4030, 0.70710677
          %v4181 = vmul.f32 %v4035, 0.70710677
          %v4182 = vmul.f32 %v4038, 0.70710677
          %v4183 = vmul.f32 %v4043, 0.70710677
          %v4184 = vmul.f32 %v4046, 0.70710677
          %v4185 = vmul.f32 %v4051, 0.70710677
          %v4186 = vmul.f32 %v4054, 0.70710677
          %v4187 = vmul.f32 %v4059, 0.70710677
          %v4188 = vmul.f32 %v4062, 0.70710677
          %v4189 = vmul.f32 %v4067, 0.70710677
          %v4190 = vmul.f32 %v4070, 0.70710677
          %v4191 = vmul.f32 %v4075, 0.70710677
          %v4192 = vmul.f32 %v4078, 0.70710677
          %v4193 = vmul.f32 %v4083, 0.70710677
          %v4194 = vmul.f32 %v4086, 0.70710677
          %v4195 = vmul.f32 %v4091, 0.70710677
          %v4196 = vmul.f32 %v4094, 0.70710677
          %v4197 = vmul.f32 %v4099, 0.70710677
          %v4198 = vmul.f32 %v4102, 0.70710677
          %v4199 = vmul.f32 %v4107, 0.70710677
          %v4200 = vmul.f32 %v4110, 0.70710677
          %v4201 = vmul.f32 %v4115, 0.70710677
          %v4202 = vmul.f32 %v4118, 0.70710677
          %v4203 = vmul.f32 %v4123, 0.70710677
          %v4204 = vmul.f32 %v4126, 0.70710677
          %v4205 = vmul.f32 %v4131, 0.70710677
          %v4206 = vmul.f32 %v4134, 0.70710677
          %v4207 = vmul.f32 %v4139, 0.70710677
          %v4208 = vmul.f32 %v4142, 0.70710677
          %v4209 = verf.f32.pop %v4177
          %v4210 = verf.f32.pop %v4178
          %v4211 = verf.f32.pop %v4179
          %v4212 = verf.f32.pop %v4180
          %v4213 = verf.f32.pop %v4181
          %v4214 = verf.f32.pop %v4182
          %v4215 = verf.f32.pop %v4183
          %v4216 = verf.f32.pop %v4184
          %v4217 = verf.f32.pop %v4185
          %v4218 = verf.f32.pop %v4186
          %v4219 = verf.f32.pop %v4187
          %v4220 = verf.f32.pop %v4188
          %v4221 = verf.f32.pop %v4189
          %v4222 = verf.f32.pop %v4190
          %v4223 = verf.f32.pop %v4191
          %v4224 = verf.f32.pop %v4192
          %v4225 = verf.f32.pop %v4193
          %v4226 = verf.f32.pop %v4194
          %v4227 = verf.f32.pop %v4195
          %v4228 = verf.f32.pop %v4196
          %v4229 = verf.f32.pop %v4197
          %v4230 = verf.f32.pop %v4198
          %v4231 = verf.f32.pop %v4199
          %v4232 = verf.f32.pop %v4200
          %v4233 = verf.f32.pop %v4201
          %v4234 = verf.f32.pop %v4202
          %v4235 = verf.f32.pop %v4203
          %v4236 = verf.f32.pop %v4204
          %v4237 = verf.f32.pop %v4205
          %v4238 = verf.f32.pop %v4206
          %v4239 = verf.f32.pop %v4207
          %v4240 = verf.f32.pop %v4208
          %v4241 = vadd.f32 %v4209, 1.0
          %v4242 = vadd.f32 %v4210, 1.0
          %v4243 = vadd.f32 %v4211, 1.0
          %v4244 = vadd.f32 %v4212, 1.0
          %v4245 = vadd.f32 %v4213, 1.0
          %v4246 = vadd.f32 %v4214, 1.0
          %v4247 = vadd.f32 %v4215, 1.0
          %v4248 = vadd.f32 %v4216, 1.0
          %v4249 = vadd.f32 %v4217, 1.0
          %v4250 = vadd.f32 %v4218, 1.0
          %v4251 = vadd.f32 %v4219, 1.0
          %v4252 = vadd.f32 %v4220, 1.0
          %v4253 = vadd.f32 %v4221, 1.0
          %v4254 = vadd.f32 %v4222, 1.0
          %v4255 = vadd.f32 %v4223, 1.0
          %v4256 = vadd.f32 %v4224, 1.0
          %v4257 = vadd.f32 %v4225, 1.0
          %v4258 = vadd.f32 %v4226, 1.0
          %v4259 = vadd.f32 %v4227, 1.0
          %v4260 = vadd.f32 %v4228, 1.0
          %v4261 = vadd.f32 %v4229, 1.0
          %v4262 = vadd.f32 %v4230, 1.0
          %v4263 = vadd.f32 %v4231, 1.0
          %v4264 = vadd.f32 %v4232, 1.0
          %v4265 = vadd.f32 %v4233, 1.0
          %v4266 = vadd.f32 %v4234, 1.0
          %v4267 = vadd.f32 %v4235, 1.0
          %v4268 = vadd.f32 %v4236, 1.0
          %v4269 = vadd.f32 %v4237, 1.0
          %v4270 = vadd.f32 %v4238, 1.0
          %v4271 = vadd.f32 %v4239, 1.0
          %v4272 = vadd.f32 %v4240, 1.0
          %v4273 = vmul.f32 %v4145, %v4241
          %v4274 = vmul.f32 %v4146, %v4242
          %v4275 = vmul.f32 %v4147, %v4243
          %v4276 = vmul.f32 %v4148, %v4244
          %v4277 = vmul.f32 %v4149, %v4245
          %v4278 = vmul.f32 %v4150, %v4246
          %v4279 = vmul.f32 %v4151, %v4247
          %v4280 = vmul.f32 %v4152, %v4248
          %v4281 = vmul.f32 %v4153, %v4249
          %v4282 = vmul.f32 %v4154, %v4250
          %v4283 = vmul.f32 %v4155, %v4251
          %v4284 = vmul.f32 %v4156, %v4252
          %v4285 = vmul.f32 %v4157, %v4253
          %v4286 = vmul.f32 %v4158, %v4254
          %v4287 = vmul.f32 %v4159, %v4255
          %v4288 = vmul.f32 %v4160, %v4256
          %v4289 = vmul.f32 %v4161, %v4257
          %v4290 = vmul.f32 %v4162, %v4258
          %v4291 = vmul.f32 %v4163, %v4259
          %v4292 = vmul.f32 %v4164, %v4260
          %v4293 = vmul.f32 %v4165, %v4261
          %v4294 = vmul.f32 %v4166, %v4262
          %v4295 = vmul.f32 %v4167, %v4263
          %v4296 = vmul.f32 %v4168, %v4264
          %v4297 = vmul.f32 %v4169, %v4265
          %v4298 = vmul.f32 %v4170, %v4266
          %v4299 = vmul.f32 %v4171, %v4267
          %v4300 = vmul.f32 %v4172, %v4268
          %v4301 = vmul.f32 %v4173, %v4269
          %v4302 = vmul.f32 %v4174, %v4270
          %v4303 = vmul.f32 %v4175, %v4271
          %v4304 = vmul.f32 %v4176, %v4272
          %v4305 = vld [vmem:[%s11] sm:$0xff]
          %v4306 = vld [vmem:[%s11 + $0x8] sm:$0xff]
          %v4307 = vld [vmem:[%s11 + $0x10] sm:$0xff]
          %v4308 = vld [vmem:[%s11 + $0x18] sm:$0xff]
          %v4309 = vpack.c.bf16 %v4274, %v4273
          %v4310 = vpack.c.bf16 %v4276, %v4275
          %v4311 = vpack.c.bf16 %v4278, %v4277
          %v4312 = vpack.c.bf16 %v4280, %v4279
          %v4313 = vpack.c.bf16 %v4282, %v4281
          %v4314 = vpack.c.bf16 %v4284, %v4283
          %v4315 = vpack.c.bf16 %v4286, %v4285
          %v4316 = vpack.c.bf16 %v4288, %v4287
          %v4317 = vpack.c.bf16 %v4290, %v4289
          %v4318 = vpack.c.bf16 %v4292, %v4291
          %v4319 = vpack.c.bf16 %v4294, %v4293
          %v4320 = vpack.c.bf16 %v4296, %v4295
          %v4321 = vpack.c.bf16 %v4298, %v4297
          %v4322 = vpack.c.bf16 %v4300, %v4299
          %v4323 = vpack.c.bf16 %v4302, %v4301
          %v4324 = vpack.c.bf16 %v4304, %v4303
          %v4325 = vld [vmem:[%s12] sm:$0xff]
          %v4326 = vld [vmem:[%s12 + $0x8] sm:$0xff]
          %v4327 = vld [vmem:[%s12 + $0x10] sm:$0xff]
          %v4328 = vld [vmem:[%s12 + $0x18] sm:$0xff]
          %4330 = vset.pattern.permute.xlu0 0
          %4331 = vperm.xlu0 %4330, %v4325
          %v4332 = vpop.permute.xlu0 %4331
          %4335 = vset.pattern.permute.xlu0 0
          %4336 = vperm.xlu0 %4335, %v4326
          %v4337 = vpop.permute.xlu0 %4336
          %4340 = vset.pattern.permute.xlu0 0
          %4341 = vperm.xlu0 %4340, %v4327
          %v4342 = vpop.permute.xlu0 %4341
          %4345 = vset.pattern.permute.xlu0 0
          %4346 = vperm.xlu0 %4345, %v4328
          %v4347 = vpop.permute.xlu0 %4346
          %v4353 = vunpack.c.l.b16 %v4305
          %v4354 = vunpack.c.h.b16 %v4305
          %v4355 = vunpack.c.l.b16 %v4306
          %v4356 = vunpack.c.h.b16 %v4306
          %v4357 = vunpack.c.l.b16 %v4307
          %v4358 = vunpack.c.h.b16 %v4307
          %v4359 = vunpack.c.l.b16 %v4308
          %v4360 = vunpack.c.h.b16 %v4308
          %v4361 = vpack.c.b16 %v4355, %v4353
          %v4362 = vpack.c.b16 %v4356, %v4354
          %v4363 = vpack.c.b16 %v4359, %v4357
          %v4364 = vpack.c.b16 %v4360, %v4358
          %4369 = vmatprep.subr.bf16.mxu0 0
          %4370 = vmatpush1.bf16.msra.mxu0 %v4316
          %4371 = vmatprep.subr.bf16.mxu0 0
          %4372 = vmatpush1.bf16.msra.mxu0 %v4315
          %4373 = vmatprep.subr.bf16.mxu0 0
          %4374 = vmatpush1.bf16.msra.mxu0 %v4314
          %4375 = vmatprep.subr.bf16.mxu0 0
          %4376 = vmatpush1.bf16.msra.mxu0 %v4313
          %4377 = vmatprep.subr.bf16.mxu0 0
          %4378 = vmatpush1.bf16.msra.mxu0 %v4312
          %4379 = vmatprep.subr.bf16.mxu0 0
          %4380 = vmatpush1.bf16.msra.mxu0 %v4311
          %4381 = vmatprep.subr.bf16.mxu0 0
          %4382 = vmatpush1.bf16.msra.mxu0 %v4310
          %4383 = vmatprep.subr.bf16.mxu0 0
          %4384 = vmatpush1.bf16.msra.mxu0 %v4309
          %4385 = vmatprep.subr.bf16.mxu0 0
          %4386 = vmatpush2.bf16.msra.mxu0 %v4324
          %4387 = vmatprep.subr.bf16.mxu0 0
          %4388 = vmatpush2.bf16.msra.mxu0 %v4323
          %4389 = vmatprep.subr.bf16.mxu0 0
          %4390 = vmatpush2.bf16.msra.mxu0 %v4322
          %4391 = vmatprep.subr.bf16.mxu0 0
          %4392 = vmatpush2.bf16.msra.mxu0 %v4321
          %4393 = vmatprep.subr.bf16.mxu0 0
          %4394 = vmatpush2.bf16.msra.mxu0 %v4320
          %4395 = vmatprep.subr.bf16.mxu0 0
          %4396 = vmatpush2.bf16.msra.mxu0 %v4319
          %4397 = vmatprep.subr.bf16.mxu0 0
          %4398 = vmatpush2.bf16.msra.mxu0 %v4318
          %4399 = vmatprep.subr.bf16.mxu0 0
          %4400 = vmatpush2.bf16.msra.mxu0 %v4317
          %4401 = vmatprep.mubr.bf16.mxu0 %v4362
          %4402 = vmatmul.mubr.bf16.gmra.mxu0 %v4361
          %v4403 = vpop.f32.mrf.mxu0
          %v4404 = vadd.f32 %v4332, %v4403
          %v4405 = vpop.f32.mrf.mxu0
          %v4406 = vpop.f32.mrf.mxu0
          %v4407 = vadd.f32 %v4337, %v4406
          %v4408 = vpop.f32.mrf.mxu0
          %4409 = vmatprep.mubr.bf16.mxu0 %v4364
          %4410 = vmatmul.mubr.bf16.gmra.mxu0 %v4363
          %v4411 = vpop.f32.mrf.mxu0
          %v4412 = vadd.f32 %v4342, %v4411
          %v4413 = vpop.f32.mrf.mxu0
          %v4414 = vpop.f32.mrf.mxu0
          %v4415 = vadd.f32 %v4347, %v4414
          %v4416 = vpop.f32.mrf.mxu0
          %4417 = vdwg.mxu0
          %s4418 = smul.addr %s1198, 8
          %s4419 = scalar_lea.vmem %s433, %s4418 [#allocation3]
          %4420 = vst [vmem:[%s4419] sm:$0xff] %v4404
          %4421 = vst [vmem:[%s4419 + $0x10] sm:$0xff] %v4407
          %4422 = vst [vmem:[%s4419 + $0x20] sm:$0xff] %v4412
          %4423 = vst [vmem:[%s4419 + $0x30] sm:$0xff] %v4415
        $region77: #{tpu_custom_call.1} parent=71 // loop_footer
          %s1196 = sadd.s32 1, %s1192
        $region78: #{tpu_custom_call.1} parent=71 // loop_footer_branch
          %1191 = sbr.rel target = $region74
        $region79: #{tpu_custom_call.1} parent=71 // loop_exit
          _
        %s4424 = sand.u32 %s313, 1
        %s4425 = scalar_lea.sflag [#allocation4], %s4424
        %s4426 = sand.u32 %s313, 1
        %s4427 = smul.addr %s4426, 64
        %s4428 = scalar_lea.vmem [#allocation3], %s4427
        // Predicated region
        $region80: #{tpu_custom_call.1} parent=71 // pred_check
          %p4429 = pneg %p323
        $region81: #{tpu_custom_call.1} parent=71 // pred_check_branch
          %4431 = sbr.rel (%p4429) target = $region83
        $region82: #{tpu_custom_call.1} parent=71 // pred_region
          %s4433 = ssub.s32 1024, 1024
          %4434 = vsyncadd %s4425, %s4433
          %s4435 = smul.addr %s27, 8
          %s4436 = smul.addr %s4435, 128
          %s4437 = scalar_lea.hbm %s13, %s4436
          %s4438 = sshll.u32 %s4428, 4
          %s4439 = int_to_ptr.vmem [resolvable:$true] %s4438
          %4444 = dma.vmem_to_hbm [thread:$0]  %s4439, 1024, %s4437, %s4425, 256, 256, 16
        $region83: #{tpu_custom_call.1} parent=71 // pred_fallthru
          _
      $region72: #{tpu_custom_call.1} parent=5 // pred_fallthru
        _
      %p4445 = scmp.le.s32.totalorder 2, %s22
      // Predicated region
      $region84: #{tpu_custom_call.1} parent=5 // pred_check
        %p4446 = pneg %p4445
      $region85: #{tpu_custom_call.1} parent=5 // pred_check_branch
        %4448 = sbr.rel (%p4446) target = $region87
      $region86: #{tpu_custom_call.1} parent=5 // pred_region
        %s4449 = ssub.s32 %s22, 2
        // Predicated region
        $region88: #{tpu_custom_call.1} parent=86 // pred_check
          %p4450 = pneg %p329
        $region89: #{tpu_custom_call.1} parent=86 // pred_check_branch
          %4452 = sbr.rel (%p4450) target = $region91
        $region90: #{tpu_custom_call.1} parent=86 // pred_region
          %s4453 = sand.u32 %s314, 1
          %s4454 = scalar_lea.sflag [#allocation4], %s4453
          %s4455 = sand.u32 %s314, 1
          %s4456 = smul.addr %s4455, 64
          %s4457 = scalar_lea.vmem [#allocation3], %s4456
          %4458 = dma.done %s4454, 1024
        $region91: #{tpu_custom_call.1} parent=86 // pred_fallthru
          _
      $region87: #{tpu_custom_call.1} parent=5 // pred_fallthru
        _
    $region6: #{tpu_custom_call.1} parent=1 // loop_footer
      %s26 = sadd.s32 1, %s22
    $region7: #{tpu_custom_call.1} parent=1 // loop_footer_branch
      %21 = sbr.rel target = $region3
    $region8: #{tpu_custom_call.1} parent=1 // loop_exit
      _
    %4459 = vsyncpa [#allocation4], 1
    %s4460 = scalar_lea.sflag [#allocation4], 1
    %4461 = vsyncpa %s4460, 1

</llo_original>
